<compile_context>
chip_gen: v6e
topology: v6e:2x2x1
jax: 0.10.0
libtpu: 0.0.40
codegen_flags: <defaults>
</compile_context>

<pallas_src>
import math
import functools

import jax
import jax.numpy as jnp
from jax import lax
from jax.experimental import pallas as pl
from jax.experimental.pallas import tpu as pltpu


# ----------------------------------------------------------------------------
# Pallas kernel: the whole encoder stack; grid iterates over layers.
# ----------------------------------------------------------------------------
def _encoder_stack_kernel(
    x_ref, pos_ref,
    wqk_ref, bqk_ref,
    wv_ref, bv_ref,
    wo_ref, bo_ref,
    g1_ref, be1_ref,
    w1_ref, b1_ref,
    w2_ref, b2_ref,
    g2_ref, be2_ref,
    out_ref,
    x_scratch,
    *, nhead: int, batch: int, seq: int, d_model: int,
):
    lyr = pl.program_id(0)
    n_layers = pl.num_programs(0)
    B, S, D = batch, seq, d_model
    hd = D // nhead
    scale = 1.0 / math.sqrt(hd)

    # Layer 0: load the input activation into the VMEM carry.
    @pl.when(lyr == 0)
    def _():
        x_scratch[...] = x_ref[...]

    x = x_scratch[...]                       # (B*S, D) f32 (carried activation)
    pos = pos_ref[...]                       # (B*S, D) f32

    # ---- fused Q|K projection and V projection (bf16 MXU, f32 accumulate) ---
    qk_in = (x + pos).astype(jnp.bfloat16)   # q and k get pos embedding, v does not
    x_bf = x.astype(jnp.bfloat16)

    qk = jnp.dot(qk_in, wqk_ref[0], preferred_element_type=jnp.float32) + bqk_ref[0]
    v = jnp.dot(x_bf, wv_ref[0], preferred_element_type=jnp.float32) + bv_ref[0]

    q_bf = qk[:, :D].astype(jnp.bfloat16)
    k_bf = qk[:, D:].astype(jnp.bfloat16)
    v_bf = v.astype(jnp.bfloat16)
    wo = wo_ref[0]                           # (D, D) bf16

    # ---- multi-head attention: per-head accumulate straight into Wo ---------
    attn_rows = []
    for b in range(B):
        r0 = b * S
        acc_b = jnp.zeros((S, D), jnp.float32)
        for h in range(nhead):
            lo = h * hd
            qh = q_bf[r0:r0 + S, lo:lo + hd]
            kh = k_bf[r0:r0 + S, lo:lo + hd]
            vh = v_bf[r0:r0 + S, lo:lo + hd]
            # scores: contract the shared hd (minor) dim, no materialized kh.T
            s = lax.dot_general(qh, kh, (((1,), (1,)), ((), ())),
                                preferred_element_type=jnp.float32) * scale
            s = s - jnp.max(s, axis=-1, keepdims=True)
            p = jnp.exp(s)
            p = p * pl.reciprocal(jnp.sum(p, axis=-1, keepdims=True), approx=True)
            o_h = jnp.dot(p.astype(jnp.bfloat16), vh,
                          preferred_element_type=jnp.float32)          # (S, hd)
            # fold the head concat into the output projection (accumulate)
            acc_b = acc_b + jnp.dot(o_h.astype(jnp.bfloat16), wo[lo:lo + hd, :],
                                    preferred_element_type=jnp.float32)
        attn_rows.append(acc_b)
    attn = jnp.concatenate(attn_rows, axis=0) if B > 1 else attn_rows[0]  # (B*S, D)

    # ---- residual + LayerNorm 1 (f32) ---------------------------------------
    h1 = x + attn + bo_ref[0]
    mu = jnp.mean(h1, axis=-1, keepdims=True)
    var = jnp.mean((h1 - mu) * (h1 - mu), axis=-1, keepdims=True)
    h1 = (h1 - mu) * lax.rsqrt(var + 1e-5) * g1_ref[0] + be1_ref[0]

    # ---- feed-forward (bf16 MXU, f32 accumulate / elementwise) --------------
    f = jnp.dot(h1.astype(jnp.bfloat16), w1_ref[0],
                preferred_element_type=jnp.float32) + b1_ref[0]
    f = jnp.maximum(f, 0.0)
    f = jnp.dot(f.astype(jnp.bfloat16), w2_ref[0],
                preferred_element_type=jnp.float32) + b2_ref[0]

    # ---- residual + LayerNorm 2 (f32) ---------------------------------------
    h2 = h1 + f
    mu2 = jnp.mean(h2, axis=-1, keepdims=True)
    var2 = jnp.mean((h2 - mu2) * (h2 - mu2), axis=-1, keepdims=True)
    h2 = (h2 - mu2) * lax.rsqrt(var2 + 1e-5) * g2_ref[0] + be2_ref[0]

    # carry to the next layer
    x_scratch[...] = h2

    @pl.when(lyr == n_layers - 1)
    def _():
        out_ref[...] = h2


# ----------------------------------------------------------------------------
# Wrapper: single pallas_call over the layer stack.
# ----------------------------------------------------------------------------
def transformer_encoder(src, pos, layer_params, nhead, final_norm=None):
    """Equivalent of TransformerEncoder.forward(src, mask=None,
    src_key_padding_mask=None, pos=pos), batch-first (B, S, D) layout."""
    B, S, D = src.shape
    L = len(layer_params)

    def stack(name, dtype=jnp.float32):
        return jnp.stack([p[name] for p in layer_params]).astype(dtype)

    # Fused Q|K projection weight (D, 2D); MXU operand weights cast to bf16 once.
    wqk = jnp.stack([jnp.concatenate([p["wq"], p["wk"]], axis=1)
                     for p in layer_params]).astype(jnp.bfloat16)      # (L, D, 2D)
    bqk = jnp.stack([jnp.concatenate([p["bq"], p["bk"]], axis=1)
                     for p in layer_params])                           # (L, 1, 2D) f32

    weights = [
        wqk, bqk,
        stack("wv", jnp.bfloat16), stack("bv"),
        stack("wo", jnp.bfloat16), stack("bo"),
        stack("g1"), stack("be1"),
        stack("w1", jnp.bfloat16), stack("b1"),
        stack("w2", jnp.bfloat16), stack("b2"),
        stack("g2"), stack("be2"),
    ]

    def layer_spec(arr):
        _, a, b = arr.shape
        return pl.BlockSpec((1, a, b), lambda l: (l, 0, 0))

    weight_specs = [layer_spec(w) for w in weights]
    act_spec = pl.BlockSpec((B * S, D), lambda l: (0, 0))   # resident across layers

    kernel = functools.partial(
        _encoder_stack_kernel, nhead=nhead, batch=B, seq=S, d_model=D)

    out = pl.pallas_call(
        kernel,
        out_shape=jax.ShapeDtypeStruct((B * S, D), jnp.float32),
        grid_spec=pltpu.PrefetchScalarGridSpec(
            num_scalar_prefetch=0,
            grid=(L,),
            in_specs=[act_spec, act_spec] + weight_specs,
            out_specs=act_spec,
            scratch_shapes=[pltpu.VMEM((B * S, D), jnp.float32)],
        ),
        compiler_params=pltpu.CompilerParams(
            dimension_semantics=("arbitrary",),   # layers are sequential (carry)
        ),
    )(src.reshape(B * S, D), pos.reshape(B * S, D), *weights)

    out = out.reshape(B, S, D)
    if final_norm is not None:
        g, b = final_norm
        mu = jnp.mean(out, axis=-1, keepdims=True)
        var = jnp.mean((out - mu) ** 2, axis=-1, keepdims=True)
        out = (out - mu) * lax.rsqrt(var + 1e-5) * g + b
    return out


# ----------------------------------------------------------------------------
# Deterministic parameter construction.
# ----------------------------------------------------------------------------
def make_layer_params(key, d_model, dim_ff):
    ks = jax.random.split(key, 8)

    def xavier(k, fan_in, fan_out):
        limit = math.sqrt(6.0 / (fan_in + fan_out))
        return jax.random.uniform(k, (fan_in, fan_out), jnp.float32, -limit, limit)

    D, F = d_model, dim_ff
    return {
        "wq": xavier(ks[0], D, D), "bq": jnp.zeros((1, D), jnp.float32),
        "wk": xavier(ks[1], D, D), "bk": jnp.zeros((1, D), jnp.float32),
        "wv": xavier(ks[2], D, D), "bv": jnp.zeros((1, D), jnp.float32),
        "wo": xavier(ks[3], D, D), "bo": jnp.zeros((1, D), jnp.float32),
        "g1": jnp.ones((1, D), jnp.float32), "be1": jnp.zeros((1, D), jnp.float32),
        "w1": xavier(ks[4], D, F), "b1": jnp.zeros((1, F), jnp.float32),
        "w2": xavier(ks[5], F, D), "b2": jnp.zeros((1, D), jnp.float32),
        "g2": jnp.ones((1, D), jnp.float32), "be2": jnp.zeros((1, D), jnp.float32),
    }


if __name__ == "__main__":
    B, S, D = 2, 8, 32        # batch, sequence, d_model
    NHEAD = 4
    DIM_FF = 64
    NUM_LAYERS = 2

    root = jax.random.PRNGKey(0)
    k_src, k_pos, k_layers = jax.random.split(root, 3)

    src = jax.random.normal(k_src, (B, S, D), jnp.float32)
    pos = jax.random.normal(k_pos, (B, S, D), jnp.float32)

    layer_keys = jax.random.split(k_layers, NUM_LAYERS)
    layer_params = [make_layer_params(k, D, DIM_FF) for k in layer_keys]

    out = transformer_encoder(src, pos, layer_params, NHEAD, final_norm=None)
    out = jax.block_until_ready(out)

    assert out.shape == (B, S, D)
    assert bool(jnp.all(jnp.isfinite(out)))
    print("KERNEL_OK")
</pallas_src>

<mosaic_0001>
module attributes {stable_mosaic.version = 11 : i64} {
  func.func @_encoder_stack_kernel(%arg0: i32, %arg1: memref<16x32xf32, #tpu.memory_space<vmem>>, %arg2: memref<16x32xf32, #tpu.memory_space<vmem>>, %arg3: memref<1x32x64xbf16, #tpu.memory_space<vmem>>, %arg4: memref<1x1x64xf32, #tpu.memory_space<vmem>>, %arg5: memref<1x32x32xbf16, #tpu.memory_space<vmem>>, %arg6: memref<1x1x32xf32, #tpu.memory_space<vmem>>, %arg7: memref<1x32x32xbf16, #tpu.memory_space<vmem>>, %arg8: memref<1x1x32xf32, #tpu.memory_space<vmem>>, %arg9: memref<1x1x32xf32, #tpu.memory_space<vmem>>, %arg10: memref<1x1x32xf32, #tpu.memory_space<vmem>>, %arg11: memref<1x32x64xbf16, #tpu.memory_space<vmem>>, %arg12: memref<1x1x64xf32, #tpu.memory_space<vmem>>, %arg13: memref<1x64x32xbf16, #tpu.memory_space<vmem>>, %arg14: memref<1x1x32xf32, #tpu.memory_space<vmem>>, %arg15: memref<1x1x32xf32, #tpu.memory_space<vmem>>, %arg16: memref<1x1x32xf32, #tpu.memory_space<vmem>>, %arg17: memref<16x32xf32, #tpu.memory_space<vmem>>, %arg18: memref<16x32xf32, #tpu.memory_space<vmem>>) attributes {dimension_semantics = [#tpu.dimension_semantics<arbitrary>], iteration_bounds = array<i64: 2>, scalar_prefetch = 0 : i64, scratch_operands = 1 : i64, tpu.core_type = #tpu.core_type<tc>, window_params = [{pipeline_mode = #tpu.pipeline_mode<synchronous>, transform_indices = @transform_0, window_bounds = array<i64: 16, 32>}, {pipeline_mode = #tpu.pipeline_mode<synchronous>, transform_indices = @transform_1, window_bounds = array<i64: 16, 32>}, {transform_indices = @transform_2, window_bounds = array<i64: 1, 32, 64>}, {transform_indices = @transform_3, window_bounds = array<i64: 1, 1, 64>}, {transform_indices = @transform_4, window_bounds = array<i64: 1, 32, 32>}, {transform_indices = @transform_5, window_bounds = array<i64: 1, 1, 32>}, {transform_indices = @transform_6, window_bounds = array<i64: 1, 32, 32>}, {transform_indices = @transform_7, window_bounds = array<i64: 1, 1, 32>}, {transform_indices = @transform_8, window_bounds = array<i64: 1, 1, 32>}, {transform_indices = @transform_9, window_bounds = array<i64: 1, 1, 32>}, {transform_indices = @transform_10, window_bounds = array<i64: 1, 32, 64>}, {transform_indices = @transform_11, window_bounds = array<i64: 1, 1, 64>}, {transform_indices = @transform_12, window_bounds = array<i64: 1, 64, 32>}, {transform_indices = @transform_13, window_bounds = array<i64: 1, 1, 32>}, {transform_indices = @transform_14, window_bounds = array<i64: 1, 1, 32>}, {transform_indices = @transform_15, window_bounds = array<i64: 1, 1, 32>}, {pipeline_mode = #tpu.pipeline_mode<synchronous>, transform_indices = @transform_16, window_bounds = array<i64: 16, 32>}]} {
    %c0_i32 = arith.constant 0 : i32
    %0 = arith.cmpi eq, %arg0, %c0_i32 : i32
    %1 = arith.extui %0 : i1 to i32
    %c0_i32_0 = arith.constant 0 : i32
    %2 = arith.cmpi ne, %1, %c0_i32_0 : i32
    scf.if %2 {
      %c0_113 = arith.constant 0 : index
      %c0_114 = arith.constant 0 : index
      %292 = vector.load %arg1[%c0_113, %c0_114] : memref<16x32xf32, #tpu.memory_space<vmem>>, vector<16x32xf32>
      %c0_115 = arith.constant 0 : index
      %c0_116 = arith.constant 0 : index
      %293 = vector.load %arg18[%c0_115, %c0_116] : memref<16x32xf32, #tpu.memory_space<vmem>>, vector<16x32xf32>
      tpu.vector_store %arg18[%c0_115, %c0_116], %292 {strides = array<i32>} : memref<16x32xf32, #tpu.memory_space<vmem>>, vector<16x32xf32>,
    } else {
    }
    %c0 = arith.constant 0 : index
    %c0_1 = arith.constant 0 : index
    %3 = vector.load %arg18[%c0, %c0_1] : memref<16x32xf32, #tpu.memory_space<vmem>>, vector<16x32xf32>
    %c0_2 = arith.constant 0 : index
    %c0_3 = arith.constant 0 : index
    %4 = vector.load %arg2[%c0_2, %c0_3] : memref<16x32xf32, #tpu.memory_space<vmem>>, vector<16x32xf32>
    %5 = arith.addf %3, %4 : vector<16x32xf32>
    %6 = arith.truncf %5 : vector<16x32xf32> to vector<16x32xbf16>
    %7 = arith.truncf %3 : vector<16x32xf32> to vector<16x32xbf16>
    %c0_4 = arith.constant 0 : index
    %c0_5 = arith.constant 0 : index
    %c0_6 = arith.constant 0 : index
    %8 = vector.load %arg3[%c0_4, %c0_5, %c0_6] : memref<1x32x64xbf16, #tpu.memory_space<vmem>>, vector<1x32x64xbf16>
    %9 = vector.shape_cast %8 : vector<1x32x64xbf16> to vector<32x64xbf16>
    %cst = arith.constant dense<0.000000e+00> : vector<16x64xf32>
    %10 = tpu.matmul %6, %9, %cst {dimension_numbers = #tpu.dot_dimension_numbers<[1], [0], [0], [1], [0, 0, 1, 1], [], []>} : vector<16x32xbf16>, vector<32x64xbf16>, vector<16x64xf32> -> vector<16x64xf32>
    %c0_7 = arith.constant 0 : index
    %c0_8 = arith.constant 0 : index
    %c0_9 = arith.constant 0 : index
    %11 = vector.load %arg4[%c0_7, %c0_8, %c0_9] : memref<1x1x64xf32, #tpu.memory_space<vmem>>, vector<1x1x64xf32>
    %12 = vector.shape_cast %11 : vector<1x1x64xf32> to vector<1x64xf32>
    %13 = vector.broadcast %12 : vector<1x64xf32> to vector<16x64xf32>
    %14 = arith.addf %10, %13 : vector<16x64xf32>
    %c0_10 = arith.constant 0 : index
    %c0_11 = arith.constant 0 : index
    %c0_12 = arith.constant 0 : index
    %15 = vector.load %arg5[%c0_10, %c0_11, %c0_12] : memref<1x32x32xbf16, #tpu.memory_space<vmem>>, vector<1x32x32xbf16>
    %16 = vector.shape_cast %15 : vector<1x32x32xbf16> to vector<32x32xbf16>
    %cst_13 = arith.constant dense<0.000000e+00> : vector<16x32xf32>
    %17 = tpu.matmul %7, %16, %cst_13 {dimension_numbers = #tpu.dot_dimension_numbers<[1], [0], [0], [1], [0, 0, 1, 1], [], []>} : vector<16x32xbf16>, vector<32x32xbf16>, vector<16x32xf32> -> vector<16x32xf32>
    %c0_14 = arith.constant 0 : index
    %c0_15 = arith.constant 0 : index
    %c0_16 = arith.constant 0 : index
    %18 = vector.load %arg6[%c0_14, %c0_15, %c0_16] : memref<1x1x32xf32, #tpu.memory_space<vmem>>, vector<1x1x32xf32>
    %19 = vector.shape_cast %18 : vector<1x1x32xf32> to vector<1x32xf32>
    %20 = vector.broadcast %19 : vector<1x32xf32> to vector<16x32xf32>
    %21 = arith.addf %17, %20 : vector<16x32xf32>
    %22 = vector.extract_strided_slice %14 {offsets = [0, 0], sizes = [16, 32], strides = [1, 1]} : vector<16x64xf32> to vector<16x32xf32>
    %23 = arith.truncf %22 : vector<16x32xf32> to vector<16x32xbf16>
    %24 = vector.extract_strided_slice %14 {offsets = [0, 32], sizes = [16, 32], strides = [1, 1]} : vector<16x64xf32> to vector<16x32xf32>
    %25 = arith.truncf %24 : vector<16x32xf32> to vector<16x32xbf16>
    %26 = arith.truncf %21 : vector<16x32xf32> to vector<16x32xbf16>
    %c0_17 = arith.constant 0 : index
    %c0_18 = arith.constant 0 : index
    %c0_19 = arith.constant 0 : index
    %27 = vector.load %arg7[%c0_17, %c0_18, %c0_19] : memref<1x32x32xbf16, #tpu.memory_space<vmem>>, vector<1x32x32xbf16>
    %28 = vector.shape_cast %27 : vector<1x32x32xbf16> to vector<32x32xbf16>
    %cst_20 = arith.constant 0.000000e+00 : f32
    %29 = vector.broadcast %cst_20 : f32 to vector<8x32xf32>
    %30 = vector.extract_strided_slice %23 {offsets = [0, 0], sizes = [8, 8], strides = [1, 1]} : vector<16x32xbf16> to vector<8x8xbf16>
    %31 = vector.extract_strided_slice %25 {offsets = [0, 0], sizes = [8, 8], strides = [1, 1]} : vector<16x32xbf16> to vector<8x8xbf16>
    %32 = vector.extract_strided_slice %26 {offsets = [0, 0], sizes = [8, 8], strides = [1, 1]} : vector<16x32xbf16> to vector<8x8xbf16>
    %cst_21 = arith.constant dense<0.000000e+00> : vector<8x8xf32>
    %33 = tpu.matmul %30, %31, %cst_21 {dimension_numbers = #tpu.dot_dimension_numbers<[1], [1], [0], [0], [0, 0, 1, 0], [], []>} : vector<8x8xbf16>, vector<8x8xbf16>, vector<8x8xf32> -> vector<8x8xf32>
    %cst_22 = arith.constant 0.353553385 : f32
    %34 = vector.broadcast %cst_22 : f32 to vector<8x8xf32>
    %35 = arith.mulf %33, %34 : vector<8x8xf32>
    %cst_23 = arith.constant dense<0xFF800000> : vector<8xf32>
    %36 = vector.multi_reduction <maximumf>, %35, %cst_23 [1] : vector<8x8xf32> to vector<8xf32>
    %37 = vector.shape_cast %36 : vector<8xf32> to vector<8x1xf32>
    %38 = vector.broadcast %37 : vector<8x1xf32> to vector<8x8xf32>
    %39 = arith.subf %35, %38 : vector<8x8xf32>
    %40 = math.exp %39 : vector<8x8xf32>
    %cst_24 = arith.constant dense<0.000000e+00> : vector<8xf32>
    %41 = vector.multi_reduction <add>, %40, %cst_24 [1] : vector<8x8xf32> to vector<8xf32>
    %42 = vector.shape_cast %41 : vector<8xf32> to vector<8x1xf32>
    %43 = tpu.reciprocal %42 {approx = true} : vector<8x1xf32> -> vector<8x1xf32>
    %44 = vector.broadcast %43 : vector<8x1xf32> to vector<8x8xf32>
    %45 = arith.mulf %40, %44 : vector<8x8xf32>
    %46 = arith.truncf %45 : vector<8x8xf32> to vector<8x8xbf16>
    %cst_25 = arith.constant dense<0.000000e+00> : vector<8x8xf32>
    %47 = tpu.matmul %46, %32, %cst_25 {dimension_numbers = #tpu.dot_dimension_numbers<[1], [0], [0], [1], [0, 0, 1, 1], [], []>} : vector<8x8xbf16>, vector<8x8xbf16>, vector<8x8xf32> -> vector<8x8xf32>
    %48 = arith.truncf %47 : vector<8x8xf32> to vector<8x8xbf16>
    %49 = vector.extract_strided_slice %28 {offsets = [0, 0], sizes = [8, 32], strides = [1, 1]} : vector<32x32xbf16> to vector<8x32xbf16>
    %cst_26 = arith.constant dense<0.000000e+00> : vector<8x32xf32>
    %50 = tpu.matmul %48, %49, %cst_26 {dimension_numbers = #tpu.dot_dimension_numbers<[1], [0], [0], [1], [0, 0, 1, 1], [], []>} : vector<8x8xbf16>, vector<8x32xbf16>, vector<8x32xf32> -> vector<8x32xf32>
    %51 = arith.addf %29, %50 : vector<8x32xf32>
    %52 = vector.extract_strided_slice %23 {offsets = [0, 8], sizes = [8, 8], strides = [1, 1]} : vector<16x32xbf16> to vector<8x8xbf16>
    %53 = vector.extract_strided_slice %25 {offsets = [0, 8], sizes = [8, 8], strides = [1, 1]} : vector<16x32xbf16> to vector<8x8xbf16>
    %54 = vector.extract_strided_slice %26 {offsets = [0, 8], sizes = [8, 8], strides = [1, 1]} : vector<16x32xbf16> to vector<8x8xbf16>
    %cst_27 = arith.constant dense<0.000000e+00> : vector<8x8xf32>
    %55 = tpu.matmul %52, %53, %cst_27 {dimension_numbers = #tpu.dot_dimension_numbers<[1], [1], [0], [0], [0, 0, 1, 0], [], []>} : vector<8x8xbf16>, vector<8x8xbf16>, vector<8x8xf32> -> vector<8x8xf32>
    %cst_28 = arith.constant 0.353553385 : f32
    %56 = vector.broadcast %cst_28 : f32 to vector<8x8xf32>
    %57 = arith.mulf %55, %56 : vector<8x8xf32>
    %cst_29 = arith.constant dense<0xFF800000> : vector<8xf32>
    %58 = vector.multi_reduction <maximumf>, %57, %cst_29 [1] : vector<8x8xf32> to vector<8xf32>
    %59 = vector.shape_cast %58 : vector<8xf32> to vector<8x1xf32>
    %60 = vector.broadcast %59 : vector<8x1xf32> to vector<8x8xf32>
    %61 = arith.subf %57, %60 : vector<8x8xf32>
    %62 = math.exp %61 : vector<8x8xf32>
    %cst_30 = arith.constant dense<0.000000e+00> : vector<8xf32>
    %63 = vector.multi_reduction <add>, %62, %cst_30 [1] : vector<8x8xf32> to vector<8xf32>
    %64 = vector.shape_cast %63 : vector<8xf32> to vector<8x1xf32>
    %65 = tpu.reciprocal %64 {approx = true} : vector<8x1xf32> -> vector<8x1xf32>
    %66 = vector.broadcast %65 : vector<8x1xf32> to vector<8x8xf32>
    %67 = arith.mulf %62, %66 : vector<8x8xf32>
    %68 = arith.truncf %67 : vector<8x8xf32> to vector<8x8xbf16>
    %cst_31 = arith.constant dense<0.000000e+00> : vector<8x8xf32>
    %69 = tpu.matmul %68, %54, %cst_31 {dimension_numbers = #tpu.dot_dimension_numbers<[1], [0], [0], [1], [0, 0, 1, 1], [], []>} : vector<8x8xbf16>, vector<8x8xbf16>, vector<8x8xf32> -> vector<8x8xf32>
    %70 = arith.truncf %69 : vector<8x8xf32> to vector<8x8xbf16>
    %71 = vector.extract_strided_slice %28 {offsets = [8, 0], sizes = [8, 32], strides = [1, 1]} : vector<32x32xbf16> to vector<8x32xbf16>
    %cst_32 = arith.constant dense<0.000000e+00> : vector<8x32xf32>
    %72 = tpu.matmul %70, %71, %cst_32 {dimension_numbers = #tpu.dot_dimension_numbers<[1], [0], [0], [1], [0, 0, 1, 1], [], []>} : vector<8x8xbf16>, vector<8x32xbf16>, vector<8x32xf32> -> vector<8x32xf32>
    %73 = arith.addf %51, %72 : vector<8x32xf32>
    %74 = vector.extract_strided_slice %23 {offsets = [0, 16], sizes = [8, 8], strides = [1, 1]} : vector<16x32xbf16> to vector<8x8xbf16>
    %75 = vector.extract_strided_slice %25 {offsets = [0, 16], sizes = [8, 8], strides = [1, 1]} : vector<16x32xbf16> to vector<8x8xbf16>
    %76 = vector.extract_strided_slice %26 {offsets = [0, 16], sizes = [8, 8], strides = [1, 1]} : vector<16x32xbf16> to vector<8x8xbf16>
    %cst_33 = arith.constant dense<0.000000e+00> : vector<8x8xf32>
    %77 = tpu.matmul %74, %75, %cst_33 {dimension_numbers = #tpu.dot_dimension_numbers<[1], [1], [0], [0], [0, 0, 1, 0], [], []>} : vector<8x8xbf16>, vector<8x8xbf16>, vector<8x8xf32> -> vector<8x8xf32>
    %cst_34 = arith.constant 0.353553385 : f32
    %78 = vector.broadcast %cst_34 : f32 to vector<8x8xf32>
    %79 = arith.mulf %77, %78 : vector<8x8xf32>
    %cst_35 = arith.constant dense<0xFF800000> : vector<8xf32>
    %80 = vector.multi_reduction <maximumf>, %79, %cst_35 [1] : vector<8x8xf32> to vector<8xf32>
    %81 = vector.shape_cast %80 : vector<8xf32> to vector<8x1xf32>
    %82 = vector.broadcast %81 : vector<8x1xf32> to vector<8x8xf32>
    %83 = arith.subf %79, %82 : vector<8x8xf32>
    %84 = math.exp %83 : vector<8x8xf32>
    %cst_36 = arith.constant dense<0.000000e+00> : vector<8xf32>
    %85 = vector.multi_reduction <add>, %84, %cst_36 [1] : vector<8x8xf32> to vector<8xf32>
    %86 = vector.shape_cast %85 : vector<8xf32> to vector<8x1xf32>
    %87 = tpu.reciprocal %86 {approx = true} : vector<8x1xf32> -> vector<8x1xf32>
    %88 = vector.broadcast %87 : vector<8x1xf32> to vector<8x8xf32>
    %89 = arith.mulf %84, %88 : vector<8x8xf32>
    %90 = arith.truncf %89 : vector<8x8xf32> to vector<8x8xbf16>
    %cst_37 = arith.constant dense<0.000000e+00> : vector<8x8xf32>
    %91 = tpu.matmul %90, %76, %cst_37 {dimension_numbers = #tpu.dot_dimension_numbers<[1], [0], [0], [1], [0, 0, 1, 1], [], []>} : vector<8x8xbf16>, vector<8x8xbf16>, vector<8x8xf32> -> vector<8x8xf32>
    %92 = arith.truncf %91 : vector<8x8xf32> to vector<8x8xbf16>
    %93 = vector.extract_strided_slice %28 {offsets = [16, 0], sizes = [8, 32], strides = [1, 1]} : vector<32x32xbf16> to vector<8x32xbf16>
    %cst_38 = arith.constant dense<0.000000e+00> : vector<8x32xf32>
    %94 = tpu.matmul %92, %93, %cst_38 {dimension_numbers = #tpu.dot_dimension_numbers<[1], [0], [0], [1], [0, 0, 1, 1], [], []>} : vector<8x8xbf16>, vector<8x32xbf16>, vector<8x32xf32> -> vector<8x32xf32>
    %95 = arith.addf %73, %94 : vector<8x32xf32>
    %96 = vector.extract_strided_slice %23 {offsets = [0, 24], sizes = [8, 8], strides = [1, 1]} : vector<16x32xbf16> to vector<8x8xbf16>
    %97 = vector.extract_strided_slice %25 {offsets = [0, 24], sizes = [8, 8], strides = [1, 1]} : vector<16x32xbf16> to vector<8x8xbf16>
    %98 = vector.extract_strided_slice %26 {offsets = [0, 24], sizes = [8, 8], strides = [1, 1]} : vector<16x32xbf16> to vector<8x8xbf16>
    %cst_39 = arith.constant dense<0.000000e+00> : vector<8x8xf32>
    %99 = tpu.matmul %96, %97, %cst_39 {dimension_numbers = #tpu.dot_dimension_numbers<[1], [1], [0], [0], [0, 0, 1, 0], [], []>} : vector<8x8xbf16>, vector<8x8xbf16>, vector<8x8xf32> -> vector<8x8xf32>
    %cst_40 = arith.constant 0.353553385 : f32
    %100 = vector.broadcast %cst_40 : f32 to vector<8x8xf32>
    %101 = arith.mulf %99, %100 : vector<8x8xf32>
    %cst_41 = arith.constant dense<0xFF800000> : vector<8xf32>
    %102 = vector.multi_reduction <maximumf>, %101, %cst_41 [1] : vector<8x8xf32> to vector<8xf32>
    %103 = vector.shape_cast %102 : vector<8xf32> to vector<8x1xf32>
    %104 = vector.broadcast %103 : vector<8x1xf32> to vector<8x8xf32>
    %105 = arith.subf %101, %104 : vector<8x8xf32>
    %106 = math.exp %105 : vector<8x8xf32>
    %cst_42 = arith.constant dense<0.000000e+00> : vector<8xf32>
    %107 = vector.multi_reduction <add>, %106, %cst_42 [1] : vector<8x8xf32> to vector<8xf32>
    %108 = vector.shape_cast %107 : vector<8xf32> to vector<8x1xf32>
    %109 = tpu.reciprocal %108 {approx = true} : vector<8x1xf32> -> vector<8x1xf32>
    %110 = vector.broadcast %109 : vector<8x1xf32> to vector<8x8xf32>
    %111 = arith.mulf %106, %110 : vector<8x8xf32>
    %112 = arith.truncf %111 : vector<8x8xf32> to vector<8x8xbf16>
    %cst_43 = arith.constant dense<0.000000e+00> : vector<8x8xf32>
    %113 = tpu.matmul %112, %98, %cst_43 {dimension_numbers = #tpu.dot_dimension_numbers<[1], [0], [0], [1], [0, 0, 1, 1], [], []>} : vector<8x8xbf16>, vector<8x8xbf16>, vector<8x8xf32> -> vector<8x8xf32>
    %114 = arith.truncf %113 : vector<8x8xf32> to vector<8x8xbf16>
    %115 = vector.extract_strided_slice %28 {offsets = [24, 0], sizes = [8, 32], strides = [1, 1]} : vector<32x32xbf16> to vector<8x32xbf16>
    %cst_44 = arith.constant dense<0.000000e+00> : vector<8x32xf32>
    %116 = tpu.matmul %114, %115, %cst_44 {dimension_numbers = #tpu.dot_dimension_numbers<[1], [0], [0], [1], [0, 0, 1, 1], [], []>} : vector<8x8xbf16>, vector<8x32xbf16>, vector<8x32xf32> -> vector<8x32xf32>
    %117 = arith.addf %95, %116 : vector<8x32xf32>
    %cst_45 = arith.constant 0.000000e+00 : f32
    %118 = vector.broadcast %cst_45 : f32 to vector<8x32xf32>
    %119 = vector.extract_strided_slice %23 {offsets = [8, 0], sizes = [8, 8], strides = [1, 1]} : vector<16x32xbf16> to vector<8x8xbf16>
    %120 = vector.extract_strided_slice %25 {offsets = [8, 0], sizes = [8, 8], strides = [1, 1]} : vector<16x32xbf16> to vector<8x8xbf16>
    %121 = vector.extract_strided_slice %26 {offsets = [8, 0], sizes = [8, 8], strides = [1, 1]} : vector<16x32xbf16> to vector<8x8xbf16>
    %cst_46 = arith.constant dense<0.000000e+00> : vector<8x8xf32>
    %122 = tpu.matmul %119, %120, %cst_46 {dimension_numbers = #tpu.dot_dimension_numbers<[1], [1], [0], [0], [0, 0, 1, 0], [], []>} : vector<8x8xbf16>, vector<8x8xbf16>, vector<8x8xf32> -> vector<8x8xf32>
    %cst_47 = arith.constant 0.353553385 : f32
    %123 = vector.broadcast %cst_47 : f32 to vector<8x8xf32>
    %124 = arith.mulf %122, %123 : vector<8x8xf32>
    %cst_48 = arith.constant dense<0xFF800000> : vector<8xf32>
    %125 = vector.multi_reduction <maximumf>, %124, %cst_48 [1] : vector<8x8xf32> to vector<8xf32>
    %126 = vector.shape_cast %125 : vector<8xf32> to vector<8x1xf32>
    %127 = vector.broadcast %126 : vector<8x1xf32> to vector<8x8xf32>
    %128 = arith.subf %124, %127 : vector<8x8xf32>
    %129 = math.exp %128 : vector<8x8xf32>
    %cst_49 = arith.constant dense<0.000000e+00> : vector<8xf32>
    %130 = vector.multi_reduction <add>, %129, %cst_49 [1] : vector<8x8xf32> to vector<8xf32>
    %131 = vector.shape_cast %130 : vector<8xf32> to vector<8x1xf32>
    %132 = tpu.reciprocal %131 {approx = true} : vector<8x1xf32> -> vector<8x1xf32>
    %133 = vector.broadcast %132 : vector<8x1xf32> to vector<8x8xf32>
    %134 = arith.mulf %129, %133 : vector<8x8xf32>
    %135 = arith.truncf %134 : vector<8x8xf32> to vector<8x8xbf16>
    %cst_50 = arith.constant dense<0.000000e+00> : vector<8x8xf32>
    %136 = tpu.matmul %135, %121, %cst_50 {dimension_numbers = #tpu.dot_dimension_numbers<[1], [0], [0], [1], [0, 0, 1, 1], [], []>} : vector<8x8xbf16>, vector<8x8xbf16>, vector<8x8xf32> -> vector<8x8xf32>
    %137 = arith.truncf %136 : vector<8x8xf32> to vector<8x8xbf16>
    %138 = vector.extract_strided_slice %28 {offsets = [0, 0], sizes = [8, 32], strides = [1, 1]} : vector<32x32xbf16> to vector<8x32xbf16>
    %cst_51 = arith.constant dense<0.000000e+00> : vector<8x32xf32>
    %139 = tpu.matmul %137, %138, %cst_51 {dimension_numbers = #tpu.dot_dimension_numbers<[1], [0], [0], [1], [0, 0, 1, 1], [], []>} : vector<8x8xbf16>, vector<8x32xbf16>, vector<8x32xf32> -> vector<8x32xf32>
    %140 = arith.addf %118, %139 : vector<8x32xf32>
    %141 = vector.extract_strided_slice %23 {offsets = [8, 8], sizes = [8, 8], strides = [1, 1]} : vector<16x32xbf16> to vector<8x8xbf16>
    %142 = vector.extract_strided_slice %25 {offsets = [8, 8], sizes = [8, 8], strides = [1, 1]} : vector<16x32xbf16> to vector<8x8xbf16>
    %143 = vector.extract_strided_slice %26 {offsets = [8, 8], sizes = [8, 8], strides = [1, 1]} : vector<16x32xbf16> to vector<8x8xbf16>
    %cst_52 = arith.constant dense<0.000000e+00> : vector<8x8xf32>
    %144 = tpu.matmul %141, %142, %cst_52 {dimension_numbers = #tpu.dot_dimension_numbers<[1], [1], [0], [0], [0, 0, 1, 0], [], []>} : vector<8x8xbf16>, vector<8x8xbf16>, vector<8x8xf32> -> vector<8x8xf32>
    %cst_53 = arith.constant 0.353553385 : f32
    %145 = vector.broadcast %cst_53 : f32 to vector<8x8xf32>
    %146 = arith.mulf %144, %145 : vector<8x8xf32>
    %cst_54 = arith.constant dense<0xFF800000> : vector<8xf32>
    %147 = vector.multi_reduction <maximumf>, %146, %cst_54 [1] : vector<8x8xf32> to vector<8xf32>
    %148 = vector.shape_cast %147 : vector<8xf32> to vector<8x1xf32>
    %149 = vector.broadcast %148 : vector<8x1xf32> to vector<8x8xf32>
    %150 = arith.subf %146, %149 : vector<8x8xf32>
    %151 = math.exp %150 : vector<8x8xf32>
    %cst_55 = arith.constant dense<0.000000e+00> : vector<8xf32>
    %152 = vector.multi_reduction <add>, %151, %cst_55 [1] : vector<8x8xf32> to vector<8xf32>
    %153 = vector.shape_cast %152 : vector<8xf32> to vector<8x1xf32>
    %154 = tpu.reciprocal %153 {approx = true} : vector<8x1xf32> -> vector<8x1xf32>
    %155 = vector.broadcast %154 : vector<8x1xf32> to vector<8x8xf32>
    %156 = arith.mulf %151, %155 : vector<8x8xf32>
    %157 = arith.truncf %156 : vector<8x8xf32> to vector<8x8xbf16>
    %cst_56 = arith.constant dense<0.000000e+00> : vector<8x8xf32>
    %158 = tpu.matmul %157, %143, %cst_56 {dimension_numbers = #tpu.dot_dimension_numbers<[1], [0], [0], [1], [0, 0, 1, 1], [], []>} : vector<8x8xbf16>, vector<8x8xbf16>, vector<8x8xf32> -> vector<8x8xf32>
    %159 = arith.truncf %158 : vector<8x8xf32> to vector<8x8xbf16>
    %160 = vector.extract_strided_slice %28 {offsets = [8, 0], sizes = [8, 32], strides = [1, 1]} : vector<32x32xbf16> to vector<8x32xbf16>
    %cst_57 = arith.constant dense<0.000000e+00> : vector<8x32xf32>
    %161 = tpu.matmul %159, %160, %cst_57 {dimension_numbers = #tpu.dot_dimension_numbers<[1], [0], [0], [1], [0, 0, 1, 1], [], []>} : vector<8x8xbf16>, vector<8x32xbf16>, vector<8x32xf32> -> vector<8x32xf32>
    %162 = arith.addf %140, %161 : vector<8x32xf32>
    %163 = vector.extract_strided_slice %23 {offsets = [8, 16], sizes = [8, 8], strides = [1, 1]} : vector<16x32xbf16> to vector<8x8xbf16>
    %164 = vector.extract_strided_slice %25 {offsets = [8, 16], sizes = [8, 8], strides = [1, 1]} : vector<16x32xbf16> to vector<8x8xbf16>
    %165 = vector.extract_strided_slice %26 {offsets = [8, 16], sizes = [8, 8], strides = [1, 1]} : vector<16x32xbf16> to vector<8x8xbf16>
    %cst_58 = arith.constant dense<0.000000e+00> : vector<8x8xf32>
    %166 = tpu.matmul %163, %164, %cst_58 {dimension_numbers = #tpu.dot_dimension_numbers<[1], [1], [0], [0], [0, 0, 1, 0], [], []>} : vector<8x8xbf16>, vector<8x8xbf16>, vector<8x8xf32> -> vector<8x8xf32>
    %cst_59 = arith.constant 0.353553385 : f32
    %167 = vector.broadcast %cst_59 : f32 to vector<8x8xf32>
    %168 = arith.mulf %166, %167 : vector<8x8xf32>
    %cst_60 = arith.constant dense<0xFF800000> : vector<8xf32>
    %169 = vector.multi_reduction <maximumf>, %168, %cst_60 [1] : vector<8x8xf32> to vector<8xf32>
    %170 = vector.shape_cast %169 : vector<8xf32> to vector<8x1xf32>
    %171 = vector.broadcast %170 : vector<8x1xf32> to vector<8x8xf32>
    %172 = arith.subf %168, %171 : vector<8x8xf32>
    %173 = math.exp %172 : vector<8x8xf32>
    %cst_61 = arith.constant dense<0.000000e+00> : vector<8xf32>
    %174 = vector.multi_reduction <add>, %173, %cst_61 [1] : vector<8x8xf32> to vector<8xf32>
    %175 = vector.shape_cast %174 : vector<8xf32> to vector<8x1xf32>
    %176 = tpu.reciprocal %175 {approx = true} : vector<8x1xf32> -> vector<8x1xf32>
    %177 = vector.broadcast %176 : vector<8x1xf32> to vector<8x8xf32>
    %178 = arith.mulf %173, %177 : vector<8x8xf32>
    %179 = arith.truncf %178 : vector<8x8xf32> to vector<8x8xbf16>
    %cst_62 = arith.constant dense<0.000000e+00> : vector<8x8xf32>
    %180 = tpu.matmul %179, %165, %cst_62 {dimension_numbers = #tpu.dot_dimension_numbers<[1], [0], [0], [1], [0, 0, 1, 1], [], []>} : vector<8x8xbf16>, vector<8x8xbf16>, vector<8x8xf32> -> vector<8x8xf32>
    %181 = arith.truncf %180 : vector<8x8xf32> to vector<8x8xbf16>
    %182 = vector.extract_strided_slice %28 {offsets = [16, 0], sizes = [8, 32], strides = [1, 1]} : vector<32x32xbf16> to vector<8x32xbf16>
    %cst_63 = arith.constant dense<0.000000e+00> : vector<8x32xf32>
    %183 = tpu.matmul %181, %182, %cst_63 {dimension_numbers = #tpu.dot_dimension_numbers<[1], [0], [0], [1], [0, 0, 1, 1], [], []>} : vector<8x8xbf16>, vector<8x32xbf16>, vector<8x32xf32> -> vector<8x32xf32>
    %184 = arith.addf %162, %183 : vector<8x32xf32>
    %185 = vector.extract_strided_slice %23 {offsets = [8, 24], sizes = [8, 8], strides = [1, 1]} : vector<16x32xbf16> to vector<8x8xbf16>
    %186 = vector.extract_strided_slice %25 {offsets = [8, 24], sizes = [8, 8], strides = [1, 1]} : vector<16x32xbf16> to vector<8x8xbf16>
    %187 = vector.extract_strided_slice %26 {offsets = [8, 24], sizes = [8, 8], strides = [1, 1]} : vector<16x32xbf16> to vector<8x8xbf16>
    %cst_64 = arith.constant dense<0.000000e+00> : vector<8x8xf32>
    %188 = tpu.matmul %185, %186, %cst_64 {dimension_numbers = #tpu.dot_dimension_numbers<[1], [1], [0], [0], [0, 0, 1, 0], [], []>} : vector<8x8xbf16>, vector<8x8xbf16>, vector<8x8xf32> -> vector<8x8xf32>
    %cst_65 = arith.constant 0.353553385 : f32
    %189 = vector.broadcast %cst_65 : f32 to vector<8x8xf32>
    %190 = arith.mulf %188, %189 : vector<8x8xf32>
    %cst_66 = arith.constant dense<0xFF800000> : vector<8xf32>
    %191 = vector.multi_reduction <maximumf>, %190, %cst_66 [1] : vector<8x8xf32> to vector<8xf32>
    %192 = vector.shape_cast %191 : vector<8xf32> to vector<8x1xf32>
    %193 = vector.broadcast %192 : vector<8x1xf32> to vector<8x8xf32>
    %194 = arith.subf %190, %193 : vector<8x8xf32>
    %195 = math.exp %194 : vector<8x8xf32>
    %cst_67 = arith.constant dense<0.000000e+00> : vector<8xf32>
    %196 = vector.multi_reduction <add>, %195, %cst_67 [1] : vector<8x8xf32> to vector<8xf32>
    %197 = vector.shape_cast %196 : vector<8xf32> to vector<8x1xf32>
    %198 = tpu.reciprocal %197 {approx = true} : vector<8x1xf32> -> vector<8x1xf32>
    %199 = vector.broadcast %198 : vector<8x1xf32> to vector<8x8xf32>
    %200 = arith.mulf %195, %199 : vector<8x8xf32>
    %201 = arith.truncf %200 : vector<8x8xf32> to vector<8x8xbf16>
    %cst_68 = arith.constant dense<0.000000e+00> : vector<8x8xf32>
    %202 = tpu.matmul %201, %187, %cst_68 {dimension_numbers = #tpu.dot_dimension_numbers<[1], [0], [0], [1], [0, 0, 1, 1], [], []>} : vector<8x8xbf16>, vector<8x8xbf16>, vector<8x8xf32> -> vector<8x8xf32>
    %203 = arith.truncf %202 : vector<8x8xf32> to vector<8x8xbf16>
    %204 = vector.extract_strided_slice %28 {offsets = [24, 0], sizes = [8, 32], strides = [1, 1]} : vector<32x32xbf16> to vector<8x32xbf16>
    %cst_69 = arith.constant dense<0.000000e+00> : vector<8x32xf32>
    %205 = tpu.matmul %203, %204, %cst_69 {dimension_numbers = #tpu.dot_dimension_numbers<[1], [0], [0], [1], [0, 0, 1, 1], [], []>} : vector<8x8xbf16>, vector<8x32xbf16>, vector<8x32xf32> -> vector<8x32xf32>
    %206 = arith.addf %184, %205 : vector<8x32xf32>
    %207 = tpu.concatenate %117, %206 in 0 : vector<8x32xf32>, vector<8x32xf32> -> vector<16x32xf32>
    %208 = arith.addf %3, %207 : vector<16x32xf32>
    %c0_70 = arith.constant 0 : index
    %c0_71 = arith.constant 0 : index
    %c0_72 = arith.constant 0 : index
    %209 = vector.load %arg8[%c0_70, %c0_71, %c0_72] : memref<1x1x32xf32, #tpu.memory_space<vmem>>, vector<1x1x32xf32>
    %210 = vector.shape_cast %209 : vector<1x1x32xf32> to vector<1x32xf32>
    %211 = vector.broadcast %210 : vector<1x32xf32> to vector<16x32xf32>
    %212 = arith.addf %208, %211 : vector<16x32xf32>
    %cst_73 = arith.constant dense<0.000000e+00> : vector<16xf32>
    %213 = vector.multi_reduction <add>, %212, %cst_73 [1] : vector<16x32xf32> to vector<16xf32>
    %214 = vector.shape_cast %213 : vector<16xf32> to vector<16x1xf32>
    %cst_74 = arith.constant 3.200000e+01 : f32
    %215 = vector.broadcast %cst_74 : f32 to vector<16x1xf32>
    %216 = arith.divf %214, %215 : vector<16x1xf32>
    %217 = vector.broadcast %216 : vector<16x1xf32> to vector<16x32xf32>
    %218 = arith.subf %212, %217 : vector<16x32xf32>
    %219 = vector.broadcast %216 : vector<16x1xf32> to vector<16x32xf32>
    %220 = arith.subf %212, %219 : vector<16x32xf32>
    %221 = arith.mulf %218, %220 : vector<16x32xf32>
    %cst_75 = arith.constant dense<0.000000e+00> : vector<16xf32>
    %222 = vector.multi_reduction <add>, %221, %cst_75 [1] : vector<16x32xf32> to vector<16xf32>
    %223 = vector.shape_cast %222 : vector<16xf32> to vector<16x1xf32>
    %cst_76 = arith.constant 3.200000e+01 : f32
    %224 = vector.broadcast %cst_76 : f32 to vector<16x1xf32>
    %225 = arith.divf %223, %224 : vector<16x1xf32>
    %226 = vector.broadcast %216 : vector<16x1xf32> to vector<16x32xf32>
    %227 = arith.subf %212, %226 : vector<16x32xf32>
    %cst_77 = arith.constant 9.99999974E-6 : f32
    %228 = vector.broadcast %cst_77 : f32 to vector<16x1xf32>
    %229 = arith.addf %225, %228 : vector<16x1xf32>
    %230 = math.rsqrt %229 : vector<16x1xf32>
    %231 = vector.broadcast %230 : vector<16x1xf32> to vector<16x32xf32>
    %232 = arith.mulf %227, %231 : vector<16x32xf32>
    %c0_78 = arith.constant 0 : index
    %c0_79 = arith.constant 0 : index
    %c0_80 = arith.constant 0 : index
    %233 = vector.load %arg9[%c0_78, %c0_79, %c0_80] : memref<1x1x32xf32, #tpu.memory_space<vmem>>, vector<1x1x32xf32>
    %234 = vector.shape_cast %233 : vector<1x1x32xf32> to vector<1x32xf32>
    %235 = vector.broadcast %234 : vector<1x32xf32> to vector<16x32xf32>
    %236 = arith.mulf %232, %235 : vector<16x32xf32>
    %c0_81 = arith.constant 0 : index
    %c0_82 = arith.constant 0 : index
    %c0_83 = arith.constant 0 : index
    %237 = vector.load %arg10[%c0_81, %c0_82, %c0_83] : memref<1x1x32xf32, #tpu.memory_space<vmem>>, vector<1x1x32xf32>
    %238 = vector.shape_cast %237 : vector<1x1x32xf32> to vector<1x32xf32>
    %239 = vector.broadcast %238 : vector<1x32xf32> to vector<16x32xf32>
    %240 = arith.addf %236, %239 : vector<16x32xf32>
    %241 = arith.truncf %240 : vector<16x32xf32> to vector<16x32xbf16>
    %c0_84 = arith.constant 0 : index
    %c0_85 = arith.constant 0 : index
    %c0_86 = arith.constant 0 : index
    %242 = vector.load %arg11[%c0_84, %c0_85, %c0_86] : memref<1x32x64xbf16, #tpu.memory_space<vmem>>, vector<1x32x64xbf16>
    %243 = vector.shape_cast %242 : vector<1x32x64xbf16> to vector<32x64xbf16>
    %cst_87 = arith.constant dense<0.000000e+00> : vector<16x64xf32>
    %244 = tpu.matmul %241, %243, %cst_87 {dimension_numbers = #tpu.dot_dimension_numbers<[1], [0], [0], [1], [0, 0, 1, 1], [], []>} : vector<16x32xbf16>, vector<32x64xbf16>, vector<16x64xf32> -> vector<16x64xf32>
    %c0_88 = arith.constant 0 : index
    %c0_89 = arith.constant 0 : index
    %c0_90 = arith.constant 0 : index
    %245 = vector.load %arg12[%c0_88, %c0_89, %c0_90] : memref<1x1x64xf32, #tpu.memory_space<vmem>>, vector<1x1x64xf32>
    %246 = vector.shape_cast %245 : vector<1x1x64xf32> to vector<1x64xf32>
    %247 = vector.broadcast %246 : vector<1x64xf32> to vector<16x64xf32>
    %248 = arith.addf %244, %247 : vector<16x64xf32>
    %cst_91 = arith.constant 0.000000e+00 : f32
    %249 = vector.broadcast %cst_91 : f32 to vector<16x64xf32>
    %250 = arith.maximumf %248, %249 : vector<16x64xf32>
    %251 = arith.truncf %250 : vector<16x64xf32> to vector<16x64xbf16>
    %c0_92 = arith.constant 0 : index
    %c0_93 = arith.constant 0 : index
    %c0_94 = arith.constant 0 : index
    %252 = vector.load %arg13[%c0_92, %c0_93, %c0_94] : memref<1x64x32xbf16, #tpu.memory_space<vmem>>, vector<1x64x32xbf16>
    %253 = vector.shape_cast %252 : vector<1x64x32xbf16> to vector<64x32xbf16>
    %cst_95 = arith.constant dense<0.000000e+00> : vector<16x32xf32>
    %254 = tpu.matmul %251, %253, %cst_95 {dimension_numbers = #tpu.dot_dimension_numbers<[1], [0], [0], [1], [0, 0, 1, 1], [], []>} : vector<16x64xbf16>, vector<64x32xbf16>, vector<16x32xf32> -> vector<16x32xf32>
    %c0_96 = arith.constant 0 : index
    %c0_97 = arith.constant 0 : index
    %c0_98 = arith.constant 0 : index
    %255 = vector.load %arg14[%c0_96, %c0_97, %c0_98] : memref<1x1x32xf32, #tpu.memory_space<vmem>>, vector<1x1x32xf32>
    %256 = vector.shape_cast %255 : vector<1x1x32xf32> to vector<1x32xf32>
    %257 = vector.broadcast %256 : vector<1x32xf32> to vector<16x32xf32>
    %258 = arith.addf %254, %257 : vector<16x32xf32>
    %259 = arith.addf %240, %258 : vector<16x32xf32>
    %cst_99 = arith.constant dense<0.000000e+00> : vector<16xf32>
    %260 = vector.multi_reduction <add>, %259, %cst_99 [1] : vector<16x32xf32> to vector<16xf32>
    %261 = vector.shape_cast %260 : vector<16xf32> to vector<16x1xf32>
    %cst_100 = arith.constant 3.200000e+01 : f32
    %262 = vector.broadcast %cst_100 : f32 to vector<16x1xf32>
    %263 = arith.divf %261, %262 : vector<16x1xf32>
    %264 = vector.broadcast %263 : vector<16x1xf32> to vector<16x32xf32>
    %265 = arith.subf %259, %264 : vector<16x32xf32>
    %266 = vector.broadcast %263 : vector<16x1xf32> to vector<16x32xf32>
    %267 = arith.subf %259, %266 : vector<16x32xf32>
    %268 = arith.mulf %265, %267 : vector<16x32xf32>
    %cst_101 = arith.constant dense<0.000000e+00> : vector<16xf32>
    %269 = vector.multi_reduction <add>, %268, %cst_101 [1] : vector<16x32xf32> to vector<16xf32>
    %270 = vector.shape_cast %269 : vector<16xf32> to vector<16x1xf32>
    %cst_102 = arith.constant 3.200000e+01 : f32
    %271 = vector.broadcast %cst_102 : f32 to vector<16x1xf32>
    %272 = arith.divf %270, %271 : vector<16x1xf32>
    %273 = vector.broadcast %263 : vector<16x1xf32> to vector<16x32xf32>
    %274 = arith.subf %259, %273 : vector<16x32xf32>
    %cst_103 = arith.constant 9.99999974E-6 : f32
    %275 = vector.broadcast %cst_103 : f32 to vector<16x1xf32>
    %276 = arith.addf %272, %275 : vector<16x1xf32>
    %277 = math.rsqrt %276 : vector<16x1xf32>
    %278 = vector.broadcast %277 : vector<16x1xf32> to vector<16x32xf32>
    %279 = arith.mulf %274, %278 : vector<16x32xf32>
    %c0_104 = arith.constant 0 : index
    %c0_105 = arith.constant 0 : index
    %c0_106 = arith.constant 0 : index
    %280 = vector.load %arg15[%c0_104, %c0_105, %c0_106] : memref<1x1x32xf32, #tpu.memory_space<vmem>>, vector<1x1x32xf32>
    %281 = vector.shape_cast %280 : vector<1x1x32xf32> to vector<1x32xf32>
    %282 = vector.broadcast %281 : vector<1x32xf32> to vector<16x32xf32>
    %283 = arith.mulf %279, %282 : vector<16x32xf32>
    %c0_107 = arith.constant 0 : index
    %c0_108 = arith.constant 0 : index
    %c0_109 = arith.constant 0 : index
    %284 = vector.load %arg16[%c0_107, %c0_108, %c0_109] : memref<1x1x32xf32, #tpu.memory_space<vmem>>, vector<1x1x32xf32>
    %285 = vector.shape_cast %284 : vector<1x1x32xf32> to vector<1x32xf32>
    %286 = vector.broadcast %285 : vector<1x32xf32> to vector<16x32xf32>
    %287 = arith.addf %283, %286 : vector<16x32xf32>
    %c0_110 = arith.constant 0 : index
    %c0_111 = arith.constant 0 : index
    %288 = vector.load %arg18[%c0_110, %c0_111] : memref<16x32xf32, #tpu.memory_space<vmem>>, vector<16x32xf32>
    tpu.vector_store %arg18[%c0_110, %c0_111], %287 {strides = array<i32>} : memref<16x32xf32, #tpu.memory_space<vmem>>, vector<16x32xf32>,
    %c1_i32 = arith.constant 1 : i32
    %289 = arith.cmpi eq, %arg0, %c1_i32 : i32
    %290 = arith.extui %289 : i1 to i32
    %c0_i32_112 = arith.constant 0 : i32
    %291 = arith.cmpi ne, %290, %c0_i32_112 : i32
    scf.if %291 {
      %c0_113 = arith.constant 0 : index
      %c0_114 = arith.constant 0 : index
      %292 = vector.load %arg17[%c0_113, %c0_114] : memref<16x32xf32, #tpu.memory_space<vmem>>, vector<16x32xf32>
      tpu.vector_store %arg17[%c0_113, %c0_114], %287 {strides = array<i32>} : memref<16x32xf32, #tpu.memory_space<vmem>>, vector<16x32xf32>,
    } else {
    }
    return
  }
  func.func @transform_0(%arg0: i32) -> (i32, i32) {
    %c0_i32 = arith.constant 0 : i32
    %c0_i32_0 = arith.constant 0 : i32
    %c0_i32_1 = arith.constant 0 : i32
    return %c0_i32, %c0_i32_0 : i32, i32
  }
  func.func @transform_1(%arg0: i32) -> (i32, i32) {
    %c0_i32 = arith.constant 0 : i32
    %c0_i32_0 = arith.constant 0 : i32
    %c0_i32_1 = arith.constant 0 : i32
    return %c0_i32, %c0_i32_0 : i32, i32
  }
  func.func @transform_2(%arg0: i32) -> (i32, i32, i32) {
    %c0_i32 = arith.constant 0 : i32
    %c0_i32_0 = arith.constant 0 : i32
    %c0_i32_1 = arith.constant 0 : i32
    return %arg0, %c0_i32, %c0_i32_0 : i32, i32, i32
  }
  func.func @transform_3(%arg0: i32) -> (i32, i32, i32) {
    %c0_i32 = arith.constant 0 : i32
    %c0_i32_0 = arith.constant 0 : i32
    %c0_i32_1 = arith.constant 0 : i32
    return %arg0, %c0_i32, %c0_i32_0 : i32, i32, i32
  }
  func.func @transform_4(%arg0: i32) -> (i32, i32, i32) {
    %c0_i32 = arith.constant 0 : i32
    %c0_i32_0 = arith.constant 0 : i32
    %c0_i32_1 = arith.constant 0 : i32
    return %arg0, %c0_i32, %c0_i32_0 : i32, i32, i32
  }
  func.func @transform_5(%arg0: i32) -> (i32, i32, i32) {
    %c0_i32 = arith.constant 0 : i32
    %c0_i32_0 = arith.constant 0 : i32
    %c0_i32_1 = arith.constant 0 : i32
    return %arg0, %c0_i32, %c0_i32_0 : i32, i32, i32
  }
  func.func @transform_6(%arg0: i32) -> (i32, i32, i32) {
    %c0_i32 = arith.constant 0 : i32
    %c0_i32_0 = arith.constant 0 : i32
    %c0_i32_1 = arith.constant 0 : i32
    return %arg0, %c0_i32, %c0_i32_0 : i32, i32, i32
  }
  func.func @transform_7(%arg0: i32) -> (i32, i32, i32) {
    %c0_i32 = arith.constant 0 : i32
    %c0_i32_0 = arith.constant 0 : i32
    %c0_i32_1 = arith.constant 0 : i32
    return %arg0, %c0_i32, %c0_i32_0 : i32, i32, i32
  }
  func.func @transform_8(%arg0: i32) -> (i32, i32, i32) {
    %c0_i32 = arith.constant 0 : i32
    %c0_i32_0 = arith.constant 0 : i32
    %c0_i32_1 = arith.constant 0 : i32
    return %arg0, %c0_i32, %c0_i32_0 : i32, i32, i32
  }
  func.func @transform_9(%arg0: i32) -> (i32, i32, i32) {
    %c0_i32 = arith.constant 0 : i32
    %c0_i32_0 = arith.constant 0 : i32
    %c0_i32_1 = arith.constant 0 : i32
    return %arg0, %c0_i32, %c0_i32_0 : i32, i32, i32
  }
  func.func @transform_10(%arg0: i32) -> (i32, i32, i32) {
    %c0_i32 = arith.constant 0 : i32
    %c0_i32_0 = arith.constant 0 : i32
    %c0_i32_1 = arith.constant 0 : i32
    return %arg0, %c0_i32, %c0_i32_0 : i32, i32, i32
  }
  func.func @transform_11(%arg0: i32) -> (i32, i32, i32) {
    %c0_i32 = arith.constant 0 : i32
    %c0_i32_0 = arith.constant 0 : i32
    %c0_i32_1 = arith.constant 0 : i32
    return %arg0, %c0_i32, %c0_i32_0 : i32, i32, i32
  }
  func.func @transform_12(%arg0: i32) -> (i32, i32, i32) {
    %c0_i32 = arith.constant 0 : i32
    %c0_i32_0 = arith.constant 0 : i32
    %c0_i32_1 = arith.constant 0 : i32
    return %arg0, %c0_i32, %c0_i32_0 : i32, i32, i32
  }
  func.func @transform_13(%arg0: i32) -> (i32, i32, i32) {
    %c0_i32 = arith.constant 0 : i32
    %c0_i32_0 = arith.constant 0 : i32
    %c0_i32_1 = arith.constant 0 : i32
    return %arg0, %c0_i32, %c0_i32_0 : i32, i32, i32
  }
  func.func @transform_14(%arg0: i32) -> (i32, i32, i32) {
    %c0_i32 = arith.constant 0 : i32
    %c0_i32_0 = arith.constant 0 : i32
    %c0_i32_1 = arith.constant 0 : i32
    return %arg0, %c0_i32, %c0_i32_0 : i32, i32, i32
  }
  func.func @transform_15(%arg0: i32) -> (i32, i32, i32) {
    %c0_i32 = arith.constant 0 : i32
    %c0_i32_0 = arith.constant 0 : i32
    %c0_i32_1 = arith.constant 0 : i32
    return %arg0, %c0_i32, %c0_i32_0 : i32, i32, i32
  }
  func.func @transform_16(%arg0: i32) -> (i32, i32) {
    %c0_i32 = arith.constant 0 : i32
    %c0_i32_0 = arith.constant 0 : i32
    %c0_i32_1 = arith.constant 0 : i32
    return %c0_i32, %c0_i32_0 : i32, i32
  }
}

</mosaic_0001>

<llo_original>
// kernel: tpu_custom_call.1
$region0: #{tpu_custom_call.1}
  #allocation0 [shape = 'u32[]', space=smem, size = 0x4, offset = 0x4, fixed_abs, tag = 'smem constant byte address 0x4 - core index']
  #allocation1 [shape = 'u32[144,128]{1,0:T(1,128)}', space=vmem, size = 0x12000, scoped, tag = 'internal scratch']
  #allocation2 [shape = 'f32[16,32]{1,0:T(8,128)}', space=vmem, size = 0x2000, scoped, tag = 'scratch operand']
  %s0 = inlined_call_operand.hbm [shape: f32[16,32], index: 0, kind: input, shape index: {}]
  %s1 = inlined_call_operand.hbm [shape: f32[16,32], index: 1, kind: input, shape index: {}]
  %s2 = inlined_call_operand.vmem [shape: bf16[2,32,64], index: 2, kind: input, shape index: {}]
  %s3 = inlined_call_operand.vmem [shape: f32[2,1,64], index: 3, kind: input, shape index: {}]
  %s4 = inlined_call_operand.vmem [shape: bf16[2,32,32], index: 4, kind: input, shape index: {}]
  %s5 = inlined_call_operand.vmem [shape: f32[2,1,32], index: 5, kind: input, shape index: {}]
  %s6 = inlined_call_operand.vmem [shape: bf16[2,32,32], index: 6, kind: input, shape index: {}]
  %s7 = inlined_call_operand.vmem [shape: f32[2,1,32], index: 7, kind: input, shape index: {}]
  %s8 = inlined_call_operand.vmem [shape: f32[2,1,32], index: 8, kind: input, shape index: {}]
  %s9 = inlined_call_operand.vmem [shape: f32[2,1,32], index: 9, kind: input, shape index: {}]
  %s10 = inlined_call_operand.hbm [shape: bf16[2,32,64], index: 10, kind: input, shape index: {}]
  %s11 = inlined_call_operand.vmem [shape: f32[2,1,64], index: 11, kind: input, shape index: {}]
  %s12 = inlined_call_operand.vmem [shape: bf16[2,64,32], index: 12, kind: input, shape index: {}]
  %s13 = inlined_call_operand.vmem [shape: f32[2,1,32], index: 13, kind: input, shape index: {}]
  %s14 = inlined_call_operand.vmem [shape: f32[2,1,32], index: 14, kind: input, shape index: {}]
  %s15 = inlined_call_operand.vmem [shape: f32[2,1,32], index: 15, kind: input, shape index: {}]
  %s16 = inlined_call_operand.hbm [shape: f32[16,32], index: 16, kind: output, shape index: {}]
  %s17 = sld [smem:[#allocation0]]
  $region117: #{tpu_custom_call.1} parent=0
    _
  %s19 = ssub.s32 1, %s17
  %s20 = scalar_select 0, %s19, %s17
  $region1: #{tpu_custom_call.1} parent=0
    #allocation3 [shape = 'u8[8192]{0}', space=vmem, size = 0x2000, scoped, tag = 'input window, operand 0, single buffered']
    #allocation4 [shape = 's32[2]{0}', space=sflag, size = 0x8, scoped, tag = 'scoped memory for tpu_custom_call.1']
    #allocation5 [shape = 's32[2]{0}', space=sflag, size = 0x8, scoped, tag = 'scoped memory for tpu_custom_call.1']
    #allocation6 [shape = 'u8[8192]{0}', space=vmem, size = 0x2000, scoped, tag = 'input window, operand 1, single buffered']
    #allocation7 [shape = 's32[1]{0}', space=sflag, size = 0x4, scoped, tag = 'scoped memory for tpu_custom_call.1']
    #allocation8 [shape = 'u8[16384]{0}', space=vmem, size = 0x4000, scoped, tag = 'input window, operand 10']
    #allocation9 [shape = 'u8[8192]{0}', space=vmem, size = 0x2000, scoped, tag = 'output window, operand 0, single buffered']
    %21 = vsyncpa [#allocation4], 0
    %22 = vsyncpa [#allocation7], 0
    %23 = vsyncpa [#allocation5], 0
    loop: start=0, step=1, limit=4
    $region2: #{tpu_custom_call.1} parent=1 // loop_pre_header
      _
    $region3: #{tpu_custom_call.1} parent=1 // loop_header
      %s25 = sphi 0, %s29
      %p26 = scmp.ge.s32.totalorder %s25, 4
      %s33 = sphi 0, %s33
      %s35 = sphi 0, %s33
      %s36 = sphi 0, %s35
      %s50 = sphi 0, %s36
      %s54 = sphi 0, %s54
      %s56 = sphi 0, %s54
      %s57 = sphi 0, %s56
      %s71 = sphi 0, %s57
      %s77 = sphi 0, %s79
      %s80 = sphi 0, %s77
      %s81 = sphi 0, %s80
      %s97 = sphi 0, %s81
      %s103 = sphi 0, %s105
      %s106 = sphi 0, %s103
      %s107 = sphi 0, %s106
      %s123 = sphi 0, %s107
      %s129 = sphi 0, %s131
      %s132 = sphi 0, %s129
      %s133 = sphi 0, %s132
      %s149 = sphi 0, %s133
      %s155 = sphi 0, %s157
      %s158 = sphi 0, %s155
      %s159 = sphi 0, %s158
      %s175 = sphi 0, %s159
      %s181 = sphi 0, %s183
      %s184 = sphi 0, %s181
      %s185 = sphi 0, %s184
      %s201 = sphi 0, %s185
      %s207 = sphi 0, %s209
      %s210 = sphi 0, %s207
      %s211 = sphi 0, %s210
      %s227 = sphi 0, %s211
      %s233 = sphi 0, %s235
      %s236 = sphi 0, %s233
      %s237 = sphi 0, %s236
      %s253 = sphi 0, %s237
      %s259 = sphi 0, %s261
      %s262 = sphi 0, %s259
      %s263 = sphi 0, %s262
      %s279 = sphi 0, %s263
      %s285 = sphi 0, %s287
      %s288 = sphi 0, %s285
      %s289 = sphi 0, %s288
      %s305 = sphi 0, %s289
      %s311 = sphi 0, %s313
      %s314 = sphi 0, %s311
      %s315 = sphi 0, %s314
      %s331 = sphi 0, %s315
      %s337 = sphi 0, %s339
      %s340 = sphi 0, %s337
      %s341 = sphi 0, %s340
      %s357 = sphi 0, %s341
      %s363 = sphi 0, %s365
      %s366 = sphi 0, %s363
      %s367 = sphi 0, %s366
      %s383 = sphi 0, %s367
      %s389 = sphi 0, %s391
      %s392 = sphi 0, %s389
      %s393 = sphi 0, %s392
      %s409 = sphi 0, %s393
      %s415 = sphi 0, %s417
      %s418 = sphi 0, %s415
      %s419 = sphi 0, %s418
      %s435 = sphi 0, %s419
      %s439 = sphi 0, %s439
      %s441 = sphi 0, %s439
      %s442 = sphi 0, %s441
      %s456 = sphi 0, %s442
    $region4: #{tpu_custom_call.1} parent=1 // loop_header_branch
      %28 = sbr.rel (%p26) target = $region8
    $region5: #{tpu_custom_call.1} parent=1 // loop_body
      %s30 = ssub.s32 %s25, 1
      %s31 = ssub.s32 %s25, 2
      %s32 = sadd.s32 %s25, 1
      %s34 = sadd.s32 %s33, 1
      %p37 = scmp.eq.s32.totalorder %s25, 1
      %p38 = scmp.ne.s32.totalorder %s33, %s35
      %p39 = scmp.eq.s32.totalorder %s25, 0
      %p40 = por %p38, %p39
      %p41 = scmp.ne.s32.totalorder %s33, %s35
      %p42 = scmp.eq.s32.totalorder %s30, 1
      %p43 = por %p41, %p42
      %p44 = scmp.ne.s32.totalorder %s35, %s36
      %p45 = scmp.eq.s32.totalorder %s30, 0
      %p46 = por %p44, %p45
      %p47 = scmp.ne.s32.totalorder %s35, %s36
      %p48 = scmp.eq.s32.totalorder %s31, 1
      %p49 = por %p47, %p48
      %p51 = scmp.ne.s32.totalorder %s36, %s50
      %p52 = scmp.eq.s32.totalorder %s31, 0
      %p53 = por %p51, %p52
      %s55 = sadd.s32 %s54, 1
      %p58 = scmp.eq.s32.totalorder %s25, 1
      %p59 = scmp.ne.s32.totalorder %s54, %s56
      %p60 = scmp.eq.s32.totalorder %s25, 0
      %p61 = por %p59, %p60
      %p62 = scmp.ne.s32.totalorder %s54, %s56
      %p63 = scmp.eq.s32.totalorder %s30, 1
      %p64 = por %p62, %p63
      %p65 = scmp.ne.s32.totalorder %s56, %s57
      %p66 = scmp.eq.s32.totalorder %s30, 0
      %p67 = por %p65, %p66
      %p68 = scmp.ne.s32.totalorder %s56, %s57
      %p69 = scmp.eq.s32.totalorder %s31, 1
      %p70 = por %p68, %p69
      %p72 = scmp.ne.s32.totalorder %s57, %s71
      %p73 = scmp.eq.s32.totalorder %s31, 0
      %p74 = por %p72, %p73
      %s75 = ssub.s32 %s25, %s32
      %p76 = scmp.eq.s32.totalorder %s75, 0
      %s78 = sadd.s32 %s77, 1
      %s79 = scalar_select %p76, %s77, %s78
      %p82 = pneg %p76
      %p83 = scmp.eq.s32.totalorder %s25, 1
      %p84 = por %p82, %p83
      %p85 = scmp.ne.s32.totalorder %s77, %s80
      %p86 = scmp.eq.s32.totalorder %s25, 0
      %p87 = por %p85, %p86
      %p88 = scmp.ne.s32.totalorder %s77, %s80
      %p89 = scmp.eq.s32.totalorder %s30, 1
      %p90 = por %p88, %p89
      %p91 = scmp.ne.s32.totalorder %s80, %s81
      %p92 = scmp.eq.s32.totalorder %s30, 0
      %p93 = por %p91, %p92
      %p94 = scmp.ne.s32.totalorder %s80, %s81
      %p95 = scmp.eq.s32.totalorder %s31, 1
      %p96 = por %p94, %p95
      %p98 = scmp.ne.s32.totalorder %s81, %s97
      %p99 = scmp.eq.s32.totalorder %s31, 0
      %p100 = por %p98, %p99
      %s101 = ssub.s32 %s25, %s32
      %p102 = scmp.eq.s32.totalorder %s101, 0
      %s104 = sadd.s32 %s103, 1
      %s105 = scalar_select %p102, %s103, %s104
      %p108 = pneg %p102
      %p109 = scmp.eq.s32.totalorder %s25, 1
      %p110 = por %p108, %p109
      %p111 = scmp.ne.s32.totalorder %s103, %s106
      %p112 = scmp.eq.s32.totalorder %s25, 0
      %p113 = por %p111, %p112
      %p114 = scmp.ne.s32.totalorder %s103, %s106
      %p115 = scmp.eq.s32.totalorder %s30, 1
      %p116 = por %p114, %p115
      %p117 = scmp.ne.s32.totalorder %s106, %s107
      %p118 = scmp.eq.s32.totalorder %s30, 0
      %p119 = por %p117, %p118
      %p120 = scmp.ne.s32.totalorder %s106, %s107
      %p121 = scmp.eq.s32.totalorder %s31, 1
      %p122 = por %p120, %p121
      %p124 = scmp.ne.s32.totalorder %s107, %s123
      %p125 = scmp.eq.s32.totalorder %s31, 0
      %p126 = por %p124, %p125
      %s127 = ssub.s32 %s25, %s32
      %p128 = scmp.eq.s32.totalorder %s127, 0
      %s130 = sadd.s32 %s129, 1
      %s131 = scalar_select %p128, %s129, %s130
      %p134 = pneg %p128
      %p135 = scmp.eq.s32.totalorder %s25, 1
      %p136 = por %p134, %p135
      %p137 = scmp.ne.s32.totalorder %s129, %s132
      %p138 = scmp.eq.s32.totalorder %s25, 0
      %p139 = por %p137, %p138
      %p140 = scmp.ne.s32.totalorder %s129, %s132
      %p141 = scmp.eq.s32.totalorder %s30, 1
      %p142 = por %p140, %p141
      %p143 = scmp.ne.s32.totalorder %s132, %s133
      %p144 = scmp.eq.s32.totalorder %s30, 0
      %p145 = por %p143, %p144
      %p146 = scmp.ne.s32.totalorder %s132, %s133
      %p147 = scmp.eq.s32.totalorder %s31, 1
      %p148 = por %p146, %p147
      %p150 = scmp.ne.s32.totalorder %s133, %s149
      %p151 = scmp.eq.s32.totalorder %s31, 0
      %p152 = por %p150, %p151
      %s153 = ssub.s32 %s25, %s32
      %p154 = scmp.eq.s32.totalorder %s153, 0
      %s156 = sadd.s32 %s155, 1
      %s157 = scalar_select %p154, %s155, %s156
      %p160 = pneg %p154
      %p161 = scmp.eq.s32.totalorder %s25, 1
      %p162 = por %p160, %p161
      %p163 = scmp.ne.s32.totalorder %s155, %s158
      %p164 = scmp.eq.s32.totalorder %s25, 0
      %p165 = por %p163, %p164
      %p166 = scmp.ne.s32.totalorder %s155, %s158
      %p167 = scmp.eq.s32.totalorder %s30, 1
      %p168 = por %p166, %p167
      %p169 = scmp.ne.s32.totalorder %s158, %s159
      %p170 = scmp.eq.s32.totalorder %s30, 0
      %p171 = por %p169, %p170
      %p172 = scmp.ne.s32.totalorder %s158, %s159
      %p173 = scmp.eq.s32.totalorder %s31, 1
      %p174 = por %p172, %p173
      %p176 = scmp.ne.s32.totalorder %s159, %s175
      %p177 = scmp.eq.s32.totalorder %s31, 0
      %p178 = por %p176, %p177
      %s179 = ssub.s32 %s25, %s32
      %p180 = scmp.eq.s32.totalorder %s179, 0
      %s182 = sadd.s32 %s181, 1
      %s183 = scalar_select %p180, %s181, %s182
      %p186 = pneg %p180
      %p187 = scmp.eq.s32.totalorder %s25, 1
      %p188 = por %p186, %p187
      %p189 = scmp.ne.s32.totalorder %s181, %s184
      %p190 = scmp.eq.s32.totalorder %s25, 0
      %p191 = por %p189, %p190
      %p192 = scmp.ne.s32.totalorder %s181, %s184
      %p193 = scmp.eq.s32.totalorder %s30, 1
      %p194 = por %p192, %p193
      %p195 = scmp.ne.s32.totalorder %s184, %s185
      %p196 = scmp.eq.s32.totalorder %s30, 0
      %p197 = por %p195, %p196
      %p198 = scmp.ne.s32.totalorder %s184, %s185
      %p199 = scmp.eq.s32.totalorder %s31, 1
      %p200 = por %p198, %p199
      %p202 = scmp.ne.s32.totalorder %s185, %s201
      %p203 = scmp.eq.s32.totalorder %s31, 0
      %p204 = por %p202, %p203
      %s205 = ssub.s32 %s25, %s32
      %p206 = scmp.eq.s32.totalorder %s205, 0
      %s208 = sadd.s32 %s207, 1
      %s209 = scalar_select %p206, %s207, %s208
      %p212 = pneg %p206
      %p213 = scmp.eq.s32.totalorder %s25, 1
      %p214 = por %p212, %p213
      %p215 = scmp.ne.s32.totalorder %s207, %s210
      %p216 = scmp.eq.s32.totalorder %s25, 0
      %p217 = por %p215, %p216
      %p218 = scmp.ne.s32.totalorder %s207, %s210
      %p219 = scmp.eq.s32.totalorder %s30, 1
      %p220 = por %p218, %p219
      %p221 = scmp.ne.s32.totalorder %s210, %s211
      %p222 = scmp.eq.s32.totalorder %s30, 0
      %p223 = por %p221, %p222
      %p224 = scmp.ne.s32.totalorder %s210, %s211
      %p225 = scmp.eq.s32.totalorder %s31, 1
      %p226 = por %p224, %p225
      %p228 = scmp.ne.s32.totalorder %s211, %s227
      %p229 = scmp.eq.s32.totalorder %s31, 0
      %p230 = por %p228, %p229
      %s231 = ssub.s32 %s25, %s32
      %p232 = scmp.eq.s32.totalorder %s231, 0
      %s234 = sadd.s32 %s233, 1
      %s235 = scalar_select %p232, %s233, %s234
      %p238 = pneg %p232
      %p239 = scmp.eq.s32.totalorder %s25, 1
      %p240 = por %p238, %p239
      %p241 = scmp.ne.s32.totalorder %s233, %s236
      %p242 = scmp.eq.s32.totalorder %s25, 0
      %p243 = por %p241, %p242
      %p244 = scmp.ne.s32.totalorder %s233, %s236
      %p245 = scmp.eq.s32.totalorder %s30, 1
      %p246 = por %p244, %p245
      %p247 = scmp.ne.s32.totalorder %s236, %s237
      %p248 = scmp.eq.s32.totalorder %s30, 0
      %p249 = por %p247, %p248
      %p250 = scmp.ne.s32.totalorder %s236, %s237
      %p251 = scmp.eq.s32.totalorder %s31, 1
      %p252 = por %p250, %p251
      %p254 = scmp.ne.s32.totalorder %s237, %s253
      %p255 = scmp.eq.s32.totalorder %s31, 0
      %p256 = por %p254, %p255
      %s257 = ssub.s32 %s25, %s32
      %p258 = scmp.eq.s32.totalorder %s257, 0
      %s260 = sadd.s32 %s259, 1
      %s261 = scalar_select %p258, %s259, %s260
      %p264 = pneg %p258
      %p265 = scmp.eq.s32.totalorder %s25, 1
      %p266 = por %p264, %p265
      %p267 = scmp.ne.s32.totalorder %s259, %s262
      %p268 = scmp.eq.s32.totalorder %s25, 0
      %p269 = por %p267, %p268
      %p270 = scmp.ne.s32.totalorder %s259, %s262
      %p271 = scmp.eq.s32.totalorder %s30, 1
      %p272 = por %p270, %p271
      %p273 = scmp.ne.s32.totalorder %s262, %s263
      %p274 = scmp.eq.s32.totalorder %s30, 0
      %p275 = por %p273, %p274
      %p276 = scmp.ne.s32.totalorder %s262, %s263
      %p277 = scmp.eq.s32.totalorder %s31, 1
      %p278 = por %p276, %p277
      %p280 = scmp.ne.s32.totalorder %s263, %s279
      %p281 = scmp.eq.s32.totalorder %s31, 0
      %p282 = por %p280, %p281
      %s283 = ssub.s32 %s25, %s32
      %p284 = scmp.eq.s32.totalorder %s283, 0
      %s286 = sadd.s32 %s285, 1
      %s287 = scalar_select %p284, %s285, %s286
      %p290 = pneg %p284
      %p291 = scmp.eq.s32.totalorder %s25, 1
      %p292 = por %p290, %p291
      %p293 = scmp.ne.s32.totalorder %s285, %s288
      %p294 = scmp.eq.s32.totalorder %s25, 0
      %p295 = por %p293, %p294
      %p296 = scmp.ne.s32.totalorder %s285, %s288
      %p297 = scmp.eq.s32.totalorder %s30, 1
      %p298 = por %p296, %p297
      %p299 = scmp.ne.s32.totalorder %s288, %s289
      %p300 = scmp.eq.s32.totalorder %s30, 0
      %p301 = por %p299, %p300
      %p302 = scmp.ne.s32.totalorder %s288, %s289
      %p303 = scmp.eq.s32.totalorder %s31, 1
      %p304 = por %p302, %p303
      %p306 = scmp.ne.s32.totalorder %s289, %s305
      %p307 = scmp.eq.s32.totalorder %s31, 0
      %p308 = por %p306, %p307
      %s309 = ssub.s32 %s25, %s32
      %p310 = scmp.eq.s32.totalorder %s309, 0
      %s312 = sadd.s32 %s311, 1
      %s313 = scalar_select %p310, %s311, %s312
      %p316 = pneg %p310
      %p317 = scmp.eq.s32.totalorder %s25, 1
      %p318 = por %p316, %p317
      %p319 = scmp.ne.s32.totalorder %s311, %s314
      %p320 = scmp.eq.s32.totalorder %s25, 0
      %p321 = por %p319, %p320
      %p322 = scmp.ne.s32.totalorder %s311, %s314
      %p323 = scmp.eq.s32.totalorder %s30, 1
      %p324 = por %p322, %p323
      %p325 = scmp.ne.s32.totalorder %s314, %s315
      %p326 = scmp.eq.s32.totalorder %s30, 0
      %p327 = por %p325, %p326
      %p328 = scmp.ne.s32.totalorder %s314, %s315
      %p329 = scmp.eq.s32.totalorder %s31, 1
      %p330 = por %p328, %p329
      %p332 = scmp.ne.s32.totalorder %s315, %s331
      %p333 = scmp.eq.s32.totalorder %s31, 0
      %p334 = por %p332, %p333
      %s335 = ssub.s32 %s25, %s32
      %p336 = scmp.eq.s32.totalorder %s335, 0
      %s338 = sadd.s32 %s337, 1
      %s339 = scalar_select %p336, %s337, %s338
      %p342 = pneg %p336
      %p343 = scmp.eq.s32.totalorder %s25, 1
      %p344 = por %p342, %p343
      %p345 = scmp.ne.s32.totalorder %s337, %s340
      %p346 = scmp.eq.s32.totalorder %s25, 0
      %p347 = por %p345, %p346
      %p348 = scmp.ne.s32.totalorder %s337, %s340
      %p349 = scmp.eq.s32.totalorder %s30, 1
      %p350 = por %p348, %p349
      %p351 = scmp.ne.s32.totalorder %s340, %s341
      %p352 = scmp.eq.s32.totalorder %s30, 0
      %p353 = por %p351, %p352
      %p354 = scmp.ne.s32.totalorder %s340, %s341
      %p355 = scmp.eq.s32.totalorder %s31, 1
      %p356 = por %p354, %p355
      %p358 = scmp.ne.s32.totalorder %s341, %s357
      %p359 = scmp.eq.s32.totalorder %s31, 0
      %p360 = por %p358, %p359
      %s361 = ssub.s32 %s25, %s32
      %p362 = scmp.eq.s32.totalorder %s361, 0
      %s364 = sadd.s32 %s363, 1
      %s365 = scalar_select %p362, %s363, %s364
      %p368 = pneg %p362
      %p369 = scmp.eq.s32.totalorder %s25, 1
      %p370 = por %p368, %p369
      %p371 = scmp.ne.s32.totalorder %s363, %s366
      %p372 = scmp.eq.s32.totalorder %s25, 0
      %p373 = por %p371, %p372
      %p374 = scmp.ne.s32.totalorder %s363, %s366
      %p375 = scmp.eq.s32.totalorder %s30, 1
      %p376 = por %p374, %p375
      %p377 = scmp.ne.s32.totalorder %s366, %s367
      %p378 = scmp.eq.s32.totalorder %s30, 0
      %p379 = por %p377, %p378
      %p380 = scmp.ne.s32.totalorder %s366, %s367
      %p381 = scmp.eq.s32.totalorder %s31, 1
      %p382 = por %p380, %p381
      %p384 = scmp.ne.s32.totalorder %s367, %s383
      %p385 = scmp.eq.s32.totalorder %s31, 0
      %p386 = por %p384, %p385
      %s387 = ssub.s32 %s25, %s32
      %p388 = scmp.eq.s32.totalorder %s387, 0
      %s390 = sadd.s32 %s389, 1
      %s391 = scalar_select %p388, %s389, %s390
      %p394 = pneg %p388
      %p395 = scmp.eq.s32.totalorder %s25, 1
      %p396 = por %p394, %p395
      %p397 = scmp.ne.s32.totalorder %s389, %s392
      %p398 = scmp.eq.s32.totalorder %s25, 0
      %p399 = por %p397, %p398
      %p400 = scmp.ne.s32.totalorder %s389, %s392
      %p401 = scmp.eq.s32.totalorder %s30, 1
      %p402 = por %p400, %p401
      %p403 = scmp.ne.s32.totalorder %s392, %s393
      %p404 = scmp.eq.s32.totalorder %s30, 0
      %p405 = por %p403, %p404
      %p406 = scmp.ne.s32.totalorder %s392, %s393
      %p407 = scmp.eq.s32.totalorder %s31, 1
      %p408 = por %p406, %p407
      %p410 = scmp.ne.s32.totalorder %s393, %s409
      %p411 = scmp.eq.s32.totalorder %s31, 0
      %p412 = por %p410, %p411
      %s413 = ssub.s32 %s25, %s32
      %p414 = scmp.eq.s32.totalorder %s413, 0
      %s416 = sadd.s32 %s415, 1
      %s417 = scalar_select %p414, %s415, %s416
      %p420 = pneg %p414
      %p421 = scmp.eq.s32.totalorder %s25, 1
      %p422 = por %p420, %p421
      %p423 = scmp.ne.s32.totalorder %s415, %s418
      %p424 = scmp.eq.s32.totalorder %s25, 0
      %p425 = por %p423, %p424
      %p426 = scmp.ne.s32.totalorder %s415, %s418
      %p427 = scmp.eq.s32.totalorder %s30, 1
      %p428 = por %p426, %p427
      %p429 = scmp.ne.s32.totalorder %s418, %s419
      %p430 = scmp.eq.s32.totalorder %s30, 0
      %p431 = por %p429, %p430
      %p432 = scmp.ne.s32.totalorder %s418, %s419
      %p433 = scmp.eq.s32.totalorder %s31, 1
      %p434 = por %p432, %p433
      %p436 = scmp.ne.s32.totalorder %s419, %s435
      %p437 = scmp.eq.s32.totalorder %s31, 0
      %p438 = por %p436, %p437
      %s440 = sadd.s32 %s439, 1
      %p443 = scmp.eq.s32.totalorder %s25, 1
      %p444 = scmp.ne.s32.totalorder %s439, %s441
      %p445 = scmp.eq.s32.totalorder %s25, 0
      %p446 = por %p444, %p445
      %p447 = scmp.ne.s32.totalorder %s439, %s441
      %p448 = scmp.eq.s32.totalorder %s30, 1
      %p449 = por %p447, %p448
      %p450 = scmp.ne.s32.totalorder %s441, %s442
      %p451 = scmp.eq.s32.totalorder %s30, 0
      %p452 = por %p450, %p451
      %p453 = scmp.ne.s32.totalorder %s441, %s442
      %p454 = scmp.eq.s32.totalorder %s31, 1
      %p455 = por %p453, %p454
      %p457 = scmp.ne.s32.totalorder %s442, %s456
      %p458 = scmp.eq.s32.totalorder %s31, 0
      %p459 = por %p457, %p458
      %p460 = scmp.le.s32.totalorder 1, %s25
      %p461 = scmp.lt.s32.totalorder %s25, 3
      %p462 = pnand %p460, %p461
      %p463 = pneg %p462
      // Predicated region
      $region9: #{tpu_custom_call.1} parent=5 // pred_check
        _
      $region10: #{tpu_custom_call.1} parent=5 // pred_check_branch
        %465 = sbr.rel (%p462) target = $region12
      $region11: #{tpu_custom_call.1} parent=5 // pred_region
        %s466 = ssub.s32 %s25, 1
        // Predicated region
        $region13: #{tpu_custom_call.1} parent=11 // pred_check
          %p467 = pneg %p46
        $region14: #{tpu_custom_call.1} parent=11 // pred_check_branch
          %469 = sbr.rel (%p467) target = $region16
        $region15: #{tpu_custom_call.1} parent=11 // pred_region
          %s471 = ssub.s32 256, 256
          %472 = vsyncadd [#allocation4], %s471
          %s473 = sshll.u32 [#allocation3], 4
          %s474 = int_to_ptr.vmem [resolvable:$true] %s473
          %479 = dma.hbm_to_vmem [thread:$0]  %s0, 256, %s474, [#allocation4], 128, 128, 8
        $region16: #{tpu_custom_call.1} parent=11 // pred_fallthru
          _
        // Predicated region
        $region17: #{tpu_custom_call.1} parent=11 // pred_check
          %p480 = pneg %p67
        $region18: #{tpu_custom_call.1} parent=11 // pred_check_branch
          %482 = sbr.rel (%p480) target = $region20
        $region19: #{tpu_custom_call.1} parent=11 // pred_region
          %s484 = ssub.s32 256, 256
          %485 = vsyncadd [#allocation7], %s484
          %s486 = sshll.u32 [#allocation6], 4
          %s487 = int_to_ptr.vmem [resolvable:$true] %s486
          %492 = dma.hbm_to_vmem [thread:$0]  %s1, 256, %s487, [#allocation7], 128, 128, 8
        $region20: #{tpu_custom_call.1} parent=11 // pred_fallthru
          _
      $region12: #{tpu_custom_call.1} parent=5 // pred_fallthru
        _
      %p493 = scmp.lt.s32.totalorder %s25, 2
      // Predicated region
      $region21: #{tpu_custom_call.1} parent=5 // pred_check
        %p494 = pneg %p493
      $region22: #{tpu_custom_call.1} parent=5 // pred_check_branch
        %496 = sbr.rel (%p494) target = $region24
      $region23: #{tpu_custom_call.1} parent=5 // pred_region
        // Predicated region
        $region25: #{tpu_custom_call.1} parent=23 // pred_check
          %p497 = pneg %p87
        $region26: #{tpu_custom_call.1} parent=23 // pred_check_branch
          %499 = sbr.rel (%p497) target = $region28
        $region27: #{tpu_custom_call.1} parent=23 // pred_region
          %p500 = scmp.lt.s32.totalorder %s25, 1
          %s501 = scalar_select %p500, %s25, 1
          %s502 = smul.addr %s501, 4
          %s503 = smul.addr %s502, 4
          %s504 = scalar_lea.vmem %s2, %s503
        $region28: #{tpu_custom_call.1} parent=23 // pred_fallthru
          _
        // Predicated region
        $region29: #{tpu_custom_call.1} parent=23 // pred_check
          %p505 = pneg %p113
        $region30: #{tpu_custom_call.1} parent=23 // pred_check_branch
          %507 = sbr.rel (%p505) target = $region32
        $region31: #{tpu_custom_call.1} parent=23 // pred_region
          %p508 = scmp.lt.s32.totalorder %s25, 1
          %s509 = scalar_select %p508, %s25, 1
          %s510 = scalar_lea.vmem %s3, %s509
        $region32: #{tpu_custom_call.1} parent=23 // pred_fallthru
          _
        // Predicated region
        $region33: #{tpu_custom_call.1} parent=23 // pred_check
          %p511 = pneg %p139
        $region34: #{tpu_custom_call.1} parent=23 // pred_check_branch
          %513 = sbr.rel (%p511) target = $region36
        $region35: #{tpu_custom_call.1} parent=23 // pred_region
          %p514 = scmp.lt.s32.totalorder %s25, 1
          %s515 = scalar_select %p514, %s25, 1
          %s516 = smul.addr %s515, 4
          %s517 = smul.addr %s516, 4
          %s518 = scalar_lea.vmem %s4, %s517
        $region36: #{tpu_custom_call.1} parent=23 // pred_fallthru
          _
        // Predicated region
        $region37: #{tpu_custom_call.1} parent=23 // pred_check
          %p519 = pneg %p165
        $region38: #{tpu_custom_call.1} parent=23 // pred_check_branch
          %521 = sbr.rel (%p519) target = $region40
        $region39: #{tpu_custom_call.1} parent=23 // pred_region
          %p522 = scmp.lt.s32.totalorder %s25, 1
          %s523 = scalar_select %p522, %s25, 1
          %s524 = scalar_lea.vmem %s5, %s523
        $region40: #{tpu_custom_call.1} parent=23 // pred_fallthru
          _
        // Predicated region
        $region41: #{tpu_custom_call.1} parent=23 // pred_check
          %p525 = pneg %p191
        $region42: #{tpu_custom_call.1} parent=23 // pred_check_branch
          %527 = sbr.rel (%p525) target = $region44
        $region43: #{tpu_custom_call.1} parent=23 // pred_region
          %p528 = scmp.lt.s32.totalorder %s25, 1
          %s529 = scalar_select %p528, %s25, 1
          %s530 = smul.addr %s529, 4
          %s531 = smul.addr %s530, 4
          %s532 = scalar_lea.vmem %s6, %s531
        $region44: #{tpu_custom_call.1} parent=23 // pred_fallthru
          _
        // Predicated region
        $region45: #{tpu_custom_call.1} parent=23 // pred_check
          %p533 = pneg %p217
        $region46: #{tpu_custom_call.1} parent=23 // pred_check_branch
          %535 = sbr.rel (%p533) target = $region48
        $region47: #{tpu_custom_call.1} parent=23 // pred_region
          %p536 = scmp.lt.s32.totalorder %s25, 1
          %s537 = scalar_select %p536, %s25, 1
          %s538 = scalar_lea.vmem %s7, %s537
        $region48: #{tpu_custom_call.1} parent=23 // pred_fallthru
          _
        // Predicated region
        $region49: #{tpu_custom_call.1} parent=23 // pred_check
          %p539 = pneg %p243
        $region50: #{tpu_custom_call.1} parent=23 // pred_check_branch
          %541 = sbr.rel (%p539) target = $region52
        $region51: #{tpu_custom_call.1} parent=23 // pred_region
          %p542 = scmp.lt.s32.totalorder %s25, 1
          %s543 = scalar_select %p542, %s25, 1
          %s544 = scalar_lea.vmem %s8, %s543
        $region52: #{tpu_custom_call.1} parent=23 // pred_fallthru
          _
        // Predicated region
        $region53: #{tpu_custom_call.1} parent=23 // pred_check
          %p545 = pneg %p269
        $region54: #{tpu_custom_call.1} parent=23 // pred_check_branch
          %547 = sbr.rel (%p545) target = $region56
        $region55: #{tpu_custom_call.1} parent=23 // pred_region
          %p548 = scmp.lt.s32.totalorder %s25, 1
          %s549 = scalar_select %p548, %s25, 1
          %s550 = scalar_lea.vmem %s9, %s549
        $region56: #{tpu_custom_call.1} parent=23 // pred_fallthru
          _
        // Predicated region
        $region57: #{tpu_custom_call.1} parent=23 // pred_check
          %p551 = pneg %p295
        $region58: #{tpu_custom_call.1} parent=23 // pred_check_branch
          %553 = sbr.rel (%p551) target = $region60
        $region59: #{tpu_custom_call.1} parent=23 // pred_region
          %s554 = sand.u32 %s25, 1
          %s555 = scalar_lea.sflag [#allocation4], %s554
          %s556 = sand.u32 %s285, 1
          %s557 = smul.addr %s556, 16
          %s558 = scalar_lea.vmem [#allocation8], %s557
          %s560 = ssub.s32 256, 256
          %561 = vsyncadd %s555, %s560
          %s562 = smul.addr %s25, 4
          %s563 = smul.addr %s562, 64
          %s564 = scalar_lea.hbm %s10, %s563
          %s565 = sshll.u32 %s558, 4
          %s566 = int_to_ptr.vmem [resolvable:$true] %s565
          %571 = dma.hbm_to_vmem [thread:$0]  %s564, 256, %s566, %s555, 64, 64, 4
        $region60: #{tpu_custom_call.1} parent=23 // pred_fallthru
          _
        // Predicated region
        $region61: #{tpu_custom_call.1} parent=23 // pred_check
          %p572 = pneg %p321
        $region62: #{tpu_custom_call.1} parent=23 // pred_check_branch
          %574 = sbr.rel (%p572) target = $region64
        $region63: #{tpu_custom_call.1} parent=23 // pred_region
          %p575 = scmp.lt.s32.totalorder %s25, 1
          %s576 = scalar_select %p575, %s25, 1
          %s577 = scalar_lea.vmem %s11, %s576
        $region64: #{tpu_custom_call.1} parent=23 // pred_fallthru
          _
        // Predicated region
        $region65: #{tpu_custom_call.1} parent=23 // pred_check
          %p578 = pneg %p347
        $region66: #{tpu_custom_call.1} parent=23 // pred_check_branch
          %580 = sbr.rel (%p578) target = $region68
        $region67: #{tpu_custom_call.1} parent=23 // pred_region
          %p581 = scmp.lt.s32.totalorder %s25, 1
          %s582 = scalar_select %p581, %s25, 1
          %s583 = smul.addr %s582, 8
          %s584 = smul.addr %s583, 4
          %s585 = scalar_lea.vmem %s12, %s584
        $region68: #{tpu_custom_call.1} parent=23 // pred_fallthru
          _
        // Predicated region
        $region69: #{tpu_custom_call.1} parent=23 // pred_check
          %p586 = pneg %p373
        $region70: #{tpu_custom_call.1} parent=23 // pred_check_branch
          %588 = sbr.rel (%p586) target = $region72
        $region71: #{tpu_custom_call.1} parent=23 // pred_region
          %p589 = scmp.lt.s32.totalorder %s25, 1
          %s590 = scalar_select %p589, %s25, 1
          %s591 = scalar_lea.vmem %s13, %s590
        $region72: #{tpu_custom_call.1} parent=23 // pred_fallthru
          _
        // Predicated region
        $region73: #{tpu_custom_call.1} parent=23 // pred_check
          %p592 = pneg %p399
        $region74: #{tpu_custom_call.1} parent=23 // pred_check_branch
          %594 = sbr.rel (%p592) target = $region76
        $region75: #{tpu_custom_call.1} parent=23 // pred_region
          %p595 = scmp.lt.s32.totalorder %s25, 1
          %s596 = scalar_select %p595, %s25, 1
          %s597 = scalar_lea.vmem %s14, %s596
        $region76: #{tpu_custom_call.1} parent=23 // pred_fallthru
          _
        // Predicated region
        $region77: #{tpu_custom_call.1} parent=23 // pred_check
          %p598 = pneg %p425
        $region78: #{tpu_custom_call.1} parent=23 // pred_check_branch
          %600 = sbr.rel (%p598) target = $region80
        $region79: #{tpu_custom_call.1} parent=23 // pred_region
          %p601 = scmp.lt.s32.totalorder %s25, 1
          %s602 = scalar_select %p601, %s25, 1
          %s603 = scalar_lea.vmem %s15, %s602
        $region80: #{tpu_custom_call.1} parent=23 // pred_fallthru
          _
      $region24: #{tpu_custom_call.1} parent=5 // pred_fallthru
        _
      %p604 = scmp.le.s32.totalorder 1, %s25
      %p605 = scmp.lt.s32.totalorder %s25, 3
      %p606 = pnand %p604, %p605
      %p607 = pneg %p606
      // Predicated region
      $region81: #{tpu_custom_call.1} parent=5 // pred_check
        _
      $region82: #{tpu_custom_call.1} parent=5 // pred_check_branch
        %609 = sbr.rel (%p606) target = $region84
      $region83: #{tpu_custom_call.1} parent=5 // pred_region
        %s610 = ssub.s32 %s25, 1
        // Predicated region
        $region85: #{tpu_custom_call.1} parent=83 // pred_check
          %p611 = pneg %p46
        $region86: #{tpu_custom_call.1} parent=83 // pred_check_branch
          %613 = sbr.rel (%p611) target = $region88
        $region87: #{tpu_custom_call.1} parent=83 // pred_region
          %614 = dma.done [#allocation4], 256
        $region88: #{tpu_custom_call.1} parent=83 // pred_fallthru
          _
        // Predicated region
        $region89: #{tpu_custom_call.1} parent=83 // pred_check
          %p615 = pneg %p67
        $region90: #{tpu_custom_call.1} parent=83 // pred_check_branch
          %617 = sbr.rel (%p615) target = $region92
        $region91: #{tpu_custom_call.1} parent=83 // pred_region
          %618 = dma.done [#allocation7], 256
        $region92: #{tpu_custom_call.1} parent=83 // pred_fallthru
          _
        %s619 = sand.u32 %s30, 1
        %s620 = scalar_lea.sflag [#allocation4], %s619
        %s621 = sand.u32 %s288, 1
        %s622 = smul.addr %s621, 16
        %s623 = scalar_lea.vmem [#allocation8], %s622
        // Predicated region
        $region93: #{tpu_custom_call.1} parent=83 // pred_check
          %p624 = pneg %p301
        $region94: #{tpu_custom_call.1} parent=83 // pred_check_branch
          %626 = sbr.rel (%p624) target = $region96
        $region95: #{tpu_custom_call.1} parent=83 // pred_region
          %627 = dma.done %s620, 256
        $region96: #{tpu_custom_call.1} parent=83 // pred_fallthru
          _
        %p628 = pneg %p46
        %p629 = pneg %p43
        %p630 = pneg %p67
        %p631 = pneg %p64
        %p632 = scmp.lt.s32.totalorder %s30, 1
        %s633 = scalar_select %p632, %s30, 1
        %s634 = smul.addr %s633, 4
        %s635 = smul.addr %s634, 4
        %s636 = scalar_lea.vmem %s2, %s635
        %p637 = pneg %p93
        %p638 = pneg %p90
        %p639 = scmp.lt.s32.totalorder %s30, 1
        %s640 = scalar_select %p639, %s30, 1
        %s641 = scalar_lea.vmem %s3, %s640
        %p642 = pneg %p119
        %p643 = pneg %p116
        %p644 = scmp.lt.s32.totalorder %s30, 1
        %s645 = scalar_select %p644, %s30, 1
        %s646 = smul.addr %s645, 4
        %s647 = smul.addr %s646, 4
        %s648 = scalar_lea.vmem %s4, %s647
        %p649 = pneg %p145
        %p650 = pneg %p142
        %p651 = scmp.lt.s32.totalorder %s30, 1
        %s652 = scalar_select %p651, %s30, 1
        %s653 = scalar_lea.vmem %s5, %s652
        %p654 = pneg %p171
        %p655 = pneg %p168
        %p656 = scmp.lt.s32.totalorder %s30, 1
        %s657 = scalar_select %p656, %s30, 1
        %s658 = smul.addr %s657, 4
        %s659 = smul.addr %s658, 4
        %s660 = scalar_lea.vmem %s6, %s659
        %p661 = pneg %p197
        %p662 = pneg %p194
        %p663 = scmp.lt.s32.totalorder %s30, 1
        %s664 = scalar_select %p663, %s30, 1
        %s665 = scalar_lea.vmem %s7, %s664
        %p666 = pneg %p223
        %p667 = pneg %p220
        %p668 = scmp.lt.s32.totalorder %s30, 1
        %s669 = scalar_select %p668, %s30, 1
        %s670 = scalar_lea.vmem %s8, %s669
        %p671 = pneg %p249
        %p672 = pneg %p246
        %p673 = scmp.lt.s32.totalorder %s30, 1
        %s674 = scalar_select %p673, %s30, 1
        %s675 = scalar_lea.vmem %s9, %s674
        %p676 = pneg %p275
        %p677 = pneg %p272
        %s678 = sand.u32 %s30, 1
        %s679 = scalar_lea.sflag [#allocation4], %s678
        %s680 = sand.u32 %s288, 1
        %s681 = smul.addr %s680, 16
        %s682 = scalar_lea.vmem [#allocation8], %s681
        %p683 = pneg %p301
        %p684 = pneg %p298
        %p685 = scmp.lt.s32.totalorder %s30, 1
        %s686 = scalar_select %p685, %s30, 1
        %s687 = scalar_lea.vmem %s11, %s686
        %p688 = pneg %p327
        %p689 = pneg %p324
        %p690 = scmp.lt.s32.totalorder %s30, 1
        %s691 = scalar_select %p690, %s30, 1
        %s692 = smul.addr %s691, 8
        %s693 = smul.addr %s692, 4
        %s694 = scalar_lea.vmem %s12, %s693
        %p695 = pneg %p353
        %p696 = pneg %p350
        %p697 = scmp.lt.s32.totalorder %s30, 1
        %s698 = scalar_select %p697, %s30, 1
        %s699 = scalar_lea.vmem %s13, %s698
        %p700 = pneg %p379
        %p701 = pneg %p376
        %p702 = scmp.lt.s32.totalorder %s30, 1
        %s703 = scalar_select %p702, %s30, 1
        %s704 = scalar_lea.vmem %s14, %s703
        %p705 = pneg %p405
        %p706 = pneg %p402
        %p707 = scmp.lt.s32.totalorder %s30, 1
        %s708 = scalar_select %p707, %s30, 1
        %s709 = scalar_lea.vmem %s15, %s708
        %p710 = pneg %p431
        %p711 = pneg %p428
        %p712 = pneg %p452
        %p713 = pneg %p449
        %p714 = scmp.lt.s32.totalorder %s30, 1
        %s715 = scalar_select %p714, %s30, 1
        %s716 = smul.addr %s715, 4
        %s717 = smul.addr %s716, 4
        %s718 = scalar_lea.vmem %s2, %s717
        %p719 = scmp.lt.s32.totalorder %s30, 1
        %s720 = scalar_select %p719, %s30, 1
        %s721 = scalar_lea.vmem %s3, %s720
        %p722 = scmp.lt.s32.totalorder %s30, 1
        %s723 = scalar_select %p722, %s30, 1
        %s724 = smul.addr %s723, 4
        %s725 = smul.addr %s724, 4
        %s726 = scalar_lea.vmem %s4, %s725
        %p727 = scmp.lt.s32.totalorder %s30, 1
        %s728 = scalar_select %p727, %s30, 1
        %s729 = scalar_lea.vmem %s5, %s728
        %p730 = scmp.lt.s32.totalorder %s30, 1
        %s731 = scalar_select %p730, %s30, 1
        %s732 = smul.addr %s731, 4
        %s733 = smul.addr %s732, 4
        %s734 = scalar_lea.vmem %s6, %s733
        %p735 = scmp.lt.s32.totalorder %s30, 1
        %s736 = scalar_select %p735, %s30, 1
        %s737 = scalar_lea.vmem %s7, %s736
        %p738 = scmp.lt.s32.totalorder %s30, 1
        %s739 = scalar_select %p738, %s30, 1
        %s740 = scalar_lea.vmem %s8, %s739
        %p741 = scmp.lt.s32.totalorder %s30, 1
        %s742 = scalar_select %p741, %s30, 1
        %s743 = scalar_lea.vmem %s9, %s742
        %p744 = scmp.lt.s32.totalorder %s30, 1
        %s745 = scalar_select %p744, %s30, 1
        %s746 = scalar_lea.vmem %s11, %s745
        %p747 = scmp.lt.s32.totalorder %s30, 1
        %s748 = scalar_select %p747, %s30, 1
        %s749 = smul.addr %s748, 8
        %s750 = smul.addr %s749, 4
        %s751 = scalar_lea.vmem %s12, %s750
        %p752 = scmp.lt.s32.totalorder %s30, 1
        %s753 = scalar_select %p752, %s30, 1
        %s754 = scalar_lea.vmem %s13, %s753
        %p755 = scmp.lt.s32.totalorder %s30, 1
        %s756 = scalar_select %p755, %s30, 1
        %s757 = scalar_lea.vmem %s14, %s756
        %p758 = scmp.lt.s32.totalorder %s30, 1
        %s759 = scalar_select %p758, %s30, 1
        %s760 = scalar_lea.vmem %s15, %s759
        %p762 = scmp.eq.s32.totalorder %s30, 0
        // Predicated region
        $region97: #{tpu_custom_call.1} parent=83 // pred_check
          %p763 = pneg %p762
        $region98: #{tpu_custom_call.1} parent=83 // pred_check_branch
          %765 = sbr.rel (%p763) target = $region100
        $region99: #{tpu_custom_call.1} parent=83 // pred_region
          %v766 = vld [vmem:[#allocation3] sm:$0xff]
          %v767 = vld [vmem:[#allocation3 + $0x8] sm:$0xff]
          %vm768 = vcmask 261120
          %769 = vst.msk [vmem:[#allocation2] sm:$0xff] %vm768, %v766
          %770 = vst.msk [vmem:[#allocation2 + $0x8] sm:$0xff] %vm768, %v767
        $region100: #{tpu_custom_call.1} parent=83 // pred_fallthru
          _
        %v771 = vld [vmem:[#allocation2] sm:$0xff]
        %v772 = vld [vmem:[#allocation2 + $0x8] sm:$0xff]
        %v773 = vld [vmem:[#allocation6] sm:$0xff]
        %v774 = vld [vmem:[#allocation6 + $0x8] sm:$0xff]
        %v775 = vadd.f32 %v771, %v773
        %v776 = vadd.f32 %v772, %v774
        %v777 = vpack.c.bf16 %v776, %v775
        %v778 = vpack.c.bf16 %v772, %v771
        %v779 = vld [vmem:[%s718] sm:$0xf]
        %v780 = vld [vmem:[%s718 + $0x4] sm:$0xf]
        %v781 = vld [vmem:[%s718 + $0x8] sm:$0xf]
        %v782 = vld [vmem:[%s718 + $0xc] sm:$0xf]
        %v783 = vld [vmem:[%s721] sm:$0x1]
        %v785 = vlaneseq
        %v786 = vshrl.u32 %v785, 7
        %v787 = vsub.s32 0, %v786
        %v788 = vrot.slane %v783, %v787
        %v794 = vunpack.c.l.b16 %v779
        %v795 = vunpack.c.l.b16 %v780
        %v796 = vunpack.c.l.b16 %v781
        %v797 = vunpack.c.l.b16 %v782
        %v798 = vpack.c.b16 %v795, %v794
        %v799 = vpack.c.b16 %v797, %v796
        %vm802 = vcmask 261120
        %v804 = vsel %vm802, %v777, 0
        %806 = vmatprep.subr.bf16.mxu0 0
        %807 = vmatpush1.bf16.msra.mxu0 0
        %808 = vmatprep.subr.bf16.mxu0 0
        %809 = vmatpush1.bf16.msra.mxu0 0
        %810 = vmatprep.subr.bf16.mxu0 0
        %811 = vmatpush1.bf16.msra.mxu0 0
        %812 = vmatprep.subr.bf16.mxu0 0
        %813 = vmatpush1.bf16.msra.mxu0 0
        %814 = vmatprep.subr.bf16.mxu0 0
        %815 = vmatpush1.bf16.msra.mxu0 0
        %816 = vmatprep.subr.bf16.mxu0 0
        %817 = vmatpush1.bf16.msra.mxu0 0
        %818 = vmatprep.subr.bf16.mxu0 0
        %819 = vmatpush1.bf16.msra.mxu0 %v799
        %820 = vmatprep.subr.bf16.mxu0 0
        %821 = vmatpush1.bf16.msra.mxu0 %v798
        %822 = vmatprep.subr.bf16.mxu0 0
        %823 = vmatpush2.bf16.msra.mxu0 0
        %824 = vmatprep.subr.bf16.mxu0 0
        %825 = vmatpush2.bf16.msra.mxu0 0
        %826 = vmatprep.subr.bf16.mxu0 0
        %827 = vmatpush2.bf16.msra.mxu0 0
        %828 = vmatprep.subr.bf16.mxu0 0
        %829 = vmatpush2.bf16.msra.mxu0 0
        %830 = vmatprep.subr.bf16.mxu0 0
        %831 = vmatpush2.bf16.msra.mxu0 0
        %832 = vmatprep.subr.bf16.mxu0 0
        %833 = vmatpush2.bf16.msra.mxu0 0
        %834 = vmatprep.subr.bf16.mxu0 0
        %835 = vmatpush2.bf16.msra.mxu0 0
        %836 = vmatprep.subr.bf16.mxu0 0
        %837 = vmatpush2.bf16.msra.mxu0 0
        %838 = vmatprep.mubr.bf16.mxu0 0
        %839 = vmatmul.mubr.bf16.gmra.mxu0 %v804
        %v840 = vpop.f32.mrf.mxu0
        %v841 = vadd.f32 %v788, %v840
        %v842 = vpop.f32.mrf.mxu0
        %v843 = vpop.f32.mrf.mxu0
        %v844 = vadd.f32 %v788, %v843
        %v845 = vpop.f32.mrf.mxu0
        %846 = vdwg.mxu0
        %v847 = vld [vmem:[%s726] sm:$0xf]
        %v848 = vld [vmem:[%s726 + $0x4] sm:$0xf]
        %v849 = vld [vmem:[%s726 + $0x8] sm:$0xf]
        %v850 = vld [vmem:[%s726 + $0xc] sm:$0xf]
        %v851 = vld [vmem:[%s729] sm:$0x1]
        %v853 = vlaneseq
        %v854 = vshrl.u32 %v853, 7
        %v855 = vsub.s32 0, %v854
        %v856 = vrot.slane %v851, %v855
        %v862 = vunpack.c.l.b16 %v847
        %v863 = vunpack.c.l.b16 %v848
        %v864 = vunpack.c.l.b16 %v849
        %v865 = vunpack.c.l.b16 %v850
        %v866 = vpack.c.b16 %v863, %v862
        %v867 = vpack.c.b16 %v865, %v864
        %v871 = vsel %vm802, %v778, 0
        %873 = vmatprep.subr.bf16.mxu0 0
        %874 = vmatpush1.bf16.msra.mxu0 0
        %875 = vmatprep.subr.bf16.mxu0 0
        %876 = vmatpush1.bf16.msra.mxu0 0
        %877 = vmatprep.subr.bf16.mxu0 0
        %878 = vmatpush1.bf16.msra.mxu0 0
        %879 = vmatprep.subr.bf16.mxu0 0
        %880 = vmatpush1.bf16.msra.mxu0 0
        %881 = vmatprep.subr.bf16.mxu0 0
        %882 = vmatpush1.bf16.msra.mxu0 0
        %883 = vmatprep.subr.bf16.mxu0 0
        %884 = vmatpush1.bf16.msra.mxu0 0
        %885 = vmatprep.subr.bf16.mxu0 0
        %886 = vmatpush1.bf16.msra.mxu0 %v867
        %887 = vmatprep.subr.bf16.mxu0 0
        %888 = vmatpush1.bf16.msra.mxu0 %v866
        %889 = vmatprep.subr.bf16.mxu0 0
        %890 = vmatpush2.bf16.msra.mxu0 0
        %891 = vmatprep.subr.bf16.mxu0 0
        %892 = vmatpush2.bf16.msra.mxu0 0
        %893 = vmatprep.subr.bf16.mxu0 0
        %894 = vmatpush2.bf16.msra.mxu0 0
        %895 = vmatprep.subr.bf16.mxu0 0
        %896 = vmatpush2.bf16.msra.mxu0 0
        %897 = vmatprep.subr.bf16.mxu0 0
        %898 = vmatpush2.bf16.msra.mxu0 0
        %899 = vmatprep.subr.bf16.mxu0 0
        %900 = vmatpush2.bf16.msra.mxu0 0
        %901 = vmatprep.subr.bf16.mxu0 0
        %902 = vmatpush2.bf16.msra.mxu0 0
        %903 = vmatprep.subr.bf16.mxu0 0
        %904 = vmatpush2.bf16.msra.mxu0 0
        %905 = vmatprep.mubr.bf16.mxu0 0
        %906 = vmatmul.mubr.bf16.gmra.mxu0 %v871
        %v907 = vpop.f32.mrf.mxu0
        %v908 = vadd.f32 %v856, %v907
        %v909 = vpop.f32.mrf.mxu0
        %v910 = vpop.f32.mrf.mxu0
        %v911 = vadd.f32 %v856, %v910
        %v912 = vpop.f32.mrf.mxu0
        %913 = vdwg.mxu0
        %v914 = vpack.c.bf16 %v844, %v841
        %v915 = vpack.c.bf16 %v911, %v908
        %v916 = vld [vmem:[%s734] sm:$0xf]
        %v917 = vld [vmem:[%s734 + $0x4] sm:$0xf]
        %v918 = vld [vmem:[%s734 + $0x8] sm:$0xf]
        %v919 = vld [vmem:[%s734 + $0xc] sm:$0xf]
        %921 = vrot.lane.b32.xlu0 %v914, 96
        %v922 = vpop.permute.xlu0 %921
        %vm923 = vcmask 64512
        %v925 = vsel %vm923, %v914, 0
        %v928 = vsel %vm923, %v922, 0
        %930 = vmatprep.subr.bf16.mxu0 0
        %931 = vmatpush1.bf16.xpose.msra.mxu0 0
        %932 = vmatprep.subr.bf16.mxu0 0
        %933 = vmatpush1.bf16.xpose.msra.mxu0 0
        %934 = vmatprep.subr.bf16.mxu0 0
        %935 = vmatpush1.bf16.xpose.msra.mxu0 0
        %936 = vmatprep.subr.bf16.mxu0 0
        %937 = vmatpush1.bf16.xpose.msra.mxu0 0
        %938 = vmatprep.subr.bf16.mxu0 0
        %939 = vmatpush1.bf16.xpose.msra.mxu0 0
        %940 = vmatprep.subr.bf16.mxu0 0
        %941 = vmatpush1.bf16.xpose.msra.mxu0 0
        %942 = vmatprep.subr.bf16.mxu0 0
        %943 = vmatpush1.bf16.xpose.msra.mxu0 0
        %944 = vmatprep.subr.bf16.mxu0 0
        %945 = vmatpush1.bf16.xpose.msra.mxu0 %v928
        %946 = vmatprep.subr.bf16.mxu0 0
        %947 = vmatpush2.bf16.xpose.msra.mxu0 0
        %948 = vmatprep.subr.bf16.mxu0 0
        %949 = vmatpush2.bf16.xpose.msra.mxu0 0
        %950 = vmatprep.subr.bf16.mxu0 0
        %951 = vmatpush2.bf16.xpose.msra.mxu0 0
        %952 = vmatprep.subr.bf16.mxu0 0
        %953 = vmatpush2.bf16.xpose.msra.mxu0 0
        %954 = vmatprep.subr.bf16.mxu0 0
        %955 = vmatpush2.bf16.xpose.msra.mxu0 0
        %956 = vmatprep.subr.bf16.mxu0 0
        %957 = vmatpush2.bf16.xpose.msra.mxu0 0
        %958 = vmatprep.subr.bf16.mxu0 0
        %959 = vmatpush2.bf16.xpose.msra.mxu0 0
        %960 = vmatprep.subr.bf16.mxu0 0
        %961 = vmatpush2.bf16.xpose.msra.mxu0 0
        %962 = vmatprep.mubr.bf16.mxu0 0
        %963 = vmatmul.mubr.bf16.gmra.mxu0 %v925
        %v964 = vpop.f32.mrf.mxu0
        %v965 = vadd.f32 0.0, %v964
        %v966 = vpop.f32.mrf.mxu0
        %v967 = vpop.f32.mrf.mxu0
        %v968 = vpop.f32.mrf.mxu0
        %969 = vdwg.mxu0
        %v970 = vmul.f32 %v965, 0.35355338
        %v971 = vsel %vm923, %v970, -inf
        %972 = vmax.xlane.f32.xlu0 %v971
        %v973 = vpop.xlane.xlu0 %972
        %v974 = vsub.f32 %v970, %v973
        %v975 = vmul.f32 %v974, 1.442695
        %v976 = vpow.pop %v975
        %v977 = vsel %vm923, %v976, 0.0
        %978 = vadd.xlane.f32.xlu0 %v977
        %v979 = vpop.xlane.xlu0 %978
        %v980 = vrcp.pop %v979
        %v981 = vmul.f32 %v976, %v980
        %v982 = vpack.c.bf16 %v981, %v981
        %v984 = vsel %vm923, %v982, 0
        %vm986 = vcmask 1043456
        %v988 = vsel %vm986, %v915, 0
        %990 = vmatprep.subr.bf16.mxu0 0
        %991 = vmatpush1.bf16.msra.mxu0 0
        %992 = vmatprep.subr.bf16.mxu0 0
        %993 = vmatpush1.bf16.msra.mxu0 0
        %994 = vmatprep.subr.bf16.mxu0 0
        %995 = vmatpush1.bf16.msra.mxu0 0
        %996 = vmatprep.subr.bf16.mxu0 0
        %997 = vmatpush1.bf16.msra.mxu0 0
        %998 = vmatprep.subr.bf16.mxu0 0
        %999 = vmatpush1.bf16.msra.mxu0 0
        %1000 = vmatprep.subr.bf16.mxu0 0
        %1001 = vmatpush1.bf16.msra.mxu0 0
        %1002 = vmatprep.subr.bf16.mxu0 0
        %1003 = vmatpush1.bf16.msra.mxu0 0
        %1004 = vmatprep.subr.bf16.mxu0 0
        %1005 = vmatpush1.bf16.msra.mxu0 %v988
        %1006 = vmatprep.subr.bf16.mxu0 0
        %1007 = vmatpush2.bf16.msra.mxu0 0
        %1008 = vmatprep.subr.bf16.mxu0 0
        %1009 = vmatpush2.bf16.msra.mxu0 0
        %1010 = vmatprep.subr.bf16.mxu0 0
        %1011 = vmatpush2.bf16.msra.mxu0 0
        %1012 = vmatprep.subr.bf16.mxu0 0
        %1013 = vmatpush2.bf16.msra.mxu0 0
        %1014 = vmatprep.subr.bf16.mxu0 0
        %1015 = vmatpush2.bf16.msra.mxu0 0
        %1016 = vmatprep.subr.bf16.mxu0 0
        %1017 = vmatpush2.bf16.msra.mxu0 0
        %1018 = vmatprep.subr.bf16.mxu0 0
        %1019 = vmatpush2.bf16.msra.mxu0 0
        %1020 = vmatprep.subr.bf16.mxu0 0
        %1021 = vmatpush2.bf16.msra.mxu0 0
        %1022 = vmatprep.mubr.bf16.mxu0 0
        %1023 = vmatmul.mubr.bf16.gmra.mxu0 %v984
        %v1024 = vpop.f32.mrf.mxu0
        %v1025 = vadd.f32 0.0, %v1024
        %v1026 = vpop.f32.mrf.mxu0
        %v1027 = vpop.f32.mrf.mxu0
        %v1028 = vpop.f32.mrf.mxu0
        %1029 = vdwg.mxu0
        %v1030 = vpack.c.bf16 %v1025, %v1025
        %1031 = vrot.lane.b32.xlu0 %v914, 120
        %v1032 = vpop.permute.xlu0 %1031
        %1033 = vrot.lane.b32.xlu0 %v914, 88
        %v1034 = vpop.permute.xlu0 %1033
        %v1036 = vsel %vm923, %v1032, 0
        %v1039 = vsel %vm923, %v1034, 0
        %1041 = vmatprep.subr.bf16.mxu0 0
        %1042 = vmatpush1.bf16.xpose.msra.mxu0 0
        %1043 = vmatprep.subr.bf16.mxu0 0
        %1044 = vmatpush1.bf16.xpose.msra.mxu0 0
        %1045 = vmatprep.subr.bf16.mxu0 0
        %1046 = vmatpush1.bf16.xpose.msra.mxu0 0
        %1047 = vmatprep.subr.bf16.mxu0 0
        %1048 = vmatpush1.bf16.xpose.msra.mxu0 0
        %1049 = vmatprep.subr.bf16.mxu0 0
        %1050 = vmatpush1.bf16.xpose.msra.mxu0 0
        %1051 = vmatprep.subr.bf16.mxu0 0
        %1052 = vmatpush1.bf16.xpose.msra.mxu0 0
        %1053 = vmatprep.subr.bf16.mxu0 0
        %1054 = vmatpush1.bf16.xpose.msra.mxu0 0
        %1055 = vmatprep.subr.bf16.mxu0 0
        %1056 = vmatpush1.bf16.xpose.msra.mxu0 %v1039
        %1057 = vmatprep.subr.bf16.mxu0 0
        %1058 = vmatpush2.bf16.xpose.msra.mxu0 0
        %1059 = vmatprep.subr.bf16.mxu0 0
        %1060 = vmatpush2.bf16.xpose.msra.mxu0 0
        %1061 = vmatprep.subr.bf16.mxu0 0
        %1062 = vmatpush2.bf16.xpose.msra.mxu0 0
        %1063 = vmatprep.subr.bf16.mxu0 0
        %1064 = vmatpush2.bf16.xpose.msra.mxu0 0
        %1065 = vmatprep.subr.bf16.mxu0 0
        %1066 = vmatpush2.bf16.xpose.msra.mxu0 0
        %1067 = vmatprep.subr.bf16.mxu0 0
        %1068 = vmatpush2.bf16.xpose.msra.mxu0 0
        %1069 = vmatprep.subr.bf16.mxu0 0
        %1070 = vmatpush2.bf16.xpose.msra.mxu0 0
        %1071 = vmatprep.subr.bf16.mxu0 0
        %1072 = vmatpush2.bf16.xpose.msra.mxu0 0
        %1073 = vmatprep.mubr.bf16.mxu0 0
        %1074 = vmatmul.mubr.bf16.gmra.mxu0 %v1036
        %v1075 = vpop.f32.mrf.mxu0
        %v1076 = vadd.f32 0.0, %v1075
        %v1077 = vpop.f32.mrf.mxu0
        %v1078 = vpop.f32.mrf.mxu0
        %v1079 = vpop.f32.mrf.mxu0
        %1080 = vdwg.mxu0
        %v1081 = vmul.f32 %v1076, 0.35355338
        %v1082 = vsel %vm923, %v1081, -inf
        %1083 = vmax.xlane.f32.xlu0 %v1082
        %v1084 = vpop.xlane.xlu0 %1083
        %v1085 = vsub.f32 %v1081, %v1084
        %v1086 = vmul.f32 %v1085, 1.442695
        %v1087 = vpow.pop %v1086
        %v1088 = vsel %vm923, %v1087, 0.0
        %1089 = vadd.xlane.f32.xlu0 %v1088
        %v1090 = vpop.xlane.xlu0 %1089
        %v1091 = vrcp.pop %v1090
        %v1092 = vmul.f32 %v1087, %v1091
        %v1093 = vpack.c.bf16 %v1092, %v1092
        %1095 = vrot.lane.b32.xlu0 %v915, 120
        %v1096 = vpop.permute.xlu0 %1095
        %v1098 = vsel %vm923, %v1093, 0
        %v1101 = vsel %vm986, %v1096, 0
        %1103 = vmatprep.subr.bf16.mxu0 0
        %1104 = vmatpush1.bf16.msra.mxu0 0
        %1105 = vmatprep.subr.bf16.mxu0 0
        %1106 = vmatpush1.bf16.msra.mxu0 0
        %1107 = vmatprep.subr.bf16.mxu0 0
        %1108 = vmatpush1.bf16.msra.mxu0 0
        %1109 = vmatprep.subr.bf16.mxu0 0
        %1110 = vmatpush1.bf16.msra.mxu0 0
        %1111 = vmatprep.subr.bf16.mxu0 0
        %1112 = vmatpush1.bf16.msra.mxu0 0
        %1113 = vmatprep.subr.bf16.mxu0 0
        %1114 = vmatpush1.bf16.msra.mxu0 0
        %1115 = vmatprep.subr.bf16.mxu0 0
        %1116 = vmatpush1.bf16.msra.mxu0 0
        %1117 = vmatprep.subr.bf16.mxu0 0
        %1118 = vmatpush1.bf16.msra.mxu0 %v1101
        %1119 = vmatprep.subr.bf16.mxu0 0
        %1120 = vmatpush2.bf16.msra.mxu0 0
        %1121 = vmatprep.subr.bf16.mxu0 0
        %1122 = vmatpush2.bf16.msra.mxu0 0
        %1123 = vmatprep.subr.bf16.mxu0 0
        %1124 = vmatpush2.bf16.msra.mxu0 0
        %1125 = vmatprep.subr.bf16.mxu0 0
        %1126 = vmatpush2.bf16.msra.mxu0 0
        %1127 = vmatprep.subr.bf16.mxu0 0
        %1128 = vmatpush2.bf16.msra.mxu0 0
        %1129 = vmatprep.subr.bf16.mxu0 0
        %1130 = vmatpush2.bf16.msra.mxu0 0
        %1131 = vmatprep.subr.bf16.mxu0 0
        %1132 = vmatpush2.bf16.msra.mxu0 0
        %1133 = vmatprep.subr.bf16.mxu0 0
        %1134 = vmatpush2.bf16.msra.mxu0 0
        %1135 = vmatprep.mubr.bf16.mxu0 0
        %1136 = vmatmul.mubr.bf16.gmra.mxu0 %v1098
        %v1137 = vpop.f32.mrf.mxu0
        %v1138 = vadd.f32 0.0, %v1137
        %v1139 = vpop.f32.mrf.mxu0
        %v1140 = vpop.f32.mrf.mxu0
        %v1141 = vpop.f32.mrf.mxu0
        %1142 = vdwg.mxu0
        %v1143 = vpack.c.bf16 %v1138, %v1138
        %v1145 = vsel %vm923, %v1143, 0
        %v1148 = vsel %vm986, %v917, 0
        %1150 = vmatprep.subr.bf16.mxu0 0
        %1151 = vmatpush1.bf16.msra.mxu0 0
        %1152 = vmatprep.subr.bf16.mxu0 0
        %1153 = vmatpush1.bf16.msra.mxu0 0
        %1154 = vmatprep.subr.bf16.mxu0 0
        %1155 = vmatpush1.bf16.msra.mxu0 0
        %1156 = vmatprep.subr.bf16.mxu0 0
        %1157 = vmatpush1.bf16.msra.mxu0 0
        %1158 = vmatprep.subr.bf16.mxu0 0
        %1159 = vmatpush1.bf16.msra.mxu0 0
        %1160 = vmatprep.subr.bf16.mxu0 0
        %1161 = vmatpush1.bf16.msra.mxu0 0
        %1162 = vmatprep.subr.bf16.mxu0 0
        %1163 = vmatpush1.bf16.msra.mxu0 0
        %1164 = vmatprep.subr.bf16.mxu0 0
        %1165 = vmatpush1.bf16.msra.mxu0 %v1148
        %1166 = vmatprep.subr.bf16.mxu0 0
        %1167 = vmatpush2.bf16.msra.mxu0 0
        %1168 = vmatprep.subr.bf16.mxu0 0
        %1169 = vmatpush2.bf16.msra.mxu0 0
        %1170 = vmatprep.subr.bf16.mxu0 0
        %1171 = vmatpush2.bf16.msra.mxu0 0
        %1172 = vmatprep.subr.bf16.mxu0 0
        %1173 = vmatpush2.bf16.msra.mxu0 0
        %1174 = vmatprep.subr.bf16.mxu0 0
        %1175 = vmatpush2.bf16.msra.mxu0 0
        %1176 = vmatprep.subr.bf16.mxu0 0
        %1177 = vmatpush2.bf16.msra.mxu0 0
        %1178 = vmatprep.subr.bf16.mxu0 0
        %1179 = vmatpush2.bf16.msra.mxu0 0
        %1180 = vmatprep.subr.bf16.mxu0 0
        %1181 = vmatpush2.bf16.msra.mxu0 0
        %1182 = vmatprep.mubr.bf16.mxu0 0
        %1183 = vmatmul.mubr.bf16.gmra.mxu0 %v1145
        %v1184 = vpop.f32.mrf.mxu0
        %v1185 = vadd.f32 0.0, %v1184
        %v1186 = vpop.f32.mrf.mxu0
        %v1187 = vpop.f32.mrf.mxu0
        %v1188 = vpop.f32.mrf.mxu0
        %1189 = vdwg.mxu0
        %v1191 = vsel %vm923, %v1030, 0
        %v1194 = vsel %vm986, %v916, 0
        %1196 = vmatprep.subr.bf16.mxu0 0
        %1197 = vmatpush1.bf16.msra.mxu0 0
        %1198 = vmatprep.subr.bf16.mxu0 0
        %1199 = vmatpush1.bf16.msra.mxu0 0
        %1200 = vmatprep.subr.bf16.mxu0 0
        %1201 = vmatpush1.bf16.msra.mxu0 0
        %1202 = vmatprep.subr.bf16.mxu0 0
        %1203 = vmatpush1.bf16.msra.mxu0 0
        %1204 = vmatprep.subr.bf16.mxu0 0
        %1205 = vmatpush1.bf16.msra.mxu0 0
        %1206 = vmatprep.subr.bf16.mxu0 0
        %1207 = vmatpush1.bf16.msra.mxu0 0
        %1208 = vmatprep.subr.bf16.mxu0 0
        %1209 = vmatpush1.bf16.msra.mxu0 0
        %1210 = vmatprep.subr.bf16.mxu0 0
        %1211 = vmatpush1.bf16.msra.mxu0 %v1194
        %1212 = vmatprep.subr.bf16.mxu0 0
        %1213 = vmatpush2.bf16.msra.mxu0 0
        %1214 = vmatprep.subr.bf16.mxu0 0
        %1215 = vmatpush2.bf16.msra.mxu0 0
        %1216 = vmatprep.subr.bf16.mxu0 0
        %1217 = vmatpush2.bf16.msra.mxu0 0
        %1218 = vmatprep.subr.bf16.mxu0 0
        %1219 = vmatpush2.bf16.msra.mxu0 0
        %1220 = vmatprep.subr.bf16.mxu0 0
        %1221 = vmatpush2.bf16.msra.mxu0 0
        %1222 = vmatprep.subr.bf16.mxu0 0
        %1223 = vmatpush2.bf16.msra.mxu0 0
        %1224 = vmatprep.subr.bf16.mxu0 0
        %1225 = vmatpush2.bf16.msra.mxu0 0
        %1226 = vmatprep.subr.bf16.mxu0 0
        %1227 = vmatpush2.bf16.msra.mxu0 0
        %1228 = vmatprep.mubr.bf16.mxu0 0
        %1229 = vmatmul.mubr.bf16.gmra.mxu0 %v1191
        %v1230 = vpop.f32.mrf.mxu0
        %v1231 = vadd.f32 %v1185, %v1230
        %v1232 = vpop.f32.mrf.mxu0
        %v1233 = vpop.f32.mrf.mxu0
        %v1234 = vpop.f32.mrf.mxu0
        %1235 = vdwg.mxu0
        %1236 = vrot.lane.b32.xlu0 %v914, 112
        %v1237 = vpop.permute.xlu0 %1236
        %1238 = vrot.lane.b32.xlu0 %v914, 80
        %v1239 = vpop.permute.xlu0 %1238
        %v1241 = vsel %vm923, %v1237, 0
        %v1244 = vsel %vm923, %v1239, 0
        %1246 = vmatprep.subr.bf16.mxu0 0
        %1247 = vmatpush1.bf16.xpose.msra.mxu0 0
        %1248 = vmatprep.subr.bf16.mxu0 0
        %1249 = vmatpush1.bf16.xpose.msra.mxu0 0
        %1250 = vmatprep.subr.bf16.mxu0 0
        %1251 = vmatpush1.bf16.xpose.msra.mxu0 0
        %1252 = vmatprep.subr.bf16.mxu0 0
        %1253 = vmatpush1.bf16.xpose.msra.mxu0 0
        %1254 = vmatprep.subr.bf16.mxu0 0
        %1255 = vmatpush1.bf16.xpose.msra.mxu0 0
        %1256 = vmatprep.subr.bf16.mxu0 0
        %1257 = vmatpush1.bf16.xpose.msra.mxu0 0
        %1258 = vmatprep.subr.bf16.mxu0 0
        %1259 = vmatpush1.bf16.xpose.msra.mxu0 0
        %1260 = vmatprep.subr.bf16.mxu0 0
        %1261 = vmatpush1.bf16.xpose.msra.mxu0 %v1244
        %1262 = vmatprep.subr.bf16.mxu0 0
        %1263 = vmatpush2.bf16.xpose.msra.mxu0 0
        %1264 = vmatprep.subr.bf16.mxu0 0
        %1265 = vmatpush2.bf16.xpose.msra.mxu0 0
        %1266 = vmatprep.subr.bf16.mxu0 0
        %1267 = vmatpush2.bf16.xpose.msra.mxu0 0
        %1268 = vmatprep.subr.bf16.mxu0 0
        %1269 = vmatpush2.bf16.xpose.msra.mxu0 0
        %1270 = vmatprep.subr.bf16.mxu0 0
        %1271 = vmatpush2.bf16.xpose.msra.mxu0 0
        %1272 = vmatprep.subr.bf16.mxu0 0
        %1273 = vmatpush2.bf16.xpose.msra.mxu0 0
        %1274 = vmatprep.subr.bf16.mxu0 0
        %1275 = vmatpush2.bf16.xpose.msra.mxu0 0
        %1276 = vmatprep.subr.bf16.mxu0 0
        %1277 = vmatpush2.bf16.xpose.msra.mxu0 0
        %1278 = vmatprep.mubr.bf16.mxu0 0
        %1279 = vmatmul.mubr.bf16.gmra.mxu0 %v1241
        %v1280 = vpop.f32.mrf.mxu0
        %v1281 = vadd.f32 0.0, %v1280
        %v1282 = vpop.f32.mrf.mxu0
        %v1283 = vpop.f32.mrf.mxu0
        %v1284 = vpop.f32.mrf.mxu0
        %1285 = vdwg.mxu0
        %v1286 = vmul.f32 %v1281, 0.35355338
        %v1287 = vsel %vm923, %v1286, -inf
        %1288 = vmax.xlane.f32.xlu0 %v1287
        %v1289 = vpop.xlane.xlu0 %1288
        %v1290 = vsub.f32 %v1286, %v1289
        %v1291 = vmul.f32 %v1290, 1.442695
        %v1292 = vpow.pop %v1291
        %v1293 = vsel %vm923, %v1292, 0.0
        %1294 = vadd.xlane.f32.xlu0 %v1293
        %v1295 = vpop.xlane.xlu0 %1294
        %v1296 = vrcp.pop %v1295
        %v1297 = vmul.f32 %v1292, %v1296
        %v1298 = vpack.c.bf16 %v1297, %v1297
        %1299 = vrot.lane.b32.xlu0 %v915, 112
        %v1300 = vpop.permute.xlu0 %1299
        %v1302 = vsel %vm923, %v1298, 0
        %v1305 = vsel %vm986, %v1300, 0
        %1307 = vmatprep.subr.bf16.mxu0 0
        %1308 = vmatpush1.bf16.msra.mxu0 0
        %1309 = vmatprep.subr.bf16.mxu0 0
        %1310 = vmatpush1.bf16.msra.mxu0 0
        %1311 = vmatprep.subr.bf16.mxu0 0
        %1312 = vmatpush1.bf16.msra.mxu0 0
        %1313 = vmatprep.subr.bf16.mxu0 0
        %1314 = vmatpush1.bf16.msra.mxu0 0
        %1315 = vmatprep.subr.bf16.mxu0 0
        %1316 = vmatpush1.bf16.msra.mxu0 0
        %1317 = vmatprep.subr.bf16.mxu0 0
        %1318 = vmatpush1.bf16.msra.mxu0 0
        %1319 = vmatprep.subr.bf16.mxu0 0
        %1320 = vmatpush1.bf16.msra.mxu0 0
        %1321 = vmatprep.subr.bf16.mxu0 0
        %1322 = vmatpush1.bf16.msra.mxu0 %v1305
        %1323 = vmatprep.subr.bf16.mxu0 0
        %1324 = vmatpush2.bf16.msra.mxu0 0
        %1325 = vmatprep.subr.bf16.mxu0 0
        %1326 = vmatpush2.bf16.msra.mxu0 0
        %1327 = vmatprep.subr.bf16.mxu0 0
        %1328 = vmatpush2.bf16.msra.mxu0 0
        %1329 = vmatprep.subr.bf16.mxu0 0
        %1330 = vmatpush2.bf16.msra.mxu0 0
        %1331 = vmatprep.subr.bf16.mxu0 0
        %1332 = vmatpush2.bf16.msra.mxu0 0
        %1333 = vmatprep.subr.bf16.mxu0 0
        %1334 = vmatpush2.bf16.msra.mxu0 0
        %1335 = vmatprep.subr.bf16.mxu0 0
        %1336 = vmatpush2.bf16.msra.mxu0 0
        %1337 = vmatprep.subr.bf16.mxu0 0
        %1338 = vmatpush2.bf16.msra.mxu0 0
        %1339 = vmatprep.mubr.bf16.mxu0 0
        %1340 = vmatmul.mubr.bf16.gmra.mxu0 %v1302
        %v1341 = vpop.f32.mrf.mxu0
        %v1342 = vadd.f32 0.0, %v1341
        %v1343 = vpop.f32.mrf.mxu0
        %v1344 = vpop.f32.mrf.mxu0
        %v1345 = vpop.f32.mrf.mxu0
        %1346 = vdwg.mxu0
        %v1347 = vpack.c.bf16 %v1342, %v1342
        %v1349 = vsel %vm923, %v1347, 0
        %v1352 = vsel %vm986, %v918, 0
        %1354 = vmatprep.subr.bf16.mxu0 0
        %1355 = vmatpush1.bf16.msra.mxu0 0
        %1356 = vmatprep.subr.bf16.mxu0 0
        %1357 = vmatpush1.bf16.msra.mxu0 0
        %1358 = vmatprep.subr.bf16.mxu0 0
        %1359 = vmatpush1.bf16.msra.mxu0 0
        %1360 = vmatprep.subr.bf16.mxu0 0
        %1361 = vmatpush1.bf16.msra.mxu0 0
        %1362 = vmatprep.subr.bf16.mxu0 0
        %1363 = vmatpush1.bf16.msra.mxu0 0
        %1364 = vmatprep.subr.bf16.mxu0 0
        %1365 = vmatpush1.bf16.msra.mxu0 0
        %1366 = vmatprep.subr.bf16.mxu0 0
        %1367 = vmatpush1.bf16.msra.mxu0 0
        %1368 = vmatprep.subr.bf16.mxu0 0
        %1369 = vmatpush1.bf16.msra.mxu0 %v1352
        %1370 = vmatprep.subr.bf16.mxu0 0
        %1371 = vmatpush2.bf16.msra.mxu0 0
        %1372 = vmatprep.subr.bf16.mxu0 0
        %1373 = vmatpush2.bf16.msra.mxu0 0
        %1374 = vmatprep.subr.bf16.mxu0 0
        %1375 = vmatpush2.bf16.msra.mxu0 0
        %1376 = vmatprep.subr.bf16.mxu0 0
        %1377 = vmatpush2.bf16.msra.mxu0 0
        %1378 = vmatprep.subr.bf16.mxu0 0
        %1379 = vmatpush2.bf16.msra.mxu0 0
        %1380 = vmatprep.subr.bf16.mxu0 0
        %1381 = vmatpush2.bf16.msra.mxu0 0
        %1382 = vmatprep.subr.bf16.mxu0 0
        %1383 = vmatpush2.bf16.msra.mxu0 0
        %1384 = vmatprep.subr.bf16.mxu0 0
        %1385 = vmatpush2.bf16.msra.mxu0 0
        %1386 = vmatprep.mubr.bf16.mxu0 0
        %1387 = vmatmul.mubr.bf16.gmra.mxu0 %v1349
        %v1388 = vpop.f32.mrf.mxu0
        %v1389 = vadd.f32 0.0, %v1388
        %v1390 = vpop.f32.mrf.mxu0
        %v1391 = vpop.f32.mrf.mxu0
        %v1392 = vpop.f32.mrf.mxu0
        %1393 = vdwg.mxu0
        %v1394 = vadd.f32 %v1231, %v1389
        %1395 = vrot.lane.b32.xlu0 %v914, 104
        %v1396 = vpop.permute.xlu0 %1395
        %1397 = vrot.lane.b32.xlu0 %v914, 72
        %v1398 = vpop.permute.xlu0 %1397
        %v1400 = vsel %vm923, %v1396, 0
        %v1403 = vsel %vm923, %v1398, 0
        %1405 = vmatprep.subr.bf16.mxu0 0
        %1406 = vmatpush1.bf16.xpose.msra.mxu0 0
        %1407 = vmatprep.subr.bf16.mxu0 0
        %1408 = vmatpush1.bf16.xpose.msra.mxu0 0
        %1409 = vmatprep.subr.bf16.mxu0 0
        %1410 = vmatpush1.bf16.xpose.msra.mxu0 0
        %1411 = vmatprep.subr.bf16.mxu0 0
        %1412 = vmatpush1.bf16.xpose.msra.mxu0 0
        %1413 = vmatprep.subr.bf16.mxu0 0
        %1414 = vmatpush1.bf16.xpose.msra.mxu0 0
        %1415 = vmatprep.subr.bf16.mxu0 0
        %1416 = vmatpush1.bf16.xpose.msra.mxu0 0
        %1417 = vmatprep.subr.bf16.mxu0 0
        %1418 = vmatpush1.bf16.xpose.msra.mxu0 0
        %1419 = vmatprep.subr.bf16.mxu0 0
        %1420 = vmatpush1.bf16.xpose.msra.mxu0 %v1403
        %1421 = vmatprep.subr.bf16.mxu0 0
        %1422 = vmatpush2.bf16.xpose.msra.mxu0 0
        %1423 = vmatprep.subr.bf16.mxu0 0
        %1424 = vmatpush2.bf16.xpose.msra.mxu0 0
        %1425 = vmatprep.subr.bf16.mxu0 0
        %1426 = vmatpush2.bf16.xpose.msra.mxu0 0
        %1427 = vmatprep.subr.bf16.mxu0 0
        %1428 = vmatpush2.bf16.xpose.msra.mxu0 0
        %1429 = vmatprep.subr.bf16.mxu0 0
        %1430 = vmatpush2.bf16.xpose.msra.mxu0 0
        %1431 = vmatprep.subr.bf16.mxu0 0
        %1432 = vmatpush2.bf16.xpose.msra.mxu0 0
        %1433 = vmatprep.subr.bf16.mxu0 0
        %1434 = vmatpush2.bf16.xpose.msra.mxu0 0
        %1435 = vmatprep.subr.bf16.mxu0 0
        %1436 = vmatpush2.bf16.xpose.msra.mxu0 0
        %1437 = vmatprep.mubr.bf16.mxu0 0
        %1438 = vmatmul.mubr.bf16.gmra.mxu0 %v1400
        %v1439 = vpop.f32.mrf.mxu0
        %v1440 = vadd.f32 0.0, %v1439
        %v1441 = vpop.f32.mrf.mxu0
        %v1442 = vpop.f32.mrf.mxu0
        %v1443 = vpop.f32.mrf.mxu0
        %1444 = vdwg.mxu0
        %v1445 = vmul.f32 %v1440, 0.35355338
        %v1446 = vsel %vm923, %v1445, -inf
        %1447 = vmax.xlane.f32.xlu0 %v1446
        %v1448 = vpop.xlane.xlu0 %1447
        %v1449 = vsub.f32 %v1445, %v1448
        %v1450 = vmul.f32 %v1449, 1.442695
        %v1451 = vpow.pop %v1450
        %v1452 = vsel %vm923, %v1451, 0.0
        %1453 = vadd.xlane.f32.xlu0 %v1452
        %v1454 = vpop.xlane.xlu0 %1453
        %v1455 = vrcp.pop %v1454
        %v1456 = vmul.f32 %v1451, %v1455
        %v1457 = vpack.c.bf16 %v1456, %v1456
        %1458 = vrot.lane.b32.xlu0 %v915, 104
        %v1459 = vpop.permute.xlu0 %1458
        %v1461 = vsel %vm923, %v1457, 0
        %v1464 = vsel %vm986, %v1459, 0
        %1466 = vmatprep.subr.bf16.mxu0 0
        %1467 = vmatpush1.bf16.msra.mxu0 0
        %1468 = vmatprep.subr.bf16.mxu0 0
        %1469 = vmatpush1.bf16.msra.mxu0 0
        %1470 = vmatprep.subr.bf16.mxu0 0
        %1471 = vmatpush1.bf16.msra.mxu0 0
        %1472 = vmatprep.subr.bf16.mxu0 0
        %1473 = vmatpush1.bf16.msra.mxu0 0
        %1474 = vmatprep.subr.bf16.mxu0 0
        %1475 = vmatpush1.bf16.msra.mxu0 0
        %1476 = vmatprep.subr.bf16.mxu0 0
        %1477 = vmatpush1.bf16.msra.mxu0 0
        %1478 = vmatprep.subr.bf16.mxu0 0
        %1479 = vmatpush1.bf16.msra.mxu0 0
        %1480 = vmatprep.subr.bf16.mxu0 0
        %1481 = vmatpush1.bf16.msra.mxu0 %v1464
        %1482 = vmatprep.subr.bf16.mxu0 0
        %1483 = vmatpush2.bf16.msra.mxu0 0
        %1484 = vmatprep.subr.bf16.mxu0 0
        %1485 = vmatpush2.bf16.msra.mxu0 0
        %1486 = vmatprep.subr.bf16.mxu0 0
        %1487 = vmatpush2.bf16.msra.mxu0 0
        %1488 = vmatprep.subr.bf16.mxu0 0
        %1489 = vmatpush2.bf16.msra.mxu0 0
        %1490 = vmatprep.subr.bf16.mxu0 0
        %1491 = vmatpush2.bf16.msra.mxu0 0
        %1492 = vmatprep.subr.bf16.mxu0 0
        %1493 = vmatpush2.bf16.msra.mxu0 0
        %1494 = vmatprep.subr.bf16.mxu0 0
        %1495 = vmatpush2.bf16.msra.mxu0 0
        %1496 = vmatprep.subr.bf16.mxu0 0
        %1497 = vmatpush2.bf16.msra.mxu0 0
        %1498 = vmatprep.mubr.bf16.mxu0 0
        %1499 = vmatmul.mubr.bf16.gmra.mxu0 %v1461
        %v1500 = vpop.f32.mrf.mxu0
        %v1501 = vadd.f32 0.0, %v1500
        %v1502 = vpop.f32.mrf.mxu0
        %v1503 = vpop.f32.mrf.mxu0
        %v1504 = vpop.f32.mrf.mxu0
        %1505 = vdwg.mxu0
        %v1506 = vpack.c.bf16 %v1501, %v1501
        %v1508 = vsel %vm923, %v1506, 0
        %v1511 = vsel %vm986, %v919, 0
        %1513 = vmatprep.subr.bf16.mxu0 0
        %1514 = vmatpush1.bf16.msra.mxu0 0
        %1515 = vmatprep.subr.bf16.mxu0 0
        %1516 = vmatpush1.bf16.msra.mxu0 0
        %1517 = vmatprep.subr.bf16.mxu0 0
        %1518 = vmatpush1.bf16.msra.mxu0 0
        %1519 = vmatprep.subr.bf16.mxu0 0
        %1520 = vmatpush1.bf16.msra.mxu0 0
        %1521 = vmatprep.subr.bf16.mxu0 0
        %1522 = vmatpush1.bf16.msra.mxu0 0
        %1523 = vmatprep.subr.bf16.mxu0 0
        %1524 = vmatpush1.bf16.msra.mxu0 0
        %1525 = vmatprep.subr.bf16.mxu0 0
        %1526 = vmatpush1.bf16.msra.mxu0 0
        %1527 = vmatprep.subr.bf16.mxu0 0
        %1528 = vmatpush1.bf16.msra.mxu0 %v1511
        %1529 = vmatprep.subr.bf16.mxu0 0
        %1530 = vmatpush2.bf16.msra.mxu0 0
        %1531 = vmatprep.subr.bf16.mxu0 0
        %1532 = vmatpush2.bf16.msra.mxu0 0
        %1533 = vmatprep.subr.bf16.mxu0 0
        %1534 = vmatpush2.bf16.msra.mxu0 0
        %1535 = vmatprep.subr.bf16.mxu0 0
        %1536 = vmatpush2.bf16.msra.mxu0 0
        %1537 = vmatprep.subr.bf16.mxu0 0
        %1538 = vmatpush2.bf16.msra.mxu0 0
        %1539 = vmatprep.subr.bf16.mxu0 0
        %1540 = vmatpush2.bf16.msra.mxu0 0
        %1541 = vmatprep.subr.bf16.mxu0 0
        %1542 = vmatpush2.bf16.msra.mxu0 0
        %1543 = vmatprep.subr.bf16.mxu0 0
        %1544 = vmatpush2.bf16.msra.mxu0 0
        %1545 = vmatprep.mubr.bf16.mxu0 0
        %1546 = vmatmul.mubr.bf16.gmra.mxu0 %v1508
        %v1547 = vpop.f32.mrf.mxu0
        %v1548 = vadd.f32 0.0, %v1547
        %v1549 = vpop.f32.mrf.mxu0
        %v1550 = vpop.f32.mrf.mxu0
        %v1551 = vpop.f32.mrf.mxu0
        %1552 = vdwg.mxu0
        %v1553 = vadd.f32 %v1394, %v1548
        %v1554 = vrot.slane %v914, 4
        %1555 = vrot.lane.b32.xlu0 %v1554, 96
        %v1556 = vpop.permute.xlu0 %1555
        %v1558 = vsel %vm923, %v1554, 0
        %v1561 = vsel %vm923, %v1556, 0
        %1563 = vmatprep.subr.bf16.mxu0 0
        %1564 = vmatpush1.bf16.xpose.msra.mxu0 0
        %1565 = vmatprep.subr.bf16.mxu0 0
        %1566 = vmatpush1.bf16.xpose.msra.mxu0 0
        %1567 = vmatprep.subr.bf16.mxu0 0
        %1568 = vmatpush1.bf16.xpose.msra.mxu0 0
        %1569 = vmatprep.subr.bf16.mxu0 0
        %1570 = vmatpush1.bf16.xpose.msra.mxu0 0
        %1571 = vmatprep.subr.bf16.mxu0 0
        %1572 = vmatpush1.bf16.xpose.msra.mxu0 0
        %1573 = vmatprep.subr.bf16.mxu0 0
        %1574 = vmatpush1.bf16.xpose.msra.mxu0 0
        %1575 = vmatprep.subr.bf16.mxu0 0
        %1576 = vmatpush1.bf16.xpose.msra.mxu0 0
        %1577 = vmatprep.subr.bf16.mxu0 0
        %1578 = vmatpush1.bf16.xpose.msra.mxu0 %v1561
        %1579 = vmatprep.subr.bf16.mxu0 0
        %1580 = vmatpush2.bf16.xpose.msra.mxu0 0
        %1581 = vmatprep.subr.bf16.mxu0 0
        %1582 = vmatpush2.bf16.xpose.msra.mxu0 0
        %1583 = vmatprep.subr.bf16.mxu0 0
        %1584 = vmatpush2.bf16.xpose.msra.mxu0 0
        %1585 = vmatprep.subr.bf16.mxu0 0
        %1586 = vmatpush2.bf16.xpose.msra.mxu0 0
        %1587 = vmatprep.subr.bf16.mxu0 0
        %1588 = vmatpush2.bf16.xpose.msra.mxu0 0
        %1589 = vmatprep.subr.bf16.mxu0 0
        %1590 = vmatpush2.bf16.xpose.msra.mxu0 0
        %1591 = vmatprep.subr.bf16.mxu0 0
        %1592 = vmatpush2.bf16.xpose.msra.mxu0 0
        %1593 = vmatprep.subr.bf16.mxu0 0
        %1594 = vmatpush2.bf16.xpose.msra.mxu0 0
        %1595 = vmatprep.mubr.bf16.mxu0 0
        %1596 = vmatmul.mubr.bf16.gmra.mxu0 %v1558
        %v1597 = vpop.f32.mrf.mxu0
        %v1598 = vadd.f32 0.0, %v1597
        %v1599 = vpop.f32.mrf.mxu0
        %v1600 = vpop.f32.mrf.mxu0
        %v1601 = vpop.f32.mrf.mxu0
        %1602 = vdwg.mxu0
        %v1603 = vmul.f32 %v1598, 0.35355338
        %v1604 = vsel %vm923, %v1603, -inf
        %1605 = vmax.xlane.f32.xlu0 %v1604
        %v1606 = vpop.xlane.xlu0 %1605
        %v1607 = vsub.f32 %v1603, %v1606
        %v1608 = vmul.f32 %v1607, 1.442695
        %v1609 = vpow.pop %v1608
        %v1610 = vsel %vm923, %v1609, 0.0
        %1611 = vadd.xlane.f32.xlu0 %v1610
        %v1612 = vpop.xlane.xlu0 %1611
        %v1613 = vrcp.pop %v1612
        %v1614 = vmul.f32 %v1609, %v1613
        %v1615 = vpack.c.bf16 %v1614, %v1614
        %v1616 = vrot.slane %v915, 4
        %v1618 = vsel %vm923, %v1615, 0
        %v1621 = vsel %vm986, %v1616, 0
        %1623 = vmatprep.subr.bf16.mxu0 0
        %1624 = vmatpush1.bf16.msra.mxu0 0
        %1625 = vmatprep.subr.bf16.mxu0 0
        %1626 = vmatpush1.bf16.msra.mxu0 0
        %1627 = vmatprep.subr.bf16.mxu0 0
        %1628 = vmatpush1.bf16.msra.mxu0 0
        %1629 = vmatprep.subr.bf16.mxu0 0
        %1630 = vmatpush1.bf16.msra.mxu0 0
        %1631 = vmatprep.subr.bf16.mxu0 0
        %1632 = vmatpush1.bf16.msra.mxu0 0
        %1633 = vmatprep.subr.bf16.mxu0 0
        %1634 = vmatpush1.bf16.msra.mxu0 0
        %1635 = vmatprep.subr.bf16.mxu0 0
        %1636 = vmatpush1.bf16.msra.mxu0 0
        %1637 = vmatprep.subr.bf16.mxu0 0
        %1638 = vmatpush1.bf16.msra.mxu0 %v1621
        %1639 = vmatprep.subr.bf16.mxu0 0
        %1640 = vmatpush2.bf16.msra.mxu0 0
        %1641 = vmatprep.subr.bf16.mxu0 0
        %1642 = vmatpush2.bf16.msra.mxu0 0
        %1643 = vmatprep.subr.bf16.mxu0 0
        %1644 = vmatpush2.bf16.msra.mxu0 0
        %1645 = vmatprep.subr.bf16.mxu0 0
        %1646 = vmatpush2.bf16.msra.mxu0 0
        %1647 = vmatprep.subr.bf16.mxu0 0
        %1648 = vmatpush2.bf16.msra.mxu0 0
        %1649 = vmatprep.subr.bf16.mxu0 0
        %1650 = vmatpush2.bf16.msra.mxu0 0
        %1651 = vmatprep.subr.bf16.mxu0 0
        %1652 = vmatpush2.bf16.msra.mxu0 0
        %1653 = vmatprep.subr.bf16.mxu0 0
        %1654 = vmatpush2.bf16.msra.mxu0 0
        %1655 = vmatprep.mubr.bf16.mxu0 0
        %1656 = vmatmul.mubr.bf16.gmra.mxu0 %v1618
        %v1657 = vpop.f32.mrf.mxu0
        %v1658 = vadd.f32 0.0, %v1657
        %v1659 = vpop.f32.mrf.mxu0
        %v1660 = vpop.f32.mrf.mxu0
        %v1661 = vpop.f32.mrf.mxu0
        %1662 = vdwg.mxu0
        %v1663 = vpack.c.bf16 %v1658, %v1658
        %1664 = vrot.lane.b32.xlu0 %v1554, 120
        %v1665 = vpop.permute.xlu0 %1664
        %1666 = vrot.lane.b32.xlu0 %v1554, 88
        %v1667 = vpop.permute.xlu0 %1666
        %v1669 = vsel %vm923, %v1665, 0
        %v1672 = vsel %vm923, %v1667, 0
        %1674 = vmatprep.subr.bf16.mxu0 0
        %1675 = vmatpush1.bf16.xpose.msra.mxu0 0
        %1676 = vmatprep.subr.bf16.mxu0 0
        %1677 = vmatpush1.bf16.xpose.msra.mxu0 0
        %1678 = vmatprep.subr.bf16.mxu0 0
        %1679 = vmatpush1.bf16.xpose.msra.mxu0 0
        %1680 = vmatprep.subr.bf16.mxu0 0
        %1681 = vmatpush1.bf16.xpose.msra.mxu0 0
        %1682 = vmatprep.subr.bf16.mxu0 0
        %1683 = vmatpush1.bf16.xpose.msra.mxu0 0
        %1684 = vmatprep.subr.bf16.mxu0 0
        %1685 = vmatpush1.bf16.xpose.msra.mxu0 0
        %1686 = vmatprep.subr.bf16.mxu0 0
        %1687 = vmatpush1.bf16.xpose.msra.mxu0 0
        %1688 = vmatprep.subr.bf16.mxu0 0
        %1689 = vmatpush1.bf16.xpose.msra.mxu0 %v1672
        %1690 = vmatprep.subr.bf16.mxu0 0
        %1691 = vmatpush2.bf16.xpose.msra.mxu0 0
        %1692 = vmatprep.subr.bf16.mxu0 0
        %1693 = vmatpush2.bf16.xpose.msra.mxu0 0
        %1694 = vmatprep.subr.bf16.mxu0 0
        %1695 = vmatpush2.bf16.xpose.msra.mxu0 0
        %1696 = vmatprep.subr.bf16.mxu0 0
        %1697 = vmatpush2.bf16.xpose.msra.mxu0 0
        %1698 = vmatprep.subr.bf16.mxu0 0
        %1699 = vmatpush2.bf16.xpose.msra.mxu0 0
        %1700 = vmatprep.subr.bf16.mxu0 0
        %1701 = vmatpush2.bf16.xpose.msra.mxu0 0
        %1702 = vmatprep.subr.bf16.mxu0 0
        %1703 = vmatpush2.bf16.xpose.msra.mxu0 0
        %1704 = vmatprep.subr.bf16.mxu0 0
        %1705 = vmatpush2.bf16.xpose.msra.mxu0 0
        %1706 = vmatprep.mubr.bf16.mxu0 0
        %1707 = vmatmul.mubr.bf16.gmra.mxu0 %v1669
        %v1708 = vpop.f32.mrf.mxu0
        %v1709 = vadd.f32 0.0, %v1708
        %v1710 = vpop.f32.mrf.mxu0
        %v1711 = vpop.f32.mrf.mxu0
        %v1712 = vpop.f32.mrf.mxu0
        %1713 = vdwg.mxu0
        %v1714 = vmul.f32 %v1709, 0.35355338
        %v1715 = vsel %vm923, %v1714, -inf
        %1716 = vmax.xlane.f32.xlu0 %v1715
        %v1717 = vpop.xlane.xlu0 %1716
        %v1718 = vsub.f32 %v1714, %v1717
        %v1719 = vmul.f32 %v1718, 1.442695
        %v1720 = vpow.pop %v1719
        %v1721 = vsel %vm923, %v1720, 0.0
        %1722 = vadd.xlane.f32.xlu0 %v1721
        %v1723 = vpop.xlane.xlu0 %1722
        %v1724 = vrcp.pop %v1723
        %v1725 = vmul.f32 %v1720, %v1724
        %v1726 = vpack.c.bf16 %v1725, %v1725
        %1727 = vrot.lane.b32.xlu0 %v1616, 120
        %v1728 = vpop.permute.xlu0 %1727
        %v1730 = vsel %vm923, %v1726, 0
        %v1733 = vsel %vm986, %v1728, 0
        %1735 = vmatprep.subr.bf16.mxu0 0
        %1736 = vmatpush1.bf16.msra.mxu0 0
        %1737 = vmatprep.subr.bf16.mxu0 0
        %1738 = vmatpush1.bf16.msra.mxu0 0
        %1739 = vmatprep.subr.bf16.mxu0 0
        %1740 = vmatpush1.bf16.msra.mxu0 0
        %1741 = vmatprep.subr.bf16.mxu0 0
        %1742 = vmatpush1.bf16.msra.mxu0 0
        %1743 = vmatprep.subr.bf16.mxu0 0
        %1744 = vmatpush1.bf16.msra.mxu0 0
        %1745 = vmatprep.subr.bf16.mxu0 0
        %1746 = vmatpush1.bf16.msra.mxu0 0
        %1747 = vmatprep.subr.bf16.mxu0 0
        %1748 = vmatpush1.bf16.msra.mxu0 0
        %1749 = vmatprep.subr.bf16.mxu0 0
        %1750 = vmatpush1.bf16.msra.mxu0 %v1733
        %1751 = vmatprep.subr.bf16.mxu0 0
        %1752 = vmatpush2.bf16.msra.mxu0 0
        %1753 = vmatprep.subr.bf16.mxu0 0
        %1754 = vmatpush2.bf16.msra.mxu0 0
        %1755 = vmatprep.subr.bf16.mxu0 0
        %1756 = vmatpush2.bf16.msra.mxu0 0
        %1757 = vmatprep.subr.bf16.mxu0 0
        %1758 = vmatpush2.bf16.msra.mxu0 0
        %1759 = vmatprep.subr.bf16.mxu0 0
        %1760 = vmatpush2.bf16.msra.mxu0 0
        %1761 = vmatprep.subr.bf16.mxu0 0
        %1762 = vmatpush2.bf16.msra.mxu0 0
        %1763 = vmatprep.subr.bf16.mxu0 0
        %1764 = vmatpush2.bf16.msra.mxu0 0
        %1765 = vmatprep.subr.bf16.mxu0 0
        %1766 = vmatpush2.bf16.msra.mxu0 0
        %1767 = vmatprep.mubr.bf16.mxu0 0
        %1768 = vmatmul.mubr.bf16.gmra.mxu0 %v1730
        %v1769 = vpop.f32.mrf.mxu0
        %v1770 = vadd.f32 0.0, %v1769
        %v1771 = vpop.f32.mrf.mxu0
        %v1772 = vpop.f32.mrf.mxu0
        %v1773 = vpop.f32.mrf.mxu0
        %1774 = vdwg.mxu0
        %v1775 = vpack.c.bf16 %v1770, %v1770
        %v1777 = vsel %vm923, %v1775, 0
        %1779 = vmatprep.subr.bf16.mxu0 0
        %1780 = vmatpush1.bf16.msra.mxu0 0
        %1781 = vmatprep.subr.bf16.mxu0 0
        %1782 = vmatpush1.bf16.msra.mxu0 0
        %1783 = vmatprep.subr.bf16.mxu0 0
        %1784 = vmatpush1.bf16.msra.mxu0 0
        %1785 = vmatprep.subr.bf16.mxu0 0
        %1786 = vmatpush1.bf16.msra.mxu0 0
        %1787 = vmatprep.subr.bf16.mxu0 0
        %1788 = vmatpush1.bf16.msra.mxu0 0
        %1789 = vmatprep.subr.bf16.mxu0 0
        %1790 = vmatpush1.bf16.msra.mxu0 0
        %1791 = vmatprep.subr.bf16.mxu0 0
        %1792 = vmatpush1.bf16.msra.mxu0 0
        %1793 = vmatprep.subr.bf16.mxu0 0
        %1794 = vmatpush1.bf16.msra.mxu0 %v1148
        %1795 = vmatprep.subr.bf16.mxu0 0
        %1796 = vmatpush2.bf16.msra.mxu0 0
        %1797 = vmatprep.subr.bf16.mxu0 0
        %1798 = vmatpush2.bf16.msra.mxu0 0
        %1799 = vmatprep.subr.bf16.mxu0 0
        %1800 = vmatpush2.bf16.msra.mxu0 0
        %1801 = vmatprep.subr.bf16.mxu0 0
        %1802 = vmatpush2.bf16.msra.mxu0 0
        %1803 = vmatprep.subr.bf16.mxu0 0
        %1804 = vmatpush2.bf16.msra.mxu0 0
        %1805 = vmatprep.subr.bf16.mxu0 0
        %1806 = vmatpush2.bf16.msra.mxu0 0
        %1807 = vmatprep.subr.bf16.mxu0 0
        %1808 = vmatpush2.bf16.msra.mxu0 0
        %1809 = vmatprep.subr.bf16.mxu0 0
        %1810 = vmatpush2.bf16.msra.mxu0 0
        %1811 = vmatprep.mubr.bf16.mxu0 0
        %1812 = vmatmul.mubr.bf16.gmra.mxu0 %v1777
        %v1813 = vpop.f32.mrf.mxu0
        %v1814 = vadd.f32 0.0, %v1813
        %v1815 = vpop.f32.mrf.mxu0
        %v1816 = vpop.f32.mrf.mxu0
        %v1817 = vpop.f32.mrf.mxu0
        %1818 = vdwg.mxu0
        %v1820 = vsel %vm923, %v1663, 0
        %1822 = vmatprep.subr.bf16.mxu0 0
        %1823 = vmatpush1.bf16.msra.mxu0 0
        %1824 = vmatprep.subr.bf16.mxu0 0
        %1825 = vmatpush1.bf16.msra.mxu0 0
        %1826 = vmatprep.subr.bf16.mxu0 0
        %1827 = vmatpush1.bf16.msra.mxu0 0
        %1828 = vmatprep.subr.bf16.mxu0 0
        %1829 = vmatpush1.bf16.msra.mxu0 0
        %1830 = vmatprep.subr.bf16.mxu0 0
        %1831 = vmatpush1.bf16.msra.mxu0 0
        %1832 = vmatprep.subr.bf16.mxu0 0
        %1833 = vmatpush1.bf16.msra.mxu0 0
        %1834 = vmatprep.subr.bf16.mxu0 0
        %1835 = vmatpush1.bf16.msra.mxu0 0
        %1836 = vmatprep.subr.bf16.mxu0 0
        %1837 = vmatpush1.bf16.msra.mxu0 %v1194
        %1838 = vmatprep.subr.bf16.mxu0 0
        %1839 = vmatpush2.bf16.msra.mxu0 0
        %1840 = vmatprep.subr.bf16.mxu0 0
        %1841 = vmatpush2.bf16.msra.mxu0 0
        %1842 = vmatprep.subr.bf16.mxu0 0
        %1843 = vmatpush2.bf16.msra.mxu0 0
        %1844 = vmatprep.subr.bf16.mxu0 0
        %1845 = vmatpush2.bf16.msra.mxu0 0
        %1846 = vmatprep.subr.bf16.mxu0 0
        %1847 = vmatpush2.bf16.msra.mxu0 0
        %1848 = vmatprep.subr.bf16.mxu0 0
        %1849 = vmatpush2.bf16.msra.mxu0 0
        %1850 = vmatprep.subr.bf16.mxu0 0
        %1851 = vmatpush2.bf16.msra.mxu0 0
        %1852 = vmatprep.subr.bf16.mxu0 0
        %1853 = vmatpush2.bf16.msra.mxu0 0
        %1854 = vmatprep.mubr.bf16.mxu0 0
        %1855 = vmatmul.mubr.bf16.gmra.mxu0 %v1820
        %v1856 = vpop.f32.mrf.mxu0
        %v1857 = vadd.f32 %v1814, %v1856
        %v1858 = vpop.f32.mrf.mxu0
        %v1859 = vpop.f32.mrf.mxu0
        %v1860 = vpop.f32.mrf.mxu0
        %1861 = vdwg.mxu0
        %1862 = vrot.lane.b32.xlu0 %v1554, 112
        %v1863 = vpop.permute.xlu0 %1862
        %1864 = vrot.lane.b32.xlu0 %v1554, 80
        %v1865 = vpop.permute.xlu0 %1864
        %v1867 = vsel %vm923, %v1863, 0
        %v1870 = vsel %vm923, %v1865, 0
        %1872 = vmatprep.subr.bf16.mxu0 0
        %1873 = vmatpush1.bf16.xpose.msra.mxu0 0
        %1874 = vmatprep.subr.bf16.mxu0 0
        %1875 = vmatpush1.bf16.xpose.msra.mxu0 0
        %1876 = vmatprep.subr.bf16.mxu0 0
        %1877 = vmatpush1.bf16.xpose.msra.mxu0 0
        %1878 = vmatprep.subr.bf16.mxu0 0
        %1879 = vmatpush1.bf16.xpose.msra.mxu0 0
        %1880 = vmatprep.subr.bf16.mxu0 0
        %1881 = vmatpush1.bf16.xpose.msra.mxu0 0
        %1882 = vmatprep.subr.bf16.mxu0 0
        %1883 = vmatpush1.bf16.xpose.msra.mxu0 0
        %1884 = vmatprep.subr.bf16.mxu0 0
        %1885 = vmatpush1.bf16.xpose.msra.mxu0 0
        %1886 = vmatprep.subr.bf16.mxu0 0
        %1887 = vmatpush1.bf16.xpose.msra.mxu0 %v1870
        %1888 = vmatprep.subr.bf16.mxu0 0
        %1889 = vmatpush2.bf16.xpose.msra.mxu0 0
        %1890 = vmatprep.subr.bf16.mxu0 0
        %1891 = vmatpush2.bf16.xpose.msra.mxu0 0
        %1892 = vmatprep.subr.bf16.mxu0 0
        %1893 = vmatpush2.bf16.xpose.msra.mxu0 0
        %1894 = vmatprep.subr.bf16.mxu0 0
        %1895 = vmatpush2.bf16.xpose.msra.mxu0 0
        %1896 = vmatprep.subr.bf16.mxu0 0
        %1897 = vmatpush2.bf16.xpose.msra.mxu0 0
        %1898 = vmatprep.subr.bf16.mxu0 0
        %1899 = vmatpush2.bf16.xpose.msra.mxu0 0
        %1900 = vmatprep.subr.bf16.mxu0 0
        %1901 = vmatpush2.bf16.xpose.msra.mxu0 0
        %1902 = vmatprep.subr.bf16.mxu0 0
        %1903 = vmatpush2.bf16.xpose.msra.mxu0 0
        %1904 = vmatprep.mubr.bf16.mxu0 0
        %1905 = vmatmul.mubr.bf16.gmra.mxu0 %v1867
        %v1906 = vpop.f32.mrf.mxu0
        %v1907 = vadd.f32 0.0, %v1906
        %v1908 = vpop.f32.mrf.mxu0
        %v1909 = vpop.f32.mrf.mxu0
        %v1910 = vpop.f32.mrf.mxu0
        %1911 = vdwg.mxu0
        %v1912 = vmul.f32 %v1907, 0.35355338
        %v1913 = vsel %vm923, %v1912, -inf
        %1914 = vmax.xlane.f32.xlu0 %v1913
        %v1915 = vpop.xlane.xlu0 %1914
        %v1916 = vsub.f32 %v1912, %v1915
        %v1917 = vmul.f32 %v1916, 1.442695
        %v1918 = vpow.pop %v1917
        %v1919 = vsel %vm923, %v1918, 0.0
        %1920 = vadd.xlane.f32.xlu0 %v1919
        %v1921 = vpop.xlane.xlu0 %1920
        %v1922 = vrcp.pop %v1921
        %v1923 = vmul.f32 %v1918, %v1922
        %v1924 = vpack.c.bf16 %v1923, %v1923
        %1925 = vrot.lane.b32.xlu0 %v1616, 112
        %v1926 = vpop.permute.xlu0 %1925
        %v1928 = vsel %vm923, %v1924, 0
        %v1931 = vsel %vm986, %v1926, 0
        %1933 = vmatprep.subr.bf16.mxu0 0
        %1934 = vmatpush1.bf16.msra.mxu0 0
        %1935 = vmatprep.subr.bf16.mxu0 0
        %1936 = vmatpush1.bf16.msra.mxu0 0
        %1937 = vmatprep.subr.bf16.mxu0 0
        %1938 = vmatpush1.bf16.msra.mxu0 0
        %1939 = vmatprep.subr.bf16.mxu0 0
        %1940 = vmatpush1.bf16.msra.mxu0 0
        %1941 = vmatprep.subr.bf16.mxu0 0
        %1942 = vmatpush1.bf16.msra.mxu0 0
        %1943 = vmatprep.subr.bf16.mxu0 0
        %1944 = vmatpush1.bf16.msra.mxu0 0
        %1945 = vmatprep.subr.bf16.mxu0 0
        %1946 = vmatpush1.bf16.msra.mxu0 0
        %1947 = vmatprep.subr.bf16.mxu0 0
        %1948 = vmatpush1.bf16.msra.mxu0 %v1931
        %1949 = vmatprep.subr.bf16.mxu0 0
        %1950 = vmatpush2.bf16.msra.mxu0 0
        %1951 = vmatprep.subr.bf16.mxu0 0
        %1952 = vmatpush2.bf16.msra.mxu0 0
        %1953 = vmatprep.subr.bf16.mxu0 0
        %1954 = vmatpush2.bf16.msra.mxu0 0
        %1955 = vmatprep.subr.bf16.mxu0 0
        %1956 = vmatpush2.bf16.msra.mxu0 0
        %1957 = vmatprep.subr.bf16.mxu0 0
        %1958 = vmatpush2.bf16.msra.mxu0 0
        %1959 = vmatprep.subr.bf16.mxu0 0
        %1960 = vmatpush2.bf16.msra.mxu0 0
        %1961 = vmatprep.subr.bf16.mxu0 0
        %1962 = vmatpush2.bf16.msra.mxu0 0
        %1963 = vmatprep.subr.bf16.mxu0 0
        %1964 = vmatpush2.bf16.msra.mxu0 0
        %1965 = vmatprep.mubr.bf16.mxu0 0
        %1966 = vmatmul.mubr.bf16.gmra.mxu0 %v1928
        %v1967 = vpop.f32.mrf.mxu0
        %v1968 = vadd.f32 0.0, %v1967
        %v1969 = vpop.f32.mrf.mxu0
        %v1970 = vpop.f32.mrf.mxu0
        %v1971 = vpop.f32.mrf.mxu0
        %1972 = vdwg.mxu0
        %v1973 = vpack.c.bf16 %v1968, %v1968
        %v1975 = vsel %vm923, %v1973, 0
        %1977 = vmatprep.subr.bf16.mxu0 0
        %1978 = vmatpush1.bf16.msra.mxu0 0
        %1979 = vmatprep.subr.bf16.mxu0 0
        %1980 = vmatpush1.bf16.msra.mxu0 0
        %1981 = vmatprep.subr.bf16.mxu0 0
        %1982 = vmatpush1.bf16.msra.mxu0 0
        %1983 = vmatprep.subr.bf16.mxu0 0
        %1984 = vmatpush1.bf16.msra.mxu0 0
        %1985 = vmatprep.subr.bf16.mxu0 0
        %1986 = vmatpush1.bf16.msra.mxu0 0
        %1987 = vmatprep.subr.bf16.mxu0 0
        %1988 = vmatpush1.bf16.msra.mxu0 0
        %1989 = vmatprep.subr.bf16.mxu0 0
        %1990 = vmatpush1.bf16.msra.mxu0 0
        %1991 = vmatprep.subr.bf16.mxu0 0
        %1992 = vmatpush1.bf16.msra.mxu0 %v1352
        %1993 = vmatprep.subr.bf16.mxu0 0
        %1994 = vmatpush2.bf16.msra.mxu0 0
        %1995 = vmatprep.subr.bf16.mxu0 0
        %1996 = vmatpush2.bf16.msra.mxu0 0
        %1997 = vmatprep.subr.bf16.mxu0 0
        %1998 = vmatpush2.bf16.msra.mxu0 0
        %1999 = vmatprep.subr.bf16.mxu0 0
        %2000 = vmatpush2.bf16.msra.mxu0 0
        %2001 = vmatprep.subr.bf16.mxu0 0
        %2002 = vmatpush2.bf16.msra.mxu0 0
        %2003 = vmatprep.subr.bf16.mxu0 0
        %2004 = vmatpush2.bf16.msra.mxu0 0
        %2005 = vmatprep.subr.bf16.mxu0 0
        %2006 = vmatpush2.bf16.msra.mxu0 0
        %2007 = vmatprep.subr.bf16.mxu0 0
        %2008 = vmatpush2.bf16.msra.mxu0 0
        %2009 = vmatprep.mubr.bf16.mxu0 0
        %2010 = vmatmul.mubr.bf16.gmra.mxu0 %v1975
        %v2011 = vpop.f32.mrf.mxu0
        %v2012 = vadd.f32 0.0, %v2011
        %v2013 = vpop.f32.mrf.mxu0
        %v2014 = vpop.f32.mrf.mxu0
        %v2015 = vpop.f32.mrf.mxu0
        %2016 = vdwg.mxu0
        %v2017 = vadd.f32 %v1857, %v2012
        %2018 = vrot.lane.b32.xlu0 %v1554, 104
        %v2019 = vpop.permute.xlu0 %2018
        %2020 = vrot.lane.b32.xlu0 %v1554, 72
        %v2021 = vpop.permute.xlu0 %2020
        %v2023 = vsel %vm923, %v2019, 0
        %v2026 = vsel %vm923, %v2021, 0
        %2028 = vmatprep.subr.bf16.mxu0 0
        %2029 = vmatpush1.bf16.xpose.msra.mxu0 0
        %2030 = vmatprep.subr.bf16.mxu0 0
        %2031 = vmatpush1.bf16.xpose.msra.mxu0 0
        %2032 = vmatprep.subr.bf16.mxu0 0
        %2033 = vmatpush1.bf16.xpose.msra.mxu0 0
        %2034 = vmatprep.subr.bf16.mxu0 0
        %2035 = vmatpush1.bf16.xpose.msra.mxu0 0
        %2036 = vmatprep.subr.bf16.mxu0 0
        %2037 = vmatpush1.bf16.xpose.msra.mxu0 0
        %2038 = vmatprep.subr.bf16.mxu0 0
        %2039 = vmatpush1.bf16.xpose.msra.mxu0 0
        %2040 = vmatprep.subr.bf16.mxu0 0
        %2041 = vmatpush1.bf16.xpose.msra.mxu0 0
        %2042 = vmatprep.subr.bf16.mxu0 0
        %2043 = vmatpush1.bf16.xpose.msra.mxu0 %v2026
        %2044 = vmatprep.subr.bf16.mxu0 0
        %2045 = vmatpush2.bf16.xpose.msra.mxu0 0
        %2046 = vmatprep.subr.bf16.mxu0 0
        %2047 = vmatpush2.bf16.xpose.msra.mxu0 0
        %2048 = vmatprep.subr.bf16.mxu0 0
        %2049 = vmatpush2.bf16.xpose.msra.mxu0 0
        %2050 = vmatprep.subr.bf16.mxu0 0
        %2051 = vmatpush2.bf16.xpose.msra.mxu0 0
        %2052 = vmatprep.subr.bf16.mxu0 0
        %2053 = vmatpush2.bf16.xpose.msra.mxu0 0
        %2054 = vmatprep.subr.bf16.mxu0 0
        %2055 = vmatpush2.bf16.xpose.msra.mxu0 0
        %2056 = vmatprep.subr.bf16.mxu0 0
        %2057 = vmatpush2.bf16.xpose.msra.mxu0 0
        %2058 = vmatprep.subr.bf16.mxu0 0
        %2059 = vmatpush2.bf16.xpose.msra.mxu0 0
        %2060 = vmatprep.mubr.bf16.mxu0 0
        %2061 = vmatmul.mubr.bf16.gmra.mxu0 %v2023
        %v2062 = vpop.f32.mrf.mxu0
        %v2063 = vadd.f32 0.0, %v2062
        %v2064 = vpop.f32.mrf.mxu0
        %v2065 = vpop.f32.mrf.mxu0
        %v2066 = vpop.f32.mrf.mxu0
        %2067 = vdwg.mxu0
        %v2068 = vmul.f32 %v2063, 0.35355338
        %v2069 = vsel %vm923, %v2068, -inf
        %2070 = vmax.xlane.f32.xlu0 %v2069
        %v2071 = vpop.xlane.xlu0 %2070
        %v2072 = vsub.f32 %v2068, %v2071
        %v2073 = vmul.f32 %v2072, 1.442695
        %v2074 = vpow.pop %v2073
        %v2075 = vsel %vm923, %v2074, 0.0
        %2076 = vadd.xlane.f32.xlu0 %v2075
        %v2077 = vpop.xlane.xlu0 %2076
        %v2078 = vrcp.pop %v2077
        %v2079 = vmul.f32 %v2074, %v2078
        %v2080 = vpack.c.bf16 %v2079, %v2079
        %2081 = vrot.lane.b32.xlu0 %v1616, 104
        %v2082 = vpop.permute.xlu0 %2081
        %v2084 = vsel %vm923, %v2080, 0
        %v2087 = vsel %vm986, %v2082, 0
        %2089 = vmatprep.subr.bf16.mxu0 0
        %2090 = vmatpush1.bf16.msra.mxu0 0
        %2091 = vmatprep.subr.bf16.mxu0 0
        %2092 = vmatpush1.bf16.msra.mxu0 0
        %2093 = vmatprep.subr.bf16.mxu0 0
        %2094 = vmatpush1.bf16.msra.mxu0 0
        %2095 = vmatprep.subr.bf16.mxu0 0
        %2096 = vmatpush1.bf16.msra.mxu0 0
        %2097 = vmatprep.subr.bf16.mxu0 0
        %2098 = vmatpush1.bf16.msra.mxu0 0
        %2099 = vmatprep.subr.bf16.mxu0 0
        %2100 = vmatpush1.bf16.msra.mxu0 0
        %2101 = vmatprep.subr.bf16.mxu0 0
        %2102 = vmatpush1.bf16.msra.mxu0 0
        %2103 = vmatprep.subr.bf16.mxu0 0
        %2104 = vmatpush1.bf16.msra.mxu0 %v2087
        %2105 = vmatprep.subr.bf16.mxu0 0
        %2106 = vmatpush2.bf16.msra.mxu0 0
        %2107 = vmatprep.subr.bf16.mxu0 0
        %2108 = vmatpush2.bf16.msra.mxu0 0
        %2109 = vmatprep.subr.bf16.mxu0 0
        %2110 = vmatpush2.bf16.msra.mxu0 0
        %2111 = vmatprep.subr.bf16.mxu0 0
        %2112 = vmatpush2.bf16.msra.mxu0 0
        %2113 = vmatprep.subr.bf16.mxu0 0
        %2114 = vmatpush2.bf16.msra.mxu0 0
        %2115 = vmatprep.subr.bf16.mxu0 0
        %2116 = vmatpush2.bf16.msra.mxu0 0
        %2117 = vmatprep.subr.bf16.mxu0 0
        %2118 = vmatpush2.bf16.msra.mxu0 0
        %2119 = vmatprep.subr.bf16.mxu0 0
        %2120 = vmatpush2.bf16.msra.mxu0 0
        %2121 = vmatprep.mubr.bf16.mxu0 0
        %2122 = vmatmul.mubr.bf16.gmra.mxu0 %v2084
        %v2123 = vpop.f32.mrf.mxu0
        %v2124 = vadd.f32 0.0, %v2123
        %v2125 = vpop.f32.mrf.mxu0
        %v2126 = vpop.f32.mrf.mxu0
        %v2127 = vpop.f32.mrf.mxu0
        %2128 = vdwg.mxu0
        %v2129 = vpack.c.bf16 %v2124, %v2124
        %v2131 = vsel %vm923, %v2129, 0
        %2133 = vmatprep.subr.bf16.mxu0 0
        %2134 = vmatpush1.bf16.msra.mxu0 0
        %2135 = vmatprep.subr.bf16.mxu0 0
        %2136 = vmatpush1.bf16.msra.mxu0 0
        %2137 = vmatprep.subr.bf16.mxu0 0
        %2138 = vmatpush1.bf16.msra.mxu0 0
        %2139 = vmatprep.subr.bf16.mxu0 0
        %2140 = vmatpush1.bf16.msra.mxu0 0
        %2141 = vmatprep.subr.bf16.mxu0 0
        %2142 = vmatpush1.bf16.msra.mxu0 0
        %2143 = vmatprep.subr.bf16.mxu0 0
        %2144 = vmatpush1.bf16.msra.mxu0 0
        %2145 = vmatprep.subr.bf16.mxu0 0
        %2146 = vmatpush1.bf16.msra.mxu0 0
        %2147 = vmatprep.subr.bf16.mxu0 0
        %2148 = vmatpush1.bf16.msra.mxu0 %v1511
        %2149 = vmatprep.subr.bf16.mxu0 0
        %2150 = vmatpush2.bf16.msra.mxu0 0
        %2151 = vmatprep.subr.bf16.mxu0 0
        %2152 = vmatpush2.bf16.msra.mxu0 0
        %2153 = vmatprep.subr.bf16.mxu0 0
        %2154 = vmatpush2.bf16.msra.mxu0 0
        %2155 = vmatprep.subr.bf16.mxu0 0
        %2156 = vmatpush2.bf16.msra.mxu0 0
        %2157 = vmatprep.subr.bf16.mxu0 0
        %2158 = vmatpush2.bf16.msra.mxu0 0
        %2159 = vmatprep.subr.bf16.mxu0 0
        %2160 = vmatpush2.bf16.msra.mxu0 0
        %2161 = vmatprep.subr.bf16.mxu0 0
        %2162 = vmatpush2.bf16.msra.mxu0 0
        %2163 = vmatprep.subr.bf16.mxu0 0
        %2164 = vmatpush2.bf16.msra.mxu0 0
        %2165 = vmatprep.mubr.bf16.mxu0 0
        %2166 = vmatmul.mubr.bf16.gmra.mxu0 %v2131
        %v2167 = vpop.f32.mrf.mxu0
        %v2168 = vadd.f32 0.0, %v2167
        %v2169 = vpop.f32.mrf.mxu0
        %v2170 = vpop.f32.mrf.mxu0
        %v2171 = vpop.f32.mrf.mxu0
        %2172 = vdwg.mxu0
        %v2173 = vadd.f32 %v2017, %v2168
        %v2174 = vadd.f32 %v771, %v1553
        %v2175 = vadd.f32 %v772, %v2173
        %v2176 = vld [vmem:[%s737] sm:$0x1]
        %v2178 = vlaneseq
        %v2179 = vshrl.u32 %v2178, 7
        %v2180 = vsub.s32 0, %v2179
        %v2181 = vrot.slane %v2176, %v2180
        %v2183 = vadd.f32 %v2174, %v2181
        %v2184 = vadd.f32 %v2175, %v2181
        %v2185 = vsel %vm802, %v2183, 0.0
        %2186 = vadd.xlane.f32.xlu0 %v2185
        %v2187 = vpop.xlane.xlu0 %2186
        %v2188 = vsel %vm802, %v2184, 0.0
        %2189 = vadd.xlane.f32.xlu0 %v2188
        %v2190 = vpop.xlane.xlu0 %2189
        %v2191 = vrcp.pop 32.0
        %v2192 = vmul.f32 %v2187, %v2191
        %v2193 = vmul.f32 %v2190, %v2191
        %v2194 = vsub.f32 %v2183, %v2192
        %v2195 = vsub.f32 %v2184, %v2193
        %v2196 = vmul.f32 %v2194, %v2194
        %v2197 = vmul.f32 %v2195, %v2195
        %v2198 = vsel %vm802, %v2196, 0.0
        %2199 = vadd.xlane.f32.xlu0 %v2198
        %v2200 = vpop.xlane.xlu0 %2199
        %v2201 = vsel %vm802, %v2197, 0.0
        %2202 = vadd.xlane.f32.xlu0 %v2201
        %v2203 = vpop.xlane.xlu0 %2202
        %v2204 = vmul.f32 %v2200, %v2191
        %v2205 = vmul.f32 %v2203, %v2191
        %v2206 = vadd.f32 %v2204, 1e-05
        %v2207 = vadd.f32 %v2205, 1e-05
        %v2208 = vrsqrt.pop %v2206
        %v2209 = vrsqrt.pop %v2207
        %v2210 = vmul.f32 %v2194, %v2208
        %v2211 = vmul.f32 %v2195, %v2209
        %v2212 = vld [vmem:[%s740] sm:$0x1]
        %v2214 = vlaneseq
        %v2215 = vshrl.u32 %v2214, 7
        %v2216 = vsub.s32 0, %v2215
        %v2217 = vrot.slane %v2212, %v2216
        %v2219 = vmul.f32 %v2210, %v2217
        %v2220 = vmul.f32 %v2211, %v2217
        %v2221 = vld [vmem:[%s743] sm:$0x1]
        %v2223 = vlaneseq
        %v2224 = vshrl.u32 %v2223, 7
        %v2225 = vsub.s32 0, %v2224
        %v2226 = vrot.slane %v2221, %v2225
        %v2228 = vadd.f32 %v2219, %v2226
        %v2229 = vadd.f32 %v2220, %v2226
        %v2230 = vpack.c.bf16 %v2229, %v2228
        %v2231 = vld [vmem:[%s623] sm:$0xf]
        %v2232 = vld [vmem:[%s623 + $0x4] sm:$0xf]
        %v2233 = vld [vmem:[%s623 + $0x8] sm:$0xf]
        %v2234 = vld [vmem:[%s623 + $0xc] sm:$0xf]
        %v2235 = vld [vmem:[%s746] sm:$0x1]
        %v2237 = vlaneseq
        %v2238 = vshrl.u32 %v2237, 7
        %v2239 = vsub.s32 0, %v2238
        %v2240 = vrot.slane %v2235, %v2239
        %v2246 = vunpack.c.l.b16 %v2231
        %v2247 = vunpack.c.l.b16 %v2232
        %v2248 = vunpack.c.l.b16 %v2233
        %v2249 = vunpack.c.l.b16 %v2234
        %v2250 = vpack.c.b16 %v2247, %v2246
        %v2251 = vpack.c.b16 %v2249, %v2248
        %v2255 = vsel %vm802, %v2230, 0
        %2257 = vmatprep.subr.bf16.mxu0 0
        %2258 = vmatpush1.bf16.msra.mxu0 0
        %2259 = vmatprep.subr.bf16.mxu0 0
        %2260 = vmatpush1.bf16.msra.mxu0 0
        %2261 = vmatprep.subr.bf16.mxu0 0
        %2262 = vmatpush1.bf16.msra.mxu0 0
        %2263 = vmatprep.subr.bf16.mxu0 0
        %2264 = vmatpush1.bf16.msra.mxu0 0
        %2265 = vmatprep.subr.bf16.mxu0 0
        %2266 = vmatpush1.bf16.msra.mxu0 0
        %2267 = vmatprep.subr.bf16.mxu0 0
        %2268 = vmatpush1.bf16.msra.mxu0 0
        %2269 = vmatprep.subr.bf16.mxu0 0
        %2270 = vmatpush1.bf16.msra.mxu0 %v2251
        %2271 = vmatprep.subr.bf16.mxu0 0
        %2272 = vmatpush1.bf16.msra.mxu0 %v2250
        %2273 = vmatprep.subr.bf16.mxu0 0
        %2274 = vmatpush2.bf16.msra.mxu0 0
        %2275 = vmatprep.subr.bf16.mxu0 0
        %2276 = vmatpush2.bf16.msra.mxu0 0
        %2277 = vmatprep.subr.bf16.mxu0 0
        %2278 = vmatpush2.bf16.msra.mxu0 0
        %2279 = vmatprep.subr.bf16.mxu0 0
        %2280 = vmatpush2.bf16.msra.mxu0 0
        %2281 = vmatprep.subr.bf16.mxu0 0
        %2282 = vmatpush2.bf16.msra.mxu0 0
        %2283 = vmatprep.subr.bf16.mxu0 0
        %2284 = vmatpush2.bf16.msra.mxu0 0
        %2285 = vmatprep.subr.bf16.mxu0 0
        %2286 = vmatpush2.bf16.msra.mxu0 0
        %2287 = vmatprep.subr.bf16.mxu0 0
        %2288 = vmatpush2.bf16.msra.mxu0 0
        %2289 = vmatprep.mubr.bf16.mxu0 0
        %2290 = vmatmul.mubr.bf16.gmra.mxu0 %v2255
        %v2291 = vpop.f32.mrf.mxu0
        %v2292 = vadd.f32 %v2240, %v2291
        %v2293 = vpop.f32.mrf.mxu0
        %v2294 = vpop.f32.mrf.mxu0
        %v2295 = vadd.f32 %v2240, %v2294
        %v2296 = vpop.f32.mrf.mxu0
        %2297 = vdwg.mxu0
        %v2298 = vmax.f32 %v2292, 0.0
        %v2299 = vmax.f32 %v2295, 0.0
        %v2300 = vpack.c.bf16 %v2299, %v2298
        %v2301 = vld [vmem:[%s751] sm:$0xf]
        %v2302 = vld [vmem:[%s751 + $0x4] sm:$0xf]
        %v2303 = vld [vmem:[%s751 + $0x8] sm:$0xf]
        %v2304 = vld [vmem:[%s751 + $0xc] sm:$0xf]
        %v2305 = vld [vmem:[%s751 + $0x10] sm:$0xf]
        %v2306 = vld [vmem:[%s751 + $0x14] sm:$0xf]
        %v2307 = vld [vmem:[%s751 + $0x18] sm:$0xf]
        %v2308 = vld [vmem:[%s751 + $0x1c] sm:$0xf]
        %v2309 = vld [vmem:[%s754] sm:$0x1]
        %v2311 = vlaneseq
        %v2312 = vshrl.u32 %v2311, 7
        %v2313 = vsub.s32 0, %v2312
        %v2314 = vrot.slane %v2309, %v2313
        %v2324 = vunpack.c.l.b16 %v2301
        %v2325 = vunpack.c.l.b16 %v2302
        %v2326 = vunpack.c.l.b16 %v2303
        %v2327 = vunpack.c.l.b16 %v2304
        %v2328 = vunpack.c.l.b16 %v2305
        %v2329 = vunpack.c.l.b16 %v2306
        %v2330 = vunpack.c.l.b16 %v2307
        %v2331 = vunpack.c.l.b16 %v2308
        %v2332 = vpack.c.b16 %v2325, %v2324
        %v2333 = vpack.c.b16 %v2327, %v2326
        %v2334 = vpack.c.b16 %v2329, %v2328
        %v2335 = vpack.c.b16 %v2331, %v2330
        %vm2340 = vcmask 523264
        %v2342 = vsel %vm2340, %v2300, 0
        %2344 = vmatprep.subr.bf16.mxu0 0
        %2345 = vmatpush1.bf16.msra.mxu0 0
        %2346 = vmatprep.subr.bf16.mxu0 0
        %2347 = vmatpush1.bf16.msra.mxu0 0
        %2348 = vmatprep.subr.bf16.mxu0 0
        %2349 = vmatpush1.bf16.msra.mxu0 0
        %2350 = vmatprep.subr.bf16.mxu0 0
        %2351 = vmatpush1.bf16.msra.mxu0 0
        %2352 = vmatprep.subr.bf16.mxu0 0
        %2353 = vmatpush1.bf16.msra.mxu0 %v2335
        %2354 = vmatprep.subr.bf16.mxu0 0
        %2355 = vmatpush1.bf16.msra.mxu0 %v2334
        %2356 = vmatprep.subr.bf16.mxu0 0
        %2357 = vmatpush1.bf16.msra.mxu0 %v2333
        %2358 = vmatprep.subr.bf16.mxu0 0
        %2359 = vmatpush1.bf16.msra.mxu0 %v2332
        %2360 = vmatprep.subr.bf16.mxu0 0
        %2361 = vmatpush2.bf16.msra.mxu0 0
        %2362 = vmatprep.subr.bf16.mxu0 0
        %2363 = vmatpush2.bf16.msra.mxu0 0
        %2364 = vmatprep.subr.bf16.mxu0 0
        %2365 = vmatpush2.bf16.msra.mxu0 0
        %2366 = vmatprep.subr.bf16.mxu0 0
        %2367 = vmatpush2.bf16.msra.mxu0 0
        %2368 = vmatprep.subr.bf16.mxu0 0
        %2369 = vmatpush2.bf16.msra.mxu0 0
        %2370 = vmatprep.subr.bf16.mxu0 0
        %2371 = vmatpush2.bf16.msra.mxu0 0
        %2372 = vmatprep.subr.bf16.mxu0 0
        %2373 = vmatpush2.bf16.msra.mxu0 0
        %2374 = vmatprep.subr.bf16.mxu0 0
        %2375 = vmatpush2.bf16.msra.mxu0 0
        %2376 = vmatprep.mubr.bf16.mxu0 0
        %2377 = vmatmul.mubr.bf16.gmra.mxu0 %v2342
        %v2378 = vpop.f32.mrf.mxu0
        %v2379 = vadd.f32 %v2314, %v2378
        %v2380 = vpop.f32.mrf.mxu0
        %v2381 = vpop.f32.mrf.mxu0
        %v2382 = vadd.f32 %v2314, %v2381
        %v2383 = vpop.f32.mrf.mxu0
        %2384 = vdwg.mxu0
        %v2385 = vadd.f32 %v2228, %v2379
        %v2386 = vadd.f32 %v2229, %v2382
        %v2387 = vsel %vm802, %v2385, 0.0
        %2388 = vadd.xlane.f32.xlu0 %v2387
        %v2389 = vpop.xlane.xlu0 %2388
        %v2390 = vsel %vm802, %v2386, 0.0
        %2391 = vadd.xlane.f32.xlu0 %v2390
        %v2392 = vpop.xlane.xlu0 %2391
        %v2393 = vmul.f32 %v2389, %v2191
        %v2394 = vmul.f32 %v2392, %v2191
        %v2395 = vsub.f32 %v2385, %v2393
        %v2396 = vsub.f32 %v2386, %v2394
        %v2397 = vmul.f32 %v2395, %v2395
        %v2398 = vmul.f32 %v2396, %v2396
        %v2399 = vsel %vm802, %v2397, 0.0
        %2400 = vadd.xlane.f32.xlu0 %v2399
        %v2401 = vpop.xlane.xlu0 %2400
        %v2402 = vsel %vm802, %v2398, 0.0
        %2403 = vadd.xlane.f32.xlu0 %v2402
        %v2404 = vpop.xlane.xlu0 %2403
        %v2405 = vmul.f32 %v2401, %v2191
        %v2406 = vmul.f32 %v2404, %v2191
        %v2407 = vadd.f32 %v2405, 1e-05
        %v2408 = vadd.f32 %v2406, 1e-05
        %v2409 = vrsqrt.pop %v2407
        %v2410 = vrsqrt.pop %v2408
        %v2411 = vmul.f32 %v2395, %v2409
        %v2412 = vmul.f32 %v2396, %v2410
        %v2413 = vld [vmem:[%s757] sm:$0x1]
        %v2415 = vlaneseq
        %v2416 = vshrl.u32 %v2415, 7
        %v2417 = vsub.s32 0, %v2416
        %v2418 = vrot.slane %v2413, %v2417
        %v2420 = vmul.f32 %v2411, %v2418
        %v2421 = vmul.f32 %v2412, %v2418
        %v2422 = vld [vmem:[%s760] sm:$0x1]
        %v2424 = vlaneseq
        %v2425 = vshrl.u32 %v2424, 7
        %v2426 = vsub.s32 0, %v2425
        %v2427 = vrot.slane %v2422, %v2426
        %v2429 = vadd.f32 %v2420, %v2427
        %v2430 = vadd.f32 %v2421, %v2427
        %2431 = vst.msk [vmem:[#allocation2] sm:$0xff] %vm802, %v2429
        %2432 = vst.msk [vmem:[#allocation2 + $0x8] sm:$0xff] %vm802, %v2430
        %p2433 = scmp.eq.s32.totalorder %s30, 1
        // Predicated region
        $region101: #{tpu_custom_call.1} parent=83 // pred_check
          %p2434 = pneg %p2433
        $region102: #{tpu_custom_call.1} parent=83 // pred_check_branch
          %2436 = sbr.rel (%p2434) target = $region104
        $region103: #{tpu_custom_call.1} parent=83 // pred_region
          %2437 = vst.msk [vmem:[#allocation9] sm:$0xff] %vm802, %v2429
          %2438 = vst.msk [vmem:[#allocation9 + $0x8] sm:$0xff] %vm802, %v2430
        $region104: #{tpu_custom_call.1} parent=83 // pred_fallthru
          _
        // Predicated region
        $region105: #{tpu_custom_call.1} parent=83 // pred_check
          %p2439 = pneg %p449
        $region106: #{tpu_custom_call.1} parent=83 // pred_check_branch
          %2441 = sbr.rel (%p2439) target = $region108
        $region107: #{tpu_custom_call.1} parent=83 // pred_region
          %s2443 = ssub.s32 256, 256
          %2444 = vsyncadd [#allocation5], %s2443
          %s2445 = sshll.u32 [#allocation9], 4
          %s2446 = int_to_ptr.vmem [resolvable:$true] %s2445
          %2451 = dma.vmem_to_hbm [thread:$0]  %s2446, 256, %s16, [#allocation5], 128, 128, 8
        $region108: #{tpu_custom_call.1} parent=83 // pred_fallthru
          _
        // Predicated region
        $region109: #{tpu_custom_call.1} parent=83 // pred_check
          %p2452 = pneg %p449
        $region110: #{tpu_custom_call.1} parent=83 // pred_check_branch
          %2454 = sbr.rel (%p2452) target = $region112
        $region111: #{tpu_custom_call.1} parent=83 // pred_region
          %2455 = dma.done [#allocation5], 256
        $region112: #{tpu_custom_call.1} parent=83 // pred_fallthru
          _
      $region84: #{tpu_custom_call.1} parent=5 // pred_fallthru
        _
      %p2456 = scmp.le.s32.totalorder 2, %s25
      // Predicated region
      $region113: #{tpu_custom_call.1} parent=5 // pred_check
        %p2457 = pneg %p2456
      $region114: #{tpu_custom_call.1} parent=5 // pred_check_branch
        %2459 = sbr.rel (%p2457) target = $region116
      $region115: #{tpu_custom_call.1} parent=5 // pred_region
        %s2460 = ssub.s32 %s25, 2
      $region116: #{tpu_custom_call.1} parent=5 // pred_fallthru
        _
    $region6: #{tpu_custom_call.1} parent=1 // loop_footer
      %s29 = sadd.s32 1, %s25
    $region7: #{tpu_custom_call.1} parent=1 // loop_footer_branch
      %24 = sbr.rel target = $region3
    $region8: #{tpu_custom_call.1} parent=1 // loop_exit
      _
    %2461 = vsyncpa [#allocation4], 1
    %s2462 = scalar_lea.sflag [#allocation4], 1
    %2463 = vsyncpa %s2462, 1
    %2464 = vsyncpa [#allocation7], 1
    %2465 = vsyncpa [#allocation5], 1
    %s2466 = scalar_lea.sflag [#allocation5], 1
    %2467 = vsyncpa %s2466, 1

</llo_original>
